<compile_context>
chip_gen: v6e
topology: v6e:2x2x1
jax: 0.10.0
libtpu: 0.0.40
codegen_flags: <defaults>
</compile_context>

<pallas_src>
import functools

import jax
import jax.numpy as jnp
from jax import lax
from jax.experimental import pallas as pl
from jax.experimental.pallas import tpu as pltpu

DIM = 256          # CrossTransformer(256)
HEADS = 8
HEAD_DIM = DIM // HEADS
FFN_HIDDEN = 512
NUM_FFNS = 6
LN_EPS = 1e-5
NEG_INF = -1e30
# Default max batch tile. 128 saturates the v5e MXU; raise to 256 on v6e/v7x when the
# surrounding model calls this with large batches (re-budget VMEM per review #8).
DEFAULT_BATCH_TILE = 128


def _round_up(a, b):
    return -(-a // b) * b


def _layer_norm(x, gamma, beta):
    mu = jnp.mean(x, axis=-1, keepdims=True)
    var = jnp.mean((x - mu) ** 2, axis=-1, keepdims=True)
    return (x - mu) * lax.rsqrt(var + LN_EPS) * gamma + beta


# ----------------------------------------------------------------------------
# One fused kernel: cross-attention + FFN + LayerNorm + 6 decoder heads.
# Grid is over batch tiles of `bt` rows; all weights are full-block residents.
# ----------------------------------------------------------------------------
def fused_decoder_kernel(ego_ref, tok_ref, tokT_ref, mavg_ref,
                         wpack_ref, w2_ref, vec_ref, out_ref,
                         *, n_agents, num, d_pad):
    N = n_agents
    bt = ego_ref.shape[0]

    ego = ego_ref[...]                        # (bt, 256)
    tok = tok_ref[...]                        # (bt*N, 256)
    tokT = tokT_ref[0]                        # (256, bt*N)

    # ---- static, 128-lane-aligned slices of the packed parameters ---------------
    wq_t = wpack_ref[:, 0 * DIM:1 * DIM]                       # (256, 256)
    wk = wpack_ref[:, 1 * DIM:2 * DIM]                         # (256, 256) (out,in) layout
    wv_t = wpack_ref[:, 2 * DIM:3 * DIM]
    wo_t = wpack_ref[:, 3 * DIM:4 * DIM]
    w1_t = wpack_ref[:, 4 * DIM:4 * DIM + FFN_HIDDEN]          # (256, 512)
    wd_t = wpack_ref[:, 4 * DIM + FFN_HIDDEN:4 * DIM + FFN_HIDDEN + d_pad]
    w2_t = w2_ref[...]                                         # (512, 256)

    bq = vec_ref[:, 0 * DIM:1 * DIM]
    bv = vec_ref[:, 1 * DIM:2 * DIM]
    bo = vec_ref[:, 2 * DIM:3 * DIM]
    b1 = vec_ref[:, 3 * DIM:3 * DIM + FFN_HIDDEN]
    b2 = vec_ref[:, 3 * DIM + FFN_HIDDEN:4 * DIM + FFN_HIDDEN]
    ln_g = vec_ref[:, 4 * DIM + FFN_HIDDEN:5 * DIM + FFN_HIDDEN]
    ln_b = vec_ref[:, 5 * DIM + FFN_HIDDEN:6 * DIM + FFN_HIDDEN]
    v0 = 6 * DIM + FFN_HIDDEN
    bd = vec_ref[:, v0:v0 + d_pad]
    gd = vec_ref[:, v0 + d_pad:v0 + 2 * d_pad]
    betad = vec_ref[:, v0 + 2 * d_pad:v0 + 3 * d_pad]

    # ---- fused projections: full-M MXU matmuls ----------------------------------
    q = jnp.dot(ego, wq_t, preferred_element_type=jnp.float32) + bq             # (bt, 256)
    # K directly in transposed form (M = 256).  Key bias omitted: softmax over keys
    # is invariant to a per-query constant, so the result is mathematically unchanged.
    kT = jnp.dot(wk, tokT, preferred_element_type=jnp.float32)                  # (256, bt*N)
    v = jnp.dot(tok, wv_t, preferred_element_type=jnp.float32) + bv             # (bt*N, 256)

    # ---- in-kernel additive mask for one 8-row sub-block (no int div/mod) -------
    # row r (query) sees column c (key) iff 0 <= c - r*N < N and c - r*N != num.
    ri = lax.broadcasted_iota(jnp.int32, (8, 8 * N), 0)
    ci = lax.broadcasted_iota(jnp.int32, (8, 8 * N), 1)
    off = ci - ri * N
    amask = jnp.where((off >= 0) & (off < N) & (off != num),
                      0.0, NEG_INF).astype(jnp.float32)                         # (8, 8N)

    # ---- block-diagonal attention on 8-row sub-blocks ----------------------------
    scale = 1.0 / jnp.sqrt(jnp.float32(HEAD_DIM))
    sub_rows = []
    for sb in range(bt // 8):
        r0 = sb * 8
        c0 = r0 * N
        q_sb = q[r0:r0 + 8, :]                     # (8, 256)
        kT_sb = kT[:, c0:c0 + 8 * N]               # (256, 8N)
        v_sb = v[c0:c0 + 8 * N, :]                 # (8N, 256)
        acc = None
        for h in range(HEADS):
            lo = h * HEAD_DIM
            hi = lo + HEAD_DIM
            s = jnp.dot(q_sb[:, lo:hi], kT_sb[lo:hi, :],
                        preferred_element_type=jnp.float32) * scale + amask     # (8, 8N)
            s = s - jnp.max(s, axis=-1, keepdims=True)
            p = jnp.exp(s)                          # masked cols underflow to 0
            p = p * (1.0 / jnp.sum(p, axis=-1, keepdims=True))   # exact recip (1e-3 check)
            ctx = jnp.dot(p, v_sb[:, lo:hi], preferred_element_type=jnp.float32)  # (8, 32)
            # fold head-concat into the output projection (no 32-lane concat chain)
            part = jnp.dot(ctx, wo_t[lo:hi, :], preferred_element_type=jnp.float32)
            acc = part if acc is None else acc + part
        sub_rows.append(acc)
    attn = sub_rows[0] if len(sub_rows) == 1 else jnp.concatenate(sub_rows, axis=0)
    attn = attn + bo                                                             # (bt, 256)

    # ---- FFN + residual + LayerNorm ----------------------------------------------
    h1 = jnp.maximum(jnp.dot(attn, w1_t, preferred_element_type=jnp.float32) + b1, 0.0)
    f = jnp.dot(h1, w2_t, preferred_element_type=jnp.float32) + b2
    att = _layer_norm(f + ego, ln_g, ln_b)                                       # (bt, 256)

    # ---- 6 decoder heads: one fused matmul + block-diagonal-matmul LayerNorm -----
    z = jnp.dot(att, wd_t, preferred_element_type=jnp.float32) + bd              # (bt, d_pad)
    mavg = mavg_ref[...]                                                         # (d_pad, d_pad)
    mu = jnp.dot(z, mavg, preferred_element_type=jnp.float32)                    # per-seg means
    zc = z - mu
    var = jnp.dot(zc * zc, mavg, preferred_element_type=jnp.float32)
    out_ref[...] = zc * lax.rsqrt(var + LN_EPS) * gd + betad                     # lane-dense store


def bmatrix_decoder_pallas(inputs, num, params, steps, max_batch_tile=DEFAULT_BATCH_TILE):
    B, N, D = inputs.shape
    assert D == DIM and N >= 2
    s8 = steps * 8
    d_out = NUM_FFNS * s8
    d_pad = _round_up(d_out, 128)

    bt = min(_round_up(max_batch_tile, 8), _round_up(B, 8))
    b_pad = _round_up(B, bt)
    n_tiles = b_pad // bt

    ego_p = jnp.pad(inputs[:, num, :], ((0, b_pad - B), (0, 0)))                 # (b_pad, 256)
    tok_p = jnp.pad(inputs, ((0, b_pad - B), (0, 0), (0, 0))).reshape(b_pad * N, DIM)
    tokT_p = tok_p.reshape(n_tiles, bt * N, DIM).transpose(0, 2, 1)              # (tiles, 256, bt*N)

    # Block-diagonal 1/s8 averaging matrix for the six decoder LayerNorms
    # (zero on the lane-padding rows/cols so padded outputs stay exactly 0).
    r = jnp.arange(d_pad)
    seg = r // s8
    mavg = jnp.where((seg[:, None] == seg[None, :]) & (r[:, None] < d_out),
                     1.0 / s8, 0.0).astype(jnp.float32)                          # (d_pad, d_pad)

    w = params["kernel"]
    kernel = functools.partial(fused_decoder_kernel, n_agents=N, num=num, d_pad=d_pad)

    in_specs = [
        pl.BlockSpec((bt, DIM), lambda i: (i, 0)),                # ego tile
        pl.BlockSpec((bt * N, DIM), lambda i: (i, 0)),            # token rows for this tile
        pl.BlockSpec((1, DIM, bt * N), lambda i: (i, 0, 0)),      # token rows, transposed
        pl.BlockSpec((d_pad, d_pad), lambda i: (0, 0)),           # decoder-LN averaging matrix
        pl.BlockSpec(w["wpack"].shape, lambda i: (0, 0)),         # packed 256-row weights
        pl.BlockSpec(w["w2_t"].shape, lambda i: (0, 0)),          # FFN second weight
        pl.BlockSpec(w["vecpack"].shape, lambda i: (0, 0)),       # packed bias / LN vectors
    ]

    out = pl.pallas_call(
        kernel,
        out_shape=jax.ShapeDtypeStruct((b_pad, d_pad), jnp.float32),
        grid_spec=pltpu.PrefetchScalarGridSpec(
            num_scalar_prefetch=0,
            grid=(n_tiles,),
            in_specs=in_specs,
            out_specs=pl.BlockSpec((bt, d_pad), lambda i: (i, 0))),
        compiler_params=pltpu.CompilerParams(
            dimension_semantics=("parallel",),
            # ~2.3 MiB weights (x2 buffers) + tile buffers; well inside every
            # generation's scoped limit, set explicitly per review.
            vmem_limit_bytes=32 * 1024 * 1024),
    )(ego_p, tok_p, tokT_p, mavg, w["wpack"], w["w2_t"], w["vecpack"])

    return out[:B, :d_out].reshape(B, NUM_FFNS, steps, 4, 2)


@functools.partial(jax.jit, static_argnums=(1, 3, 4))
def bmatrix_decoder_forward(inputs, num, params, steps, max_batch_tile=DEFAULT_BATCH_TILE):
    return bmatrix_decoder_pallas(inputs, num, params, steps, max_batch_tile)


# ----------------------------------------------------------------------------
# Deterministic synthetic parameters (PyTorch Linear layout: W is (out, in)).
# ----------------------------------------------------------------------------
def init_params(key, steps):
    s8 = steps * 8
    d_out = NUM_FFNS * s8
    d_pad = _round_up(d_out, 128)
    ks = jax.random.split(key, 18)

    def rnd(k, shape, scale=0.05):
        return jax.random.normal(k, shape, jnp.float32) * scale

    wq, bq = rnd(ks[0], (DIM, DIM)), rnd(ks[1], (DIM,))
    wk, bk = rnd(ks[2], (DIM, DIM)), rnd(ks[3], (DIM,))
    wv, bv = rnd(ks[4], (DIM, DIM)), rnd(ks[5], (DIM,))
    wo, bo = rnd(ks[6], (DIM, DIM)), rnd(ks[7], (DIM,))
    w1, b1 = rnd(ks[8], (FFN_HIDDEN, DIM)), rnd(ks[9], (FFN_HIDDEN,))
    w2, b2 = rnd(ks[10], (DIM, FFN_HIDDEN)), rnd(ks[11], (DIM,))
    ln_g = 1.0 + rnd(ks[12], (DIM,))
    ln_b = rnd(ks[13], (DIM,))
    wd = rnd(ks[14], (NUM_FFNS, s8, DIM))
    bd = rnd(ks[15], (NUM_FFNS, s8))
    gd = 1.0 + rnd(ks[16], (NUM_FFNS, s8))
    betad = rnd(ks[17], (NUM_FFNS, s8))

    # --- kernel-layout: packed, pre-transposed, lane-padded -----------------------
    pad = d_pad - d_out
    wd_stack = jnp.pad(jnp.transpose(wd, (2, 0, 1)).reshape(DIM, d_out), ((0, 0), (0, pad)))
    wpack = jnp.concatenate([wq.T, wk, wv.T, wo.T, w1.T, wd_stack], axis=1)      # (256, 1536+d_pad)
    # bk is intentionally not shipped to the kernel (softmax-invariant, see kernel).
    vecpack = jnp.concatenate([
        bq, bv, bo, b1, b2, ln_g, ln_b,
        jnp.pad(bd.reshape(d_out), (0, pad)),
        jnp.pad(gd.reshape(d_out), (0, pad), constant_values=1.0),
        jnp.pad(betad.reshape(d_out), (0, pad)),
    ])[None, :]                                                                  # (1, 2048+3*d_pad)
    kernel = dict(wpack=wpack, w2_t=w2.T, vecpack=vecpack)

    raw = dict(wq=wq, bq=bq, wk=wk, bk=bk, wv=wv, bv=bv, wo=wo, bo=bo,
               w1=w1, b1=b1, w2=w2, b2=b2, ln_g=ln_g, ln_b=ln_b,
               wd=wd, bd=bd, gd=gd, betad=betad)
    return dict(kernel=kernel, raw=raw)


# ----------------------------------------------------------------------------
# Pure-JAX reference (mirrors the PyTorch forward, eval mode, includes key bias).
# ----------------------------------------------------------------------------
def ref_forward(inputs, num, params, steps):
    r = params["raw"]
    B, N, _ = inputs.shape
    ego = inputs[:, num:num + 1, :]
    keep = jnp.array([j for j in range(N) if j != num], jnp.int32)
    agents = jnp.take(inputs, keep, axis=1)
    A = agents.shape[1]

    q = ego @ r["wq"].T + r["bq"]
    k = agents @ r["wk"].T + r["bk"]
    v = agents @ r["wv"].T + r["bv"]
    qh = q.reshape(B, 1, HEADS, HEAD_DIM).transpose(0, 2, 1, 3)
    kh = k.reshape(B, A, HEADS, HEAD_DIM).transpose(0, 2, 1, 3)
    vh = v.reshape(B, A, HEADS, HEAD_DIM).transpose(0, 2, 1, 3)
    s = jnp.einsum("bhqd,bhkd->bhqk", qh, kh) / jnp.sqrt(jnp.float32(HEAD_DIM))
    p = jax.nn.softmax(s, axis=-1)
    ctx = jnp.einsum("bhqk,bhkd->bhqd", p, vh).transpose(0, 2, 1, 3).reshape(B, 1, DIM)
    ao = ctx @ r["wo"].T + r["bo"]
    f = jnp.maximum(ao @ r["w1"].T + r["b1"], 0.0) @ r["w2"].T + r["b2"]
    y = f + ego
    mu = y.mean(-1, keepdims=True)
    var = ((y - mu) ** 2).mean(-1, keepdims=True)
    att = ((y - mu) / jnp.sqrt(var + LN_EPS)) * r["ln_g"] + r["ln_b"]
    att = att.reshape(B, DIM)

    outs = []
    for i in range(NUM_FFNS):
        z = att @ r["wd"][i].T + r["bd"][i]
        mu = z.mean(-1, keepdims=True)
        var = ((z - mu) ** 2).mean(-1, keepdims=True)
        zc = ((z - mu) / jnp.sqrt(var + LN_EPS)) * r["gd"][i] + r["betad"][i]
        outs.append(zc.reshape(B, 1, steps, 4, 2))
    return jnp.concatenate(outs, axis=1)


def _check(out, ref, tag):
    err = float(jnp.max(jnp.abs(out - ref)))
    if err > 1e-3:
        raise AssertionError(f"{tag}: mismatch vs pure-JAX reference, max abs err = {err}")


if __name__ == "__main__":
    key = jax.random.PRNGKey(0)
    k1, k2, kp1, kp2 = jax.random.split(key, 4)

    # Test 1: small batch (single tile, single 8-row sub-block), steps=4.
    steps, B, N, num = 4, 2, 4, 1
    params = init_params(kp1, steps)
    x = jax.random.normal(k1, (B, N, DIM), jnp.float32)
    out = jax.block_until_ready(bmatrix_decoder_forward(x, num, params, steps, DEFAULT_BATCH_TILE))
    assert out.shape == (B, NUM_FFNS, steps, 4, 2)
    _check(out, ref_forward(x, num, params, steps), "test1")

    # Test 2: multi-tile grid + multiple 8-row attention sub-blocks + lane padding
    # (steps=3 -> d_out=144 padded to 256), batch padded, capped batch tile.
    steps2, B2, N2, num2 = 3, 20, 5, 2
    params2 = init_params(kp2, steps2)
    x2 = jax.random.normal(k2, (B2, N2, DIM), jnp.float32)
    out2 = jax.block_until_ready(bmatrix_decoder_forward(x2, num2, params2, steps2, 16))
    assert out2.shape == (B2, NUM_FFNS, steps2, 4, 2)
    _check(out2, ref_forward(x2, num2, params2, steps2), "test2")

    print("KERNEL_OK")
</pallas_src>

<mosaic_0001>
module attributes {stable_mosaic.version = 11 : i64} {
  func.func @fused_decoder_kernel(%arg0: i32, %arg1: memref<8x256xf32, #tpu.memory_space<vmem>>, %arg2: memref<32x256xf32, #tpu.memory_space<vmem>>, %arg3: memref<1x256x32xf32, #tpu.memory_space<vmem>>, %arg4: memref<256x256xf32, #tpu.memory_space<vmem>>, %arg5: memref<256x1792xf32, #tpu.memory_space<vmem>>, %arg6: memref<512x256xf32, #tpu.memory_space<vmem>>, %arg7: memref<1x2816xf32, #tpu.memory_space<vmem>>, %arg8: memref<8x256xf32, #tpu.memory_space<vmem>>) attributes {dimension_semantics = [#tpu.dimension_semantics<parallel>], iteration_bounds = array<i64: 1>, scalar_prefetch = 0 : i64, scratch_operands = 0 : i64, tpu.core_type = #tpu.core_type<tc>, window_params = [{transform_indices = @transform_0, window_bounds = array<i64: 8, 256>}, {transform_indices = @transform_1, window_bounds = array<i64: 32, 256>}, {transform_indices = @transform_2, window_bounds = array<i64: 1, 256, 32>}, {pipeline_mode = #tpu.pipeline_mode<synchronous>, transform_indices = @transform_3, window_bounds = array<i64: 256, 256>}, {pipeline_mode = #tpu.pipeline_mode<synchronous>, transform_indices = @transform_4, window_bounds = array<i64: 256, 1792>}, {pipeline_mode = #tpu.pipeline_mode<synchronous>, transform_indices = @transform_5, window_bounds = array<i64: 512, 256>}, {pipeline_mode = #tpu.pipeline_mode<synchronous>, transform_indices = @transform_6, window_bounds = array<i64: 1, 2816>}, {transform_indices = @transform_7, window_bounds = array<i64: 8, 256>}]} {
    %c0 = arith.constant 0 : index
    %c0_0 = arith.constant 0 : index
    %0 = vector.load %arg1[%c0, %c0_0] : memref<8x256xf32, #tpu.memory_space<vmem>>, vector<8x256xf32>
    %c0_1 = arith.constant 0 : index
    %c0_2 = arith.constant 0 : index
    %1 = vector.load %arg2[%c0_1, %c0_2] : memref<32x256xf32, #tpu.memory_space<vmem>>, vector<32x256xf32>
    %c0_3 = arith.constant 0 : index
    %c0_4 = arith.constant 0 : index
    %c0_5 = arith.constant 0 : index
    %2 = vector.load %arg3[%c0_3, %c0_4, %c0_5] : memref<1x256x32xf32, #tpu.memory_space<vmem>>, vector<1x256x32xf32>
    %3 = vector.shape_cast %2 : vector<1x256x32xf32> to vector<256x32xf32>
    %c0_6 = arith.constant 0 : index
    %c0_7 = arith.constant 0 : index
    %4 = vector.load %arg5[%c0_6, %c0_7] : memref<256x1792xf32, #tpu.memory_space<vmem>>, vector<256x256xf32>
    %c0_8 = arith.constant 0 : index
    %c256 = arith.constant 256 : index
    %5 = vector.load %arg5[%c0_8, %c256] : memref<256x1792xf32, #tpu.memory_space<vmem>>, vector<256x256xf32>
    %c0_9 = arith.constant 0 : index
    %c512 = arith.constant 512 : index
    %6 = vector.load %arg5[%c0_9, %c512] : memref<256x1792xf32, #tpu.memory_space<vmem>>, vector<256x256xf32>
    %c0_10 = arith.constant 0 : index
    %c768 = arith.constant 768 : index
    %7 = vector.load %arg5[%c0_10, %c768] : memref<256x1792xf32, #tpu.memory_space<vmem>>, vector<256x256xf32>
    %c0_11 = arith.constant 0 : index
    %c1024 = arith.constant 1024 : index
    %8 = vector.load %arg5[%c0_11, %c1024] : memref<256x1792xf32, #tpu.memory_space<vmem>>, vector<256x512xf32>
    %c0_12 = arith.constant 0 : index
    %c1536 = arith.constant 1536 : index
    %9 = vector.load %arg5[%c0_12, %c1536] : memref<256x1792xf32, #tpu.memory_space<vmem>>, vector<256x256xf32>
    %c0_13 = arith.constant 0 : index
    %c0_14 = arith.constant 0 : index
    %10 = vector.load %arg6[%c0_13, %c0_14] : memref<512x256xf32, #tpu.memory_space<vmem>>, vector<512x256xf32>
    %c0_15 = arith.constant 0 : index
    %c0_16 = arith.constant 0 : index
    %11 = vector.load %arg7[%c0_15, %c0_16] : memref<1x2816xf32, #tpu.memory_space<vmem>>, vector<1x256xf32>
    %c0_17 = arith.constant 0 : index
    %c256_18 = arith.constant 256 : index
    %12 = vector.load %arg7[%c0_17, %c256_18] : memref<1x2816xf32, #tpu.memory_space<vmem>>, vector<1x256xf32>
    %c0_19 = arith.constant 0 : index
    %c512_20 = arith.constant 512 : index
    %13 = vector.load %arg7[%c0_19, %c512_20] : memref<1x2816xf32, #tpu.memory_space<vmem>>, vector<1x256xf32>
    %c0_21 = arith.constant 0 : index
    %c768_22 = arith.constant 768 : index
    %14 = vector.load %arg7[%c0_21, %c768_22] : memref<1x2816xf32, #tpu.memory_space<vmem>>, vector<1x512xf32>
    %c0_23 = arith.constant 0 : index
    %c1280 = arith.constant 1280 : index
    %15 = vector.load %arg7[%c0_23, %c1280] : memref<1x2816xf32, #tpu.memory_space<vmem>>, vector<1x256xf32>
    %c0_24 = arith.constant 0 : index
    %c1536_25 = arith.constant 1536 : index
    %16 = vector.load %arg7[%c0_24, %c1536_25] : memref<1x2816xf32, #tpu.memory_space<vmem>>, vector<1x256xf32>
    %c0_26 = arith.constant 0 : index
    %c1792 = arith.constant 1792 : index
    %17 = vector.load %arg7[%c0_26, %c1792] : memref<1x2816xf32, #tpu.memory_space<vmem>>, vector<1x256xf32>
    %c0_27 = arith.constant 0 : index
    %c2048 = arith.constant 2048 : index
    %18 = vector.load %arg7[%c0_27, %c2048] : memref<1x2816xf32, #tpu.memory_space<vmem>>, vector<1x256xf32>
    %c0_28 = arith.constant 0 : index
    %c2304 = arith.constant 2304 : index
    %19 = vector.load %arg7[%c0_28, %c2304] : memref<1x2816xf32, #tpu.memory_space<vmem>>, vector<1x256xf32>
    %c0_29 = arith.constant 0 : index
    %c2560 = arith.constant 2560 : index
    %20 = vector.load %arg7[%c0_29, %c2560] : memref<1x2816xf32, #tpu.memory_space<vmem>>, vector<1x256xf32>
    %cst = arith.constant dense<0.000000e+00> : vector<8x256xf32>
    %21 = tpu.matmul %0, %4, %cst {dimension_numbers = #tpu.dot_dimension_numbers<[1], [0], [0], [1], [0, 0, 1, 1], [], []>} : vector<8x256xf32>, vector<256x256xf32>, vector<8x256xf32> -> vector<8x256xf32>
    %22 = vector.broadcast %11 : vector<1x256xf32> to vector<8x256xf32>
    %23 = arith.addf %21, %22 : vector<8x256xf32>
    %cst_30 = arith.constant dense<0.000000e+00> : vector<256x32xf32>
    %24 = tpu.matmul %5, %3, %cst_30 {dimension_numbers = #tpu.dot_dimension_numbers<[1], [0], [0], [1], [0, 0, 1, 1], [], []>} : vector<256x256xf32>, vector<256x32xf32>, vector<256x32xf32> -> vector<256x32xf32>
    %cst_31 = arith.constant dense<0.000000e+00> : vector<32x256xf32>
    %25 = tpu.matmul %1, %6, %cst_31 {dimension_numbers = #tpu.dot_dimension_numbers<[1], [0], [0], [1], [0, 0, 1, 1], [], []>} : vector<32x256xf32>, vector<256x256xf32>, vector<32x256xf32> -> vector<32x256xf32>
    %26 = vector.broadcast %12 : vector<1x256xf32> to vector<32x256xf32>
    %27 = arith.addf %25, %26 : vector<32x256xf32>
    %28 = tpu.iota {dimensions = array<i32: 0>} : vector<8x32xi32>
    %29 = tpu.iota {dimensions = array<i32: 1>} : vector<8x32xi32>
    %c4_i32 = arith.constant 4 : i32
    %30 = vector.broadcast %c4_i32 : i32 to vector<8x32xi32>
    %31 = arith.muli %28, %30 : vector<8x32xi32>
    %32 = arith.subi %29, %31 : vector<8x32xi32>
    %c0_i32 = arith.constant 0 : i32
    %33 = vector.broadcast %c0_i32 : i32 to vector<8x32xi32>
    %34 = arith.cmpi sge, %32, %33 : vector<8x32xi32>
    %c4_i32_32 = arith.constant 4 : i32
    %35 = vector.broadcast %c4_i32_32 : i32 to vector<8x32xi32>
    %36 = arith.cmpi slt, %32, %35 : vector<8x32xi32>
    %37 = arith.andi %34, %36 : vector<8x32xi1>
    %c1_i32 = arith.constant 1 : i32
    %38 = vector.broadcast %c1_i32 : i32 to vector<8x32xi32>
    %39 = arith.cmpi ne, %32, %38 : vector<8x32xi32>
    %40 = arith.andi %37, %39 : vector<8x32xi1>
    %cst_33 = arith.constant 0.000000e+00 : f32
    %cst_34 = arith.constant -1.000000e+30 : f32
    %41 = vector.broadcast %cst_33 : f32 to vector<8x32xf32>
    %42 = vector.broadcast %cst_34 : f32 to vector<8x32xf32>
    %43 = arith.select %40, %41, %42 : vector<8x32xi1>, vector<8x32xf32>
    %cst_35 = arith.constant 3.200000e+01 : f32
    %44 = math.sqrt %cst_35 : f32
    %cst_36 = arith.constant 1.000000e+00 : f32
    %45 = arith.divf %cst_36, %44 : f32
    %46 = vector.extract_strided_slice %23 {offsets = [0, 0], sizes = [8, 32], strides = [1, 1]} : vector<8x256xf32> to vector<8x32xf32>
    %47 = vector.extract_strided_slice %24 {offsets = [0, 0], sizes = [32, 32], strides = [1, 1]} : vector<256x32xf32> to vector<32x32xf32>
    %cst_37 = arith.constant dense<0.000000e+00> : vector<8x32xf32>
    %48 = tpu.matmul %46, %47, %cst_37 {dimension_numbers = #tpu.dot_dimension_numbers<[1], [0], [0], [1], [0, 0, 1, 1], [], []>} : vector<8x32xf32>, vector<32x32xf32>, vector<8x32xf32> -> vector<8x32xf32>
    %49 = vector.broadcast %45 : f32 to vector<8x32xf32>
    %50 = arith.mulf %48, %49 : vector<8x32xf32>
    %51 = arith.addf %50, %43 : vector<8x32xf32>
    %cst_38 = arith.constant dense<0xFF800000> : vector<8xf32>
    %52 = vector.multi_reduction <maximumf>, %51, %cst_38 [1] : vector<8x32xf32> to vector<8xf32>
    %53 = vector.shape_cast %52 : vector<8xf32> to vector<8x1xf32>
    %54 = vector.broadcast %53 : vector<8x1xf32> to vector<8x32xf32>
    %55 = arith.subf %51, %54 : vector<8x32xf32>
    %56 = math.exp %55 : vector<8x32xf32>
    %cst_39 = arith.constant dense<0.000000e+00> : vector<8xf32>
    %57 = vector.multi_reduction <add>, %56, %cst_39 [1] : vector<8x32xf32> to vector<8xf32>
    %58 = vector.shape_cast %57 : vector<8xf32> to vector<8x1xf32>
    %cst_40 = arith.constant 1.000000e+00 : f32
    %59 = vector.broadcast %cst_40 : f32 to vector<8x1xf32>
    %60 = arith.divf %59, %58 : vector<8x1xf32>
    %61 = vector.broadcast %60 : vector<8x1xf32> to vector<8x32xf32>
    %62 = arith.mulf %56, %61 : vector<8x32xf32>
    %63 = vector.extract_strided_slice %27 {offsets = [0, 0], sizes = [32, 32], strides = [1, 1]} : vector<32x256xf32> to vector<32x32xf32>
    %cst_41 = arith.constant dense<0.000000e+00> : vector<8x32xf32>
    %64 = tpu.matmul %62, %63, %cst_41 {dimension_numbers = #tpu.dot_dimension_numbers<[1], [0], [0], [1], [0, 0, 1, 1], [], []>} : vector<8x32xf32>, vector<32x32xf32>, vector<8x32xf32> -> vector<8x32xf32>
    %65 = vector.extract_strided_slice %7 {offsets = [0, 0], sizes = [32, 256], strides = [1, 1]} : vector<256x256xf32> to vector<32x256xf32>
    %cst_42 = arith.constant dense<0.000000e+00> : vector<8x256xf32>
    %66 = tpu.matmul %64, %65, %cst_42 {dimension_numbers = #tpu.dot_dimension_numbers<[1], [0], [0], [1], [0, 0, 1, 1], [], []>} : vector<8x32xf32>, vector<32x256xf32>, vector<8x256xf32> -> vector<8x256xf32>
    %67 = vector.extract_strided_slice %23 {offsets = [0, 32], sizes = [8, 32], strides = [1, 1]} : vector<8x256xf32> to vector<8x32xf32>
    %68 = vector.extract_strided_slice %24 {offsets = [32, 0], sizes = [32, 32], strides = [1, 1]} : vector<256x32xf32> to vector<32x32xf32>
    %cst_43 = arith.constant dense<0.000000e+00> : vector<8x32xf32>
    %69 = tpu.matmul %67, %68, %cst_43 {dimension_numbers = #tpu.dot_dimension_numbers<[1], [0], [0], [1], [0, 0, 1, 1], [], []>} : vector<8x32xf32>, vector<32x32xf32>, vector<8x32xf32> -> vector<8x32xf32>
    %70 = vector.broadcast %45 : f32 to vector<8x32xf32>
    %71 = arith.mulf %69, %70 : vector<8x32xf32>
    %72 = arith.addf %71, %43 : vector<8x32xf32>
    %cst_44 = arith.constant dense<0xFF800000> : vector<8xf32>
    %73 = vector.multi_reduction <maximumf>, %72, %cst_44 [1] : vector<8x32xf32> to vector<8xf32>
    %74 = vector.shape_cast %73 : vector<8xf32> to vector<8x1xf32>
    %75 = vector.broadcast %74 : vector<8x1xf32> to vector<8x32xf32>
    %76 = arith.subf %72, %75 : vector<8x32xf32>
    %77 = math.exp %76 : vector<8x32xf32>
    %cst_45 = arith.constant dense<0.000000e+00> : vector<8xf32>
    %78 = vector.multi_reduction <add>, %77, %cst_45 [1] : vector<8x32xf32> to vector<8xf32>
    %79 = vector.shape_cast %78 : vector<8xf32> to vector<8x1xf32>
    %cst_46 = arith.constant 1.000000e+00 : f32
    %80 = vector.broadcast %cst_46 : f32 to vector<8x1xf32>
    %81 = arith.divf %80, %79 : vector<8x1xf32>
    %82 = vector.broadcast %81 : vector<8x1xf32> to vector<8x32xf32>
    %83 = arith.mulf %77, %82 : vector<8x32xf32>
    %84 = vector.extract_strided_slice %27 {offsets = [0, 32], sizes = [32, 32], strides = [1, 1]} : vector<32x256xf32> to vector<32x32xf32>
    %cst_47 = arith.constant dense<0.000000e+00> : vector<8x32xf32>
    %85 = tpu.matmul %83, %84, %cst_47 {dimension_numbers = #tpu.dot_dimension_numbers<[1], [0], [0], [1], [0, 0, 1, 1], [], []>} : vector<8x32xf32>, vector<32x32xf32>, vector<8x32xf32> -> vector<8x32xf32>
    %86 = vector.extract_strided_slice %7 {offsets = [32, 0], sizes = [32, 256], strides = [1, 1]} : vector<256x256xf32> to vector<32x256xf32>
    %cst_48 = arith.constant dense<0.000000e+00> : vector<8x256xf32>
    %87 = tpu.matmul %85, %86, %cst_48 {dimension_numbers = #tpu.dot_dimension_numbers<[1], [0], [0], [1], [0, 0, 1, 1], [], []>} : vector<8x32xf32>, vector<32x256xf32>, vector<8x256xf32> -> vector<8x256xf32>
    %88 = arith.addf %66, %87 : vector<8x256xf32>
    %89 = vector.extract_strided_slice %23 {offsets = [0, 64], sizes = [8, 32], strides = [1, 1]} : vector<8x256xf32> to vector<8x32xf32>
    %90 = vector.extract_strided_slice %24 {offsets = [64, 0], sizes = [32, 32], strides = [1, 1]} : vector<256x32xf32> to vector<32x32xf32>
    %cst_49 = arith.constant dense<0.000000e+00> : vector<8x32xf32>
    %91 = tpu.matmul %89, %90, %cst_49 {dimension_numbers = #tpu.dot_dimension_numbers<[1], [0], [0], [1], [0, 0, 1, 1], [], []>} : vector<8x32xf32>, vector<32x32xf32>, vector<8x32xf32> -> vector<8x32xf32>
    %92 = vector.broadcast %45 : f32 to vector<8x32xf32>
    %93 = arith.mulf %91, %92 : vector<8x32xf32>
    %94 = arith.addf %93, %43 : vector<8x32xf32>
    %cst_50 = arith.constant dense<0xFF800000> : vector<8xf32>
    %95 = vector.multi_reduction <maximumf>, %94, %cst_50 [1] : vector<8x32xf32> to vector<8xf32>
    %96 = vector.shape_cast %95 : vector<8xf32> to vector<8x1xf32>
    %97 = vector.broadcast %96 : vector<8x1xf32> to vector<8x32xf32>
    %98 = arith.subf %94, %97 : vector<8x32xf32>
    %99 = math.exp %98 : vector<8x32xf32>
    %cst_51 = arith.constant dense<0.000000e+00> : vector<8xf32>
    %100 = vector.multi_reduction <add>, %99, %cst_51 [1] : vector<8x32xf32> to vector<8xf32>
    %101 = vector.shape_cast %100 : vector<8xf32> to vector<8x1xf32>
    %cst_52 = arith.constant 1.000000e+00 : f32
    %102 = vector.broadcast %cst_52 : f32 to vector<8x1xf32>
    %103 = arith.divf %102, %101 : vector<8x1xf32>
    %104 = vector.broadcast %103 : vector<8x1xf32> to vector<8x32xf32>
    %105 = arith.mulf %99, %104 : vector<8x32xf32>
    %106 = vector.extract_strided_slice %27 {offsets = [0, 64], sizes = [32, 32], strides = [1, 1]} : vector<32x256xf32> to vector<32x32xf32>
    %cst_53 = arith.constant dense<0.000000e+00> : vector<8x32xf32>
    %107 = tpu.matmul %105, %106, %cst_53 {dimension_numbers = #tpu.dot_dimension_numbers<[1], [0], [0], [1], [0, 0, 1, 1], [], []>} : vector<8x32xf32>, vector<32x32xf32>, vector<8x32xf32> -> vector<8x32xf32>
    %108 = vector.extract_strided_slice %7 {offsets = [64, 0], sizes = [32, 256], strides = [1, 1]} : vector<256x256xf32> to vector<32x256xf32>
    %cst_54 = arith.constant dense<0.000000e+00> : vector<8x256xf32>
    %109 = tpu.matmul %107, %108, %cst_54 {dimension_numbers = #tpu.dot_dimension_numbers<[1], [0], [0], [1], [0, 0, 1, 1], [], []>} : vector<8x32xf32>, vector<32x256xf32>, vector<8x256xf32> -> vector<8x256xf32>
    %110 = arith.addf %88, %109 : vector<8x256xf32>
    %111 = vector.extract_strided_slice %23 {offsets = [0, 96], sizes = [8, 32], strides = [1, 1]} : vector<8x256xf32> to vector<8x32xf32>
    %112 = vector.extract_strided_slice %24 {offsets = [96, 0], sizes = [32, 32], strides = [1, 1]} : vector<256x32xf32> to vector<32x32xf32>
    %cst_55 = arith.constant dense<0.000000e+00> : vector<8x32xf32>
    %113 = tpu.matmul %111, %112, %cst_55 {dimension_numbers = #tpu.dot_dimension_numbers<[1], [0], [0], [1], [0, 0, 1, 1], [], []>} : vector<8x32xf32>, vector<32x32xf32>, vector<8x32xf32> -> vector<8x32xf32>
    %114 = vector.broadcast %45 : f32 to vector<8x32xf32>
    %115 = arith.mulf %113, %114 : vector<8x32xf32>
    %116 = arith.addf %115, %43 : vector<8x32xf32>
    %cst_56 = arith.constant dense<0xFF800000> : vector<8xf32>
    %117 = vector.multi_reduction <maximumf>, %116, %cst_56 [1] : vector<8x32xf32> to vector<8xf32>
    %118 = vector.shape_cast %117 : vector<8xf32> to vector<8x1xf32>
    %119 = vector.broadcast %118 : vector<8x1xf32> to vector<8x32xf32>
    %120 = arith.subf %116, %119 : vector<8x32xf32>
    %121 = math.exp %120 : vector<8x32xf32>
    %cst_57 = arith.constant dense<0.000000e+00> : vector<8xf32>
    %122 = vector.multi_reduction <add>, %121, %cst_57 [1] : vector<8x32xf32> to vector<8xf32>
    %123 = vector.shape_cast %122 : vector<8xf32> to vector<8x1xf32>
    %cst_58 = arith.constant 1.000000e+00 : f32
    %124 = vector.broadcast %cst_58 : f32 to vector<8x1xf32>
    %125 = arith.divf %124, %123 : vector<8x1xf32>
    %126 = vector.broadcast %125 : vector<8x1xf32> to vector<8x32xf32>
    %127 = arith.mulf %121, %126 : vector<8x32xf32>
    %128 = vector.extract_strided_slice %27 {offsets = [0, 96], sizes = [32, 32], strides = [1, 1]} : vector<32x256xf32> to vector<32x32xf32>
    %cst_59 = arith.constant dense<0.000000e+00> : vector<8x32xf32>
    %129 = tpu.matmul %127, %128, %cst_59 {dimension_numbers = #tpu.dot_dimension_numbers<[1], [0], [0], [1], [0, 0, 1, 1], [], []>} : vector<8x32xf32>, vector<32x32xf32>, vector<8x32xf32> -> vector<8x32xf32>
    %130 = vector.extract_strided_slice %7 {offsets = [96, 0], sizes = [32, 256], strides = [1, 1]} : vector<256x256xf32> to vector<32x256xf32>
    %cst_60 = arith.constant dense<0.000000e+00> : vector<8x256xf32>
    %131 = tpu.matmul %129, %130, %cst_60 {dimension_numbers = #tpu.dot_dimension_numbers<[1], [0], [0], [1], [0, 0, 1, 1], [], []>} : vector<8x32xf32>, vector<32x256xf32>, vector<8x256xf32> -> vector<8x256xf32>
    %132 = arith.addf %110, %131 : vector<8x256xf32>
    %133 = vector.extract_strided_slice %23 {offsets = [0, 128], sizes = [8, 32], strides = [1, 1]} : vector<8x256xf32> to vector<8x32xf32>
    %134 = vector.extract_strided_slice %24 {offsets = [128, 0], sizes = [32, 32], strides = [1, 1]} : vector<256x32xf32> to vector<32x32xf32>
    %cst_61 = arith.constant dense<0.000000e+00> : vector<8x32xf32>
    %135 = tpu.matmul %133, %134, %cst_61 {dimension_numbers = #tpu.dot_dimension_numbers<[1], [0], [0], [1], [0, 0, 1, 1], [], []>} : vector<8x32xf32>, vector<32x32xf32>, vector<8x32xf32> -> vector<8x32xf32>
    %136 = vector.broadcast %45 : f32 to vector<8x32xf32>
    %137 = arith.mulf %135, %136 : vector<8x32xf32>
    %138 = arith.addf %137, %43 : vector<8x32xf32>
    %cst_62 = arith.constant dense<0xFF800000> : vector<8xf32>
    %139 = vector.multi_reduction <maximumf>, %138, %cst_62 [1] : vector<8x32xf32> to vector<8xf32>
    %140 = vector.shape_cast %139 : vector<8xf32> to vector<8x1xf32>
    %141 = vector.broadcast %140 : vector<8x1xf32> to vector<8x32xf32>
    %142 = arith.subf %138, %141 : vector<8x32xf32>
    %143 = math.exp %142 : vector<8x32xf32>
    %cst_63 = arith.constant dense<0.000000e+00> : vector<8xf32>
    %144 = vector.multi_reduction <add>, %143, %cst_63 [1] : vector<8x32xf32> to vector<8xf32>
    %145 = vector.shape_cast %144 : vector<8xf32> to vector<8x1xf32>
    %cst_64 = arith.constant 1.000000e+00 : f32
    %146 = vector.broadcast %cst_64 : f32 to vector<8x1xf32>
    %147 = arith.divf %146, %145 : vector<8x1xf32>
    %148 = vector.broadcast %147 : vector<8x1xf32> to vector<8x32xf32>
    %149 = arith.mulf %143, %148 : vector<8x32xf32>
    %150 = vector.extract_strided_slice %27 {offsets = [0, 128], sizes = [32, 32], strides = [1, 1]} : vector<32x256xf32> to vector<32x32xf32>
    %cst_65 = arith.constant dense<0.000000e+00> : vector<8x32xf32>
    %151 = tpu.matmul %149, %150, %cst_65 {dimension_numbers = #tpu.dot_dimension_numbers<[1], [0], [0], [1], [0, 0, 1, 1], [], []>} : vector<8x32xf32>, vector<32x32xf32>, vector<8x32xf32> -> vector<8x32xf32>
    %152 = vector.extract_strided_slice %7 {offsets = [128, 0], sizes = [32, 256], strides = [1, 1]} : vector<256x256xf32> to vector<32x256xf32>
    %cst_66 = arith.constant dense<0.000000e+00> : vector<8x256xf32>
    %153 = tpu.matmul %151, %152, %cst_66 {dimension_numbers = #tpu.dot_dimension_numbers<[1], [0], [0], [1], [0, 0, 1, 1], [], []>} : vector<8x32xf32>, vector<32x256xf32>, vector<8x256xf32> -> vector<8x256xf32>
    %154 = arith.addf %132, %153 : vector<8x256xf32>
    %155 = vector.extract_strided_slice %23 {offsets = [0, 160], sizes = [8, 32], strides = [1, 1]} : vector<8x256xf32> to vector<8x32xf32>
    %156 = vector.extract_strided_slice %24 {offsets = [160, 0], sizes = [32, 32], strides = [1, 1]} : vector<256x32xf32> to vector<32x32xf32>
    %cst_67 = arith.constant dense<0.000000e+00> : vector<8x32xf32>
    %157 = tpu.matmul %155, %156, %cst_67 {dimension_numbers = #tpu.dot_dimension_numbers<[1], [0], [0], [1], [0, 0, 1, 1], [], []>} : vector<8x32xf32>, vector<32x32xf32>, vector<8x32xf32> -> vector<8x32xf32>
    %158 = vector.broadcast %45 : f32 to vector<8x32xf32>
    %159 = arith.mulf %157, %158 : vector<8x32xf32>
    %160 = arith.addf %159, %43 : vector<8x32xf32>
    %cst_68 = arith.constant dense<0xFF800000> : vector<8xf32>
    %161 = vector.multi_reduction <maximumf>, %160, %cst_68 [1] : vector<8x32xf32> to vector<8xf32>
    %162 = vector.shape_cast %161 : vector<8xf32> to vector<8x1xf32>
    %163 = vector.broadcast %162 : vector<8x1xf32> to vector<8x32xf32>
    %164 = arith.subf %160, %163 : vector<8x32xf32>
    %165 = math.exp %164 : vector<8x32xf32>
    %cst_69 = arith.constant dense<0.000000e+00> : vector<8xf32>
    %166 = vector.multi_reduction <add>, %165, %cst_69 [1] : vector<8x32xf32> to vector<8xf32>
    %167 = vector.shape_cast %166 : vector<8xf32> to vector<8x1xf32>
    %cst_70 = arith.constant 1.000000e+00 : f32
    %168 = vector.broadcast %cst_70 : f32 to vector<8x1xf32>
    %169 = arith.divf %168, %167 : vector<8x1xf32>
    %170 = vector.broadcast %169 : vector<8x1xf32> to vector<8x32xf32>
    %171 = arith.mulf %165, %170 : vector<8x32xf32>
    %172 = vector.extract_strided_slice %27 {offsets = [0, 160], sizes = [32, 32], strides = [1, 1]} : vector<32x256xf32> to vector<32x32xf32>
    %cst_71 = arith.constant dense<0.000000e+00> : vector<8x32xf32>
    %173 = tpu.matmul %171, %172, %cst_71 {dimension_numbers = #tpu.dot_dimension_numbers<[1], [0], [0], [1], [0, 0, 1, 1], [], []>} : vector<8x32xf32>, vector<32x32xf32>, vector<8x32xf32> -> vector<8x32xf32>
    %174 = vector.extract_strided_slice %7 {offsets = [160, 0], sizes = [32, 256], strides = [1, 1]} : vector<256x256xf32> to vector<32x256xf32>
    %cst_72 = arith.constant dense<0.000000e+00> : vector<8x256xf32>
    %175 = tpu.matmul %173, %174, %cst_72 {dimension_numbers = #tpu.dot_dimension_numbers<[1], [0], [0], [1], [0, 0, 1, 1], [], []>} : vector<8x32xf32>, vector<32x256xf32>, vector<8x256xf32> -> vector<8x256xf32>
    %176 = arith.addf %154, %175 : vector<8x256xf32>
    %177 = vector.extract_strided_slice %23 {offsets = [0, 192], sizes = [8, 32], strides = [1, 1]} : vector<8x256xf32> to vector<8x32xf32>
    %178 = vector.extract_strided_slice %24 {offsets = [192, 0], sizes = [32, 32], strides = [1, 1]} : vector<256x32xf32> to vector<32x32xf32>
    %cst_73 = arith.constant dense<0.000000e+00> : vector<8x32xf32>
    %179 = tpu.matmul %177, %178, %cst_73 {dimension_numbers = #tpu.dot_dimension_numbers<[1], [0], [0], [1], [0, 0, 1, 1], [], []>} : vector<8x32xf32>, vector<32x32xf32>, vector<8x32xf32> -> vector<8x32xf32>
    %180 = vector.broadcast %45 : f32 to vector<8x32xf32>
    %181 = arith.mulf %179, %180 : vector<8x32xf32>
    %182 = arith.addf %181, %43 : vector<8x32xf32>
    %cst_74 = arith.constant dense<0xFF800000> : vector<8xf32>
    %183 = vector.multi_reduction <maximumf>, %182, %cst_74 [1] : vector<8x32xf32> to vector<8xf32>
    %184 = vector.shape_cast %183 : vector<8xf32> to vector<8x1xf32>
    %185 = vector.broadcast %184 : vector<8x1xf32> to vector<8x32xf32>
    %186 = arith.subf %182, %185 : vector<8x32xf32>
    %187 = math.exp %186 : vector<8x32xf32>
    %cst_75 = arith.constant dense<0.000000e+00> : vector<8xf32>
    %188 = vector.multi_reduction <add>, %187, %cst_75 [1] : vector<8x32xf32> to vector<8xf32>
    %189 = vector.shape_cast %188 : vector<8xf32> to vector<8x1xf32>
    %cst_76 = arith.constant 1.000000e+00 : f32
    %190 = vector.broadcast %cst_76 : f32 to vector<8x1xf32>
    %191 = arith.divf %190, %189 : vector<8x1xf32>
    %192 = vector.broadcast %191 : vector<8x1xf32> to vector<8x32xf32>
    %193 = arith.mulf %187, %192 : vector<8x32xf32>
    %194 = vector.extract_strided_slice %27 {offsets = [0, 192], sizes = [32, 32], strides = [1, 1]} : vector<32x256xf32> to vector<32x32xf32>
    %cst_77 = arith.constant dense<0.000000e+00> : vector<8x32xf32>
    %195 = tpu.matmul %193, %194, %cst_77 {dimension_numbers = #tpu.dot_dimension_numbers<[1], [0], [0], [1], [0, 0, 1, 1], [], []>} : vector<8x32xf32>, vector<32x32xf32>, vector<8x32xf32> -> vector<8x32xf32>
    %196 = vector.extract_strided_slice %7 {offsets = [192, 0], sizes = [32, 256], strides = [1, 1]} : vector<256x256xf32> to vector<32x256xf32>
    %cst_78 = arith.constant dense<0.000000e+00> : vector<8x256xf32>
    %197 = tpu.matmul %195, %196, %cst_78 {dimension_numbers = #tpu.dot_dimension_numbers<[1], [0], [0], [1], [0, 0, 1, 1], [], []>} : vector<8x32xf32>, vector<32x256xf32>, vector<8x256xf32> -> vector<8x256xf32>
    %198 = arith.addf %176, %197 : vector<8x256xf32>
    %199 = vector.extract_strided_slice %23 {offsets = [0, 224], sizes = [8, 32], strides = [1, 1]} : vector<8x256xf32> to vector<8x32xf32>
    %200 = vector.extract_strided_slice %24 {offsets = [224, 0], sizes = [32, 32], strides = [1, 1]} : vector<256x32xf32> to vector<32x32xf32>
    %cst_79 = arith.constant dense<0.000000e+00> : vector<8x32xf32>
    %201 = tpu.matmul %199, %200, %cst_79 {dimension_numbers = #tpu.dot_dimension_numbers<[1], [0], [0], [1], [0, 0, 1, 1], [], []>} : vector<8x32xf32>, vector<32x32xf32>, vector<8x32xf32> -> vector<8x32xf32>
    %202 = vector.broadcast %45 : f32 to vector<8x32xf32>
    %203 = arith.mulf %201, %202 : vector<8x32xf32>
    %204 = arith.addf %203, %43 : vector<8x32xf32>
    %cst_80 = arith.constant dense<0xFF800000> : vector<8xf32>
    %205 = vector.multi_reduction <maximumf>, %204, %cst_80 [1] : vector<8x32xf32> to vector<8xf32>
    %206 = vector.shape_cast %205 : vector<8xf32> to vector<8x1xf32>
    %207 = vector.broadcast %206 : vector<8x1xf32> to vector<8x32xf32>
    %208 = arith.subf %204, %207 : vector<8x32xf32>
    %209 = math.exp %208 : vector<8x32xf32>
    %cst_81 = arith.constant dense<0.000000e+00> : vector<8xf32>
    %210 = vector.multi_reduction <add>, %209, %cst_81 [1] : vector<8x32xf32> to vector<8xf32>
    %211 = vector.shape_cast %210 : vector<8xf32> to vector<8x1xf32>
    %cst_82 = arith.constant 1.000000e+00 : f32
    %212 = vector.broadcast %cst_82 : f32 to vector<8x1xf32>
    %213 = arith.divf %212, %211 : vector<8x1xf32>
    %214 = vector.broadcast %213 : vector<8x1xf32> to vector<8x32xf32>
    %215 = arith.mulf %209, %214 : vector<8x32xf32>
    %216 = vector.extract_strided_slice %27 {offsets = [0, 224], sizes = [32, 32], strides = [1, 1]} : vector<32x256xf32> to vector<32x32xf32>
    %cst_83 = arith.constant dense<0.000000e+00> : vector<8x32xf32>
    %217 = tpu.matmul %215, %216, %cst_83 {dimension_numbers = #tpu.dot_dimension_numbers<[1], [0], [0], [1], [0, 0, 1, 1], [], []>} : vector<8x32xf32>, vector<32x32xf32>, vector<8x32xf32> -> vector<8x32xf32>
    %218 = vector.extract_strided_slice %7 {offsets = [224, 0], sizes = [32, 256], strides = [1, 1]} : vector<256x256xf32> to vector<32x256xf32>
    %cst_84 = arith.constant dense<0.000000e+00> : vector<8x256xf32>
    %219 = tpu.matmul %217, %218, %cst_84 {dimension_numbers = #tpu.dot_dimension_numbers<[1], [0], [0], [1], [0, 0, 1, 1], [], []>} : vector<8x32xf32>, vector<32x256xf32>, vector<8x256xf32> -> vector<8x256xf32>
    %220 = arith.addf %198, %219 : vector<8x256xf32>
    %221 = vector.broadcast %13 : vector<1x256xf32> to vector<8x256xf32>
    %222 = arith.addf %220, %221 : vector<8x256xf32>
    %cst_85 = arith.constant dense<0.000000e+00> : vector<8x512xf32>
    %223 = tpu.matmul %222, %8, %cst_85 {dimension_numbers = #tpu.dot_dimension_numbers<[1], [0], [0], [1], [0, 0, 1, 1], [], []>} : vector<8x256xf32>, vector<256x512xf32>, vector<8x512xf32> -> vector<8x512xf32>
    %224 = vector.broadcast %14 : vector<1x512xf32> to vector<8x512xf32>
    %225 = arith.addf %223, %224 : vector<8x512xf32>
    %cst_86 = arith.constant 0.000000e+00 : f32
    %226 = vector.broadcast %cst_86 : f32 to vector<8x512xf32>
    %227 = arith.maximumf %225, %226 : vector<8x512xf32>
    %cst_87 = arith.constant dense<0.000000e+00> : vector<8x256xf32>
    %228 = tpu.matmul %227, %10, %cst_87 {dimension_numbers = #tpu.dot_dimension_numbers<[1], [0], [0], [1], [0, 0, 1, 1], [], []>} : vector<8x512xf32>, vector<512x256xf32>, vector<8x256xf32> -> vector<8x256xf32>
    %229 = vector.broadcast %15 : vector<1x256xf32> to vector<8x256xf32>
    %230 = arith.addf %228, %229 : vector<8x256xf32>
    %231 = arith.addf %230, %0 : vector<8x256xf32>
    %cst_88 = arith.constant dense<0.000000e+00> : vector<8xf32>
    %232 = vector.multi_reduction <add>, %231, %cst_88 [1] : vector<8x256xf32> to vector<8xf32>
    %233 = vector.shape_cast %232 : vector<8xf32> to vector<8x1xf32>
    %cst_89 = arith.constant 2.560000e+02 : f32
    %234 = vector.broadcast %cst_89 : f32 to vector<8x1xf32>
    %235 = arith.divf %233, %234 : vector<8x1xf32>
    %236 = vector.broadcast %235 : vector<8x1xf32> to vector<8x256xf32>
    %237 = arith.subf %231, %236 : vector<8x256xf32>
    %238 = arith.mulf %237, %237 : vector<8x256xf32>
    %cst_90 = arith.constant dense<0.000000e+00> : vector<8xf32>
    %239 = vector.multi_reduction <add>, %238, %cst_90 [1] : vector<8x256xf32> to vector<8xf32>
    %240 = vector.shape_cast %239 : vector<8xf32> to vector<8x1xf32>
    %cst_91 = arith.constant 2.560000e+02 : f32
    %241 = vector.broadcast %cst_91 : f32 to vector<8x1xf32>
    %242 = arith.divf %240, %241 : vector<8x1xf32>
    %243 = vector.broadcast %235 : vector<8x1xf32> to vector<8x256xf32>
    %244 = arith.subf %231, %243 : vector<8x256xf32>
    %cst_92 = arith.constant 9.99999974E-6 : f32
    %245 = vector.broadcast %cst_92 : f32 to vector<8x1xf32>
    %246 = arith.addf %242, %245 : vector<8x1xf32>
    %247 = math.rsqrt %246 : vector<8x1xf32>
    %248 = vector.broadcast %247 : vector<8x1xf32> to vector<8x256xf32>
    %249 = arith.mulf %244, %248 : vector<8x256xf32>
    %250 = vector.broadcast %16 : vector<1x256xf32> to vector<8x256xf32>
    %251 = arith.mulf %249, %250 : vector<8x256xf32>
    %252 = vector.broadcast %17 : vector<1x256xf32> to vector<8x256xf32>
    %253 = arith.addf %251, %252 : vector<8x256xf32>
    %cst_93 = arith.constant dense<0.000000e+00> : vector<8x256xf32>
    %254 = tpu.matmul %253, %9, %cst_93 {dimension_numbers = #tpu.dot_dimension_numbers<[1], [0], [0], [1], [0, 0, 1, 1], [], []>} : vector<8x256xf32>, vector<256x256xf32>, vector<8x256xf32> -> vector<8x256xf32>
    %255 = vector.broadcast %18 : vector<1x256xf32> to vector<8x256xf32>
    %256 = arith.addf %254, %255 : vector<8x256xf32>
    %c0_94 = arith.constant 0 : index
    %c0_95 = arith.constant 0 : index
    %257 = vector.load %arg4[%c0_94, %c0_95] : memref<256x256xf32, #tpu.memory_space<vmem>>, vector<256x256xf32>
    %cst_96 = arith.constant dense<0.000000e+00> : vector<8x256xf32>
    %258 = tpu.matmul %256, %257, %cst_96 {dimension_numbers = #tpu.dot_dimension_numbers<[1], [0], [0], [1], [0, 0, 1, 1], [], []>} : vector<8x256xf32>, vector<256x256xf32>, vector<8x256xf32> -> vector<8x256xf32>
    %259 = arith.subf %256, %258 : vector<8x256xf32>
    %260 = arith.mulf %259, %259 : vector<8x256xf32>
    %cst_97 = arith.constant dense<0.000000e+00> : vector<8x256xf32>
    %261 = tpu.matmul %260, %257, %cst_97 {dimension_numbers = #tpu.dot_dimension_numbers<[1], [0], [0], [1], [0, 0, 1, 1], [], []>} : vector<8x256xf32>, vector<256x256xf32>, vector<8x256xf32> -> vector<8x256xf32>
    %cst_98 = arith.constant 9.99999974E-6 : f32
    %262 = vector.broadcast %cst_98 : f32 to vector<8x256xf32>
    %263 = arith.addf %261, %262 : vector<8x256xf32>
    %264 = math.rsqrt %263 : vector<8x256xf32>
    %265 = arith.mulf %259, %264 : vector<8x256xf32>
    %266 = vector.broadcast %19 : vector<1x256xf32> to vector<8x256xf32>
    %267 = arith.mulf %265, %266 : vector<8x256xf32>
    %268 = vector.broadcast %20 : vector<1x256xf32> to vector<8x256xf32>
    %269 = arith.addf %267, %268 : vector<8x256xf32>
    %c0_99 = arith.constant 0 : index
    %c0_100 = arith.constant 0 : index
    %270 = vector.load %arg8[%c0_99, %c0_100] : memref<8x256xf32, #tpu.memory_space<vmem>>, vector<8x256xf32>
    tpu.vector_store %arg8[%c0_99, %c0_100], %269 {strides = array<i32>} : memref<8x256xf32, #tpu.memory_space<vmem>>, vector<8x256xf32>,
    return
  }
  func.func @transform_0(%arg0: i32) -> (i32, i32) {
    %c0_i32 = arith.constant 0 : i32
    %c0_i32_0 = arith.constant 0 : i32
    return %arg0, %c0_i32 : i32, i32
  }
  func.func @transform_1(%arg0: i32) -> (i32, i32) {
    %c0_i32 = arith.constant 0 : i32
    %c0_i32_0 = arith.constant 0 : i32
    return %arg0, %c0_i32 : i32, i32
  }
  func.func @transform_2(%arg0: i32) -> (i32, i32, i32) {
    %c0_i32 = arith.constant 0 : i32
    %c0_i32_0 = arith.constant 0 : i32
    %c0_i32_1 = arith.constant 0 : i32
    return %arg0, %c0_i32, %c0_i32_0 : i32, i32, i32
  }
  func.func @transform_3(%arg0: i32) -> (i32, i32) {
    %c0_i32 = arith.constant 0 : i32
    %c0_i32_0 = arith.constant 0 : i32
    %c0_i32_1 = arith.constant 0 : i32
    return %c0_i32, %c0_i32_0 : i32, i32
  }
  func.func @transform_4(%arg0: i32) -> (i32, i32) {
    %c0_i32 = arith.constant 0 : i32
    %c0_i32_0 = arith.constant 0 : i32
    %c0_i32_1 = arith.constant 0 : i32
    return %c0_i32, %c0_i32_0 : i32, i32
  }
  func.func @transform_5(%arg0: i32) -> (i32, i32) {
    %c0_i32 = arith.constant 0 : i32
    %c0_i32_0 = arith.constant 0 : i32
    %c0_i32_1 = arith.constant 0 : i32
    return %c0_i32, %c0_i32_0 : i32, i32
  }
  func.func @transform_6(%arg0: i32) -> (i32, i32) {
    %c0_i32 = arith.constant 0 : i32
    %c0_i32_0 = arith.constant 0 : i32
    %c0_i32_1 = arith.constant 0 : i32
    return %c0_i32, %c0_i32_0 : i32, i32
  }
  func.func @transform_7(%arg0: i32) -> (i32, i32) {
    %c0_i32 = arith.constant 0 : i32
    %c0_i32_0 = arith.constant 0 : i32
    return %arg0, %c0_i32 : i32, i32
  }
}

</mosaic_0001>

<llo_original>
// kernel: bmatrix_decoder_forward.1
$region0: #{bmatrix_decoder_forward.1}
  #allocation0 [shape = 'u32[]', space=smem, size = 0x4, offset = 0x4, fixed_abs, tag = 'smem constant byte address 0x4 - core index']
  #allocation1 [shape = 'u32[144,128]{1,0:T(1,128)}', space=vmem, size = 0x12000, scoped, tag = 'internal scratch']
  %s0 = inlined_call_operand.vmem [shape: f32[8,256], index: 0, kind: input, shape index: {}]
  %s1 = inlined_call_operand.vmem [shape: f32[32,256], index: 1, kind: input, shape index: {}]
  %s2 = inlined_call_operand.vmem [shape: f32[1,256,32], index: 2, kind: input, shape index: {}]
  %s3 = inlined_call_operand.vmem [shape: f32[256,256], index: 3, kind: input, shape index: {}]
  %s4 = inlined_call_operand.hbm [shape: f32[256,1792], index: 4, kind: input, shape index: {}]
  %s5 = inlined_call_operand.hbm [shape: f32[512,256], index: 5, kind: input, shape index: {}]
  %s6 = inlined_call_operand.hbm [shape: f32[1,2816], index: 6, kind: input, shape index: {}]
  %s7 = inlined_call_operand.vmem [shape: f32[8,256], index: 7, kind: output, shape index: {}]
  %s8 = sld [smem:[#allocation0]]
  $region50: #{bmatrix_decoder_forward.1} parent=0
    _
  %s10 = ssub.s32 1, %s8
  %s11 = scalar_select 0, %s10, %s8
  $region1: #{bmatrix_decoder_forward.1} parent=0
    #allocation2 [shape = 'u8[1835008]{0}', space=vmem, size = 0x1c0000, scoped, tag = 'input window, operand 4, single buffered']
    #allocation3 [shape = 's32[1]{0}', space=sflag, size = 0x4, scoped, tag = 'scoped memory for bmatrix_decoder_forward.1']
    #allocation4 [shape = 'u8[524288]{0}', space=vmem, size = 0x80000, scoped, tag = 'input window, operand 5, single buffered']
    #allocation5 [shape = 's32[1]{0}', space=sflag, size = 0x4, scoped, tag = 'scoped memory for bmatrix_decoder_forward.1']
    #allocation6 [shape = 'u8[11264]{0}', space=vmem, size = 0x2c00, scoped, tag = 'input window, operand 6, single buffered']
    %12 = vsyncpa [#allocation3], 0
    %13 = vsyncpa [#allocation5], 0
    // Predicated region
    $region2: #{bmatrix_decoder_forward.1} parent=1 // pred_check
      _
    $region3: #{bmatrix_decoder_forward.1} parent=1 // pred_check_branch
      %15 = sbr.rel (0) target = $region5
    $region4: #{bmatrix_decoder_forward.1} parent=1 // pred_region
      _
    $region5: #{bmatrix_decoder_forward.1} parent=1 // pred_fallthru
      _
    // Predicated region
    $region6: #{bmatrix_decoder_forward.1} parent=1 // pred_check
      _
    $region7: #{bmatrix_decoder_forward.1} parent=1 // pred_check_branch
      %17 = sbr.rel (0) target = $region9
    $region8: #{bmatrix_decoder_forward.1} parent=1 // pred_region
      _
    $region9: #{bmatrix_decoder_forward.1} parent=1 // pred_fallthru
      _
    // Predicated region
    $region10: #{bmatrix_decoder_forward.1} parent=1 // pred_check
      _
    $region11: #{bmatrix_decoder_forward.1} parent=1 // pred_check_branch
      %19 = sbr.rel (0) target = $region13
    $region12: #{bmatrix_decoder_forward.1} parent=1 // pred_region
      _
    $region13: #{bmatrix_decoder_forward.1} parent=1 // pred_fallthru
      _
    // Predicated region
    $region14: #{bmatrix_decoder_forward.1} parent=1 // pred_check
      _
    $region15: #{bmatrix_decoder_forward.1} parent=1 // pred_check_branch
      %21 = sbr.rel (0) target = $region17
    $region16: #{bmatrix_decoder_forward.1} parent=1 // pred_region
      _
    $region17: #{bmatrix_decoder_forward.1} parent=1 // pred_fallthru
      _
    // Predicated region
    $region18: #{bmatrix_decoder_forward.1} parent=1 // pred_check
      _
    $region19: #{bmatrix_decoder_forward.1} parent=1 // pred_check_branch
      %23 = sbr.rel (0) target = $region21
    $region20: #{bmatrix_decoder_forward.1} parent=1 // pred_region
      %s25 = ssub.s32 57344, 57344
      %26 = vsyncadd [#allocation3], %s25
      %s27 = sshll.u32 [#allocation2], 4
      %s28 = int_to_ptr.vmem [resolvable:$true] %s27
      %33 = dma.hbm_to_vmem [thread:$0]  %s4, 57344, %s28, [#allocation3], 1792, 1792, 112
    $region21: #{bmatrix_decoder_forward.1} parent=1 // pred_fallthru
      _
    // Predicated region
    $region22: #{bmatrix_decoder_forward.1} parent=1 // pred_check
      _
    $region23: #{bmatrix_decoder_forward.1} parent=1 // pred_check_branch
      %35 = sbr.rel (0) target = $region25
    $region24: #{bmatrix_decoder_forward.1} parent=1 // pred_region
      %s37 = ssub.s32 16384, 16384
      %38 = vsyncadd [#allocation5], %s37
      %s39 = sshll.u32 [#allocation4], 4
      %s40 = int_to_ptr.vmem [resolvable:$true] %s39
      %45 = dma.hbm_to_vmem [thread:$0]  %s5, 16384, %s40, [#allocation5], 256, 256, 16
    $region25: #{bmatrix_decoder_forward.1} parent=1 // pred_fallthru
      _
    // Predicated region
    $region26: #{bmatrix_decoder_forward.1} parent=1 // pred_check
      _
    $region27: #{bmatrix_decoder_forward.1} parent=1 // pred_check_branch
      %47 = sbr.rel (0) target = $region29
    $region28: #{bmatrix_decoder_forward.1} parent=1 // pred_region
      %s49 = ssub.s32 352, 352
      %50 = vsyncadd [#allocation5], %s49
      %s52 = sshll.u32 [#allocation6], 4
      %s53 = int_to_ptr.vmem [resolvable:$true] %s52
      %55 = dma.hbm_to_vmem [thread:$0]  %s6, 352, %s53, [#allocation5]
    $region29: #{bmatrix_decoder_forward.1} parent=1 // pred_fallthru
      _
    // Predicated region
    $region30: #{bmatrix_decoder_forward.1} parent=1 // pred_check
      _
    $region31: #{bmatrix_decoder_forward.1} parent=1 // pred_check_branch
      %57 = sbr.rel (0) target = $region33
    $region32: #{bmatrix_decoder_forward.1} parent=1 // pred_region
      %58 = dma.done [#allocation3], 57344
    $region33: #{bmatrix_decoder_forward.1} parent=1 // pred_fallthru
      _
    // Predicated region
    $region34: #{bmatrix_decoder_forward.1} parent=1 // pred_check
      _
    $region35: #{bmatrix_decoder_forward.1} parent=1 // pred_check_branch
      %60 = sbr.rel (0) target = $region37
    $region36: #{bmatrix_decoder_forward.1} parent=1 // pred_region
      %61 = dma.done [#allocation5], 16384
    $region37: #{bmatrix_decoder_forward.1} parent=1 // pred_fallthru
      _
    // Predicated region
    $region38: #{bmatrix_decoder_forward.1} parent=1 // pred_check
      _
    $region39: #{bmatrix_decoder_forward.1} parent=1 // pred_check_branch
      %63 = sbr.rel (0) target = $region41
    $region40: #{bmatrix_decoder_forward.1} parent=1 // pred_region
      %64 = dma.done [#allocation5], 352
    $region41: #{bmatrix_decoder_forward.1} parent=1 // pred_fallthru
      _
    %v65 = vld [vmem:[%s0] sm:$0xff]
    %v66 = vld [vmem:[%s0 + $0x8] sm:$0xff]
    %v67 = vld [vmem:[%s1] sm:$0xff]
    %v68 = vld [vmem:[%s1 + $0x8] sm:$0xff]
    %v69 = vld [vmem:[%s1 + $0x10] sm:$0xff]
    %v70 = vld [vmem:[%s1 + $0x18] sm:$0xff]
    %v71 = vld [vmem:[%s1 + $0x20] sm:$0xff]
    %v72 = vld [vmem:[%s1 + $0x28] sm:$0xff]
    %v73 = vld [vmem:[%s1 + $0x30] sm:$0xff]
    %v74 = vld [vmem:[%s1 + $0x38] sm:$0xff]
    %v75 = vld [vmem:[%s2] sm:$0xff]
    %v76 = vld [vmem:[%s2 + $0x8] sm:$0xff]
    %v77 = vld [vmem:[%s2 + $0x10] sm:$0xff]
    %v78 = vld [vmem:[%s2 + $0x18] sm:$0xff]
    %v79 = vld [vmem:[%s2 + $0x20] sm:$0xff]
    %v80 = vld [vmem:[%s2 + $0x28] sm:$0xff]
    %v81 = vld [vmem:[%s2 + $0x30] sm:$0xff]
    %v82 = vld [vmem:[%s2 + $0x38] sm:$0xff]
    %v83 = vld [vmem:[%s2 + $0x40] sm:$0xff]
    %v84 = vld [vmem:[%s2 + $0x48] sm:$0xff]
    %v85 = vld [vmem:[%s2 + $0x50] sm:$0xff]
    %v86 = vld [vmem:[%s2 + $0x58] sm:$0xff]
    %v87 = vld [vmem:[%s2 + $0x60] sm:$0xff]
    %v88 = vld [vmem:[%s2 + $0x68] sm:$0xff]
    %v89 = vld [vmem:[%s2 + $0x70] sm:$0xff]
    %v90 = vld [vmem:[%s2 + $0x78] sm:$0xff]
    %v91 = vld [vmem:[%s2 + $0x80] sm:$0xff]
    %v92 = vld [vmem:[%s2 + $0x88] sm:$0xff]
    %v93 = vld [vmem:[%s2 + $0x90] sm:$0xff]
    %v94 = vld [vmem:[%s2 + $0x98] sm:$0xff]
    %v95 = vld [vmem:[%s2 + $0xa0] sm:$0xff]
    %v96 = vld [vmem:[%s2 + $0xa8] sm:$0xff]
    %v97 = vld [vmem:[%s2 + $0xb0] sm:$0xff]
    %v98 = vld [vmem:[%s2 + $0xb8] sm:$0xff]
    %v99 = vld [vmem:[%s2 + $0xc0] sm:$0xff]
    %v100 = vld [vmem:[%s2 + $0xc8] sm:$0xff]
    %v101 = vld [vmem:[%s2 + $0xd0] sm:$0xff]
    %v102 = vld [vmem:[%s2 + $0xd8] sm:$0xff]
    %v103 = vld [vmem:[%s2 + $0xe0] sm:$0xff]
    %v104 = vld [vmem:[%s2 + $0xe8] sm:$0xff]
    %v105 = vld [vmem:[%s2 + $0xf0] sm:$0xff]
    %v106 = vld [vmem:[%s2 + $0xf8] sm:$0xff]
    %v107 = vld [vmem:[#allocation2] sm:$0xff]
    %v108 = vld [vmem:[#allocation2 + $0x8] sm:$0xff]
    %v109 = vld [vmem:[#allocation2 + $0x70] sm:$0xff]
    %v110 = vld [vmem:[#allocation2 + $0x78] sm:$0xff]
    %v111 = vld [vmem:[#allocation2 + $0xe0] sm:$0xff]
    %v112 = vld [vmem:[#allocation2 + $0xe8] sm:$0xff]
    %v113 = vld [vmem:[#allocation2 + $0x150] sm:$0xff]
    %v114 = vld [vmem:[#allocation2 + $0x158] sm:$0xff]
    %v115 = vld [vmem:[#allocation2 + $0x1c0] sm:$0xff]
    %v116 = vld [vmem:[#allocation2 + $0x1c8] sm:$0xff]
    %v117 = vld [vmem:[#allocation2 + $0x230] sm:$0xff]
    %v118 = vld [vmem:[#allocation2 + $0x238] sm:$0xff]
    %v119 = vld [vmem:[#allocation2 + $0x2a0] sm:$0xff]
    %v120 = vld [vmem:[#allocation2 + $0x2a8] sm:$0xff]
    %v121 = vld [vmem:[#allocation2 + $0x310] sm:$0xff]
    %v122 = vld [vmem:[#allocation2 + $0x318] sm:$0xff]
    %v123 = vld [vmem:[#allocation2 + $0x380] sm:$0xff]
    %v124 = vld [vmem:[#allocation2 + $0x388] sm:$0xff]
    %v125 = vld [vmem:[#allocation2 + $0x3f0] sm:$0xff]
    %v126 = vld [vmem:[#allocation2 + $0x3f8] sm:$0xff]
    %v127 = vld [vmem:[#allocation2 + $0x460] sm:$0xff]
    %v128 = vld [vmem:[#allocation2 + $0x468] sm:$0xff]
    %v129 = vld [vmem:[#allocation2 + $0x4d0] sm:$0xff]
    %v130 = vld [vmem:[#allocation2 + $0x4d8] sm:$0xff]
    %v131 = vld [vmem:[#allocation2 + $0x540] sm:$0xff]
    %v132 = vld [vmem:[#allocation2 + $0x548] sm:$0xff]
    %v133 = vld [vmem:[#allocation2 + $0x5b0] sm:$0xff]
    %v134 = vld [vmem:[#allocation2 + $0x5b8] sm:$0xff]
    %v135 = vld [vmem:[#allocation2 + $0x620] sm:$0xff]
    %v136 = vld [vmem:[#allocation2 + $0x628] sm:$0xff]
    %v137 = vld [vmem:[#allocation2 + $0x690] sm:$0xff]
    %v138 = vld [vmem:[#allocation2 + $0x698] sm:$0xff]
    %v139 = vld [vmem:[#allocation2 + $0x700] sm:$0xff]
    %v140 = vld [vmem:[#allocation2 + $0x708] sm:$0xff]
    %v141 = vld [vmem:[#allocation2 + $0x770] sm:$0xff]
    %v142 = vld [vmem:[#allocation2 + $0x778] sm:$0xff]
    %v143 = vld [vmem:[#allocation2 + $0x7e0] sm:$0xff]
    %v144 = vld [vmem:[#allocation2 + $0x7e8] sm:$0xff]
    %v145 = vld [vmem:[#allocation2 + $0x850] sm:$0xff]
    %v146 = vld [vmem:[#allocation2 + $0x858] sm:$0xff]
    %v147 = vld [vmem:[#allocation2 + $0x8c0] sm:$0xff]
    %v148 = vld [vmem:[#allocation2 + $0x8c8] sm:$0xff]
    %v149 = vld [vmem:[#allocation2 + $0x930] sm:$0xff]
    %v150 = vld [vmem:[#allocation2 + $0x938] sm:$0xff]
    %v151 = vld [vmem:[#allocation2 + $0x9a0] sm:$0xff]
    %v152 = vld [vmem:[#allocation2 + $0x9a8] sm:$0xff]
    %v153 = vld [vmem:[#allocation2 + $0xa10] sm:$0xff]
    %v154 = vld [vmem:[#allocation2 + $0xa18] sm:$0xff]
    %v155 = vld [vmem:[#allocation2 + $0xa80] sm:$0xff]
    %v156 = vld [vmem:[#allocation2 + $0xa88] sm:$0xff]
    %v157 = vld [vmem:[#allocation2 + $0xaf0] sm:$0xff]
    %v158 = vld [vmem:[#allocation2 + $0xaf8] sm:$0xff]
    %v159 = vld [vmem:[#allocation2 + $0xb60] sm:$0xff]
    %v160 = vld [vmem:[#allocation2 + $0xb68] sm:$0xff]
    %v161 = vld [vmem:[#allocation2 + $0xbd0] sm:$0xff]
    %v162 = vld [vmem:[#allocation2 + $0xbd8] sm:$0xff]
    %v163 = vld [vmem:[#allocation2 + $0xc40] sm:$0xff]
    %v164 = vld [vmem:[#allocation2 + $0xc48] sm:$0xff]
    %v165 = vld [vmem:[#allocation2 + $0xcb0] sm:$0xff]
    %v166 = vld [vmem:[#allocation2 + $0xcb8] sm:$0xff]
    %v167 = vld [vmem:[#allocation2 + $0xd20] sm:$0xff]
    %v168 = vld [vmem:[#allocation2 + $0xd28] sm:$0xff]
    %v169 = vld [vmem:[#allocation2 + $0xd90] sm:$0xff]
    %v170 = vld [vmem:[#allocation2 + $0xd98] sm:$0xff]
    %v171 = vld [vmem:[#allocation2 + $0x10] sm:$0xff]
    %v172 = vld [vmem:[#allocation2 + $0x18] sm:$0xff]
    %v173 = vld [vmem:[#allocation2 + $0x80] sm:$0xff]
    %v174 = vld [vmem:[#allocation2 + $0x88] sm:$0xff]
    %v175 = vld [vmem:[#allocation2 + $0xf0] sm:$0xff]
    %v176 = vld [vmem:[#allocation2 + $0xf8] sm:$0xff]
    %v177 = vld [vmem:[#allocation2 + $0x160] sm:$0xff]
    %v178 = vld [vmem:[#allocation2 + $0x168] sm:$0xff]
    %v179 = vld [vmem:[#allocation2 + $0x1d0] sm:$0xff]
    %v180 = vld [vmem:[#allocation2 + $0x1d8] sm:$0xff]
    %v181 = vld [vmem:[#allocation2 + $0x240] sm:$0xff]
    %v182 = vld [vmem:[#allocation2 + $0x248] sm:$0xff]
    %v183 = vld [vmem:[#allocation2 + $0x2b0] sm:$0xff]
    %v184 = vld [vmem:[#allocation2 + $0x2b8] sm:$0xff]
    %v185 = vld [vmem:[#allocation2 + $0x320] sm:$0xff]
    %v186 = vld [vmem:[#allocation2 + $0x328] sm:$0xff]
    %v187 = vld [vmem:[#allocation2 + $0x390] sm:$0xff]
    %v188 = vld [vmem:[#allocation2 + $0x398] sm:$0xff]
    %v189 = vld [vmem:[#allocation2 + $0x400] sm:$0xff]
    %v190 = vld [vmem:[#allocation2 + $0x408] sm:$0xff]
    %v191 = vld [vmem:[#allocation2 + $0x470] sm:$0xff]
    %v192 = vld [vmem:[#allocation2 + $0x478] sm:$0xff]
    %v193 = vld [vmem:[#allocation2 + $0x4e0] sm:$0xff]
    %v194 = vld [vmem:[#allocation2 + $0x4e8] sm:$0xff]
    %v195 = vld [vmem:[#allocation2 + $0x550] sm:$0xff]
    %v196 = vld [vmem:[#allocation2 + $0x558] sm:$0xff]
    %v197 = vld [vmem:[#allocation2 + $0x5c0] sm:$0xff]
    %v198 = vld [vmem:[#allocation2 + $0x5c8] sm:$0xff]
    %v199 = vld [vmem:[#allocation2 + $0x630] sm:$0xff]
    %v200 = vld [vmem:[#allocation2 + $0x638] sm:$0xff]
    %v201 = vld [vmem:[#allocation2 + $0x6a0] sm:$0xff]
    %v202 = vld [vmem:[#allocation2 + $0x6a8] sm:$0xff]
    %v203 = vld [vmem:[#allocation2 + $0x710] sm:$0xff]
    %v204 = vld [vmem:[#allocation2 + $0x718] sm:$0xff]
    %v205 = vld [vmem:[#allocation2 + $0x780] sm:$0xff]
    %v206 = vld [vmem:[#allocation2 + $0x788] sm:$0xff]
    %v207 = vld [vmem:[#allocation2 + $0x7f0] sm:$0xff]
    %v208 = vld [vmem:[#allocation2 + $0x7f8] sm:$0xff]
    %v209 = vld [vmem:[#allocation2 + $0x860] sm:$0xff]
    %v210 = vld [vmem:[#allocation2 + $0x868] sm:$0xff]
    %v211 = vld [vmem:[#allocation2 + $0x8d0] sm:$0xff]
    %v212 = vld [vmem:[#allocation2 + $0x8d8] sm:$0xff]
    %v213 = vld [vmem:[#allocation2 + $0x940] sm:$0xff]
    %v214 = vld [vmem:[#allocation2 + $0x948] sm:$0xff]
    %v215 = vld [vmem:[#allocation2 + $0x9b0] sm:$0xff]
    %v216 = vld [vmem:[#allocation2 + $0x9b8] sm:$0xff]
    %v217 = vld [vmem:[#allocation2 + $0xa20] sm:$0xff]
    %v218 = vld [vmem:[#allocation2 + $0xa28] sm:$0xff]
    %v219 = vld [vmem:[#allocation2 + $0xa90] sm:$0xff]
    %v220 = vld [vmem:[#allocation2 + $0xa98] sm:$0xff]
    %v221 = vld [vmem:[#allocation2 + $0xb00] sm:$0xff]
    %v222 = vld [vmem:[#allocation2 + $0xb08] sm:$0xff]
    %v223 = vld [vmem:[#allocation2 + $0xb70] sm:$0xff]
    %v224 = vld [vmem:[#allocation2 + $0xb78] sm:$0xff]
    %v225 = vld [vmem:[#allocation2 + $0xbe0] sm:$0xff]
    %v226 = vld [vmem:[#allocation2 + $0xbe8] sm:$0xff]
    %v227 = vld [vmem:[#allocation2 + $0xc50] sm:$0xff]
    %v228 = vld [vmem:[#allocation2 + $0xc58] sm:$0xff]
    %v229 = vld [vmem:[#allocation2 + $0xcc0] sm:$0xff]
    %v230 = vld [vmem:[#allocation2 + $0xcc8] sm:$0xff]
    %v231 = vld [vmem:[#allocation2 + $0xd30] sm:$0xff]
    %v232 = vld [vmem:[#allocation2 + $0xd38] sm:$0xff]
    %v233 = vld [vmem:[#allocation2 + $0xda0] sm:$0xff]
    %v234 = vld [vmem:[#allocation2 + $0xda8] sm:$0xff]
    %v235 = vld [vmem:[#allocation2 + $0x20] sm:$0xff]
    %v236 = vld [vmem:[#allocation2 + $0x28] sm:$0xff]
    %v237 = vld [vmem:[#allocation2 + $0x90] sm:$0xff]
    %v238 = vld [vmem:[#allocation2 + $0x98] sm:$0xff]
    %v239 = vld [vmem:[#allocation2 + $0x100] sm:$0xff]
    %v240 = vld [vmem:[#allocation2 + $0x108] sm:$0xff]
    %v241 = vld [vmem:[#allocation2 + $0x170] sm:$0xff]
    %v242 = vld [vmem:[#allocation2 + $0x178] sm:$0xff]
    %v243 = vld [vmem:[#allocation2 + $0x1e0] sm:$0xff]
    %v244 = vld [vmem:[#allocation2 + $0x1e8] sm:$0xff]
    %v245 = vld [vmem:[#allocation2 + $0x250] sm:$0xff]
    %v246 = vld [vmem:[#allocation2 + $0x258] sm:$0xff]
    %v247 = vld [vmem:[#allocation2 + $0x2c0] sm:$0xff]
    %v248 = vld [vmem:[#allocation2 + $0x2c8] sm:$0xff]
    %v249 = vld [vmem:[#allocation2 + $0x330] sm:$0xff]
    %v250 = vld [vmem:[#allocation2 + $0x338] sm:$0xff]
    %v251 = vld [vmem:[#allocation2 + $0x3a0] sm:$0xff]
    %v252 = vld [vmem:[#allocation2 + $0x3a8] sm:$0xff]
    %v253 = vld [vmem:[#allocation2 + $0x410] sm:$0xff]
    %v254 = vld [vmem:[#allocation2 + $0x418] sm:$0xff]
    %v255 = vld [vmem:[#allocation2 + $0x480] sm:$0xff]
    %v256 = vld [vmem:[#allocation2 + $0x488] sm:$0xff]
    %v257 = vld [vmem:[#allocation2 + $0x4f0] sm:$0xff]
    %v258 = vld [vmem:[#allocation2 + $0x4f8] sm:$0xff]
    %v259 = vld [vmem:[#allocation2 + $0x560] sm:$0xff]
    %v260 = vld [vmem:[#allocation2 + $0x568] sm:$0xff]
    %v261 = vld [vmem:[#allocation2 + $0x5d0] sm:$0xff]
    %v262 = vld [vmem:[#allocation2 + $0x5d8] sm:$0xff]
    %v263 = vld [vmem:[#allocation2 + $0x640] sm:$0xff]
    %v264 = vld [vmem:[#allocation2 + $0x648] sm:$0xff]
    %v265 = vld [vmem:[#allocation2 + $0x6b0] sm:$0xff]
    %v266 = vld [vmem:[#allocation2 + $0x6b8] sm:$0xff]
    %v267 = vld [vmem:[#allocation2 + $0x720] sm:$0xff]
    %v268 = vld [vmem:[#allocation2 + $0x728] sm:$0xff]
    %v269 = vld [vmem:[#allocation2 + $0x790] sm:$0xff]
    %v270 = vld [vmem:[#allocation2 + $0x798] sm:$0xff]
    %v271 = vld [vmem:[#allocation2 + $0x800] sm:$0xff]
    %v272 = vld [vmem:[#allocation2 + $0x808] sm:$0xff]
    %v273 = vld [vmem:[#allocation2 + $0x870] sm:$0xff]
    %v274 = vld [vmem:[#allocation2 + $0x878] sm:$0xff]
    %v275 = vld [vmem:[#allocation2 + $0x8e0] sm:$0xff]
    %v276 = vld [vmem:[#allocation2 + $0x8e8] sm:$0xff]
    %v277 = vld [vmem:[#allocation2 + $0x950] sm:$0xff]
    %v278 = vld [vmem:[#allocation2 + $0x958] sm:$0xff]
    %v279 = vld [vmem:[#allocation2 + $0x9c0] sm:$0xff]
    %v280 = vld [vmem:[#allocation2 + $0x9c8] sm:$0xff]
    %v281 = vld [vmem:[#allocation2 + $0xa30] sm:$0xff]
    %v282 = vld [vmem:[#allocation2 + $0xa38] sm:$0xff]
    %v283 = vld [vmem:[#allocation2 + $0xaa0] sm:$0xff]
    %v284 = vld [vmem:[#allocation2 + $0xaa8] sm:$0xff]
    %v285 = vld [vmem:[#allocation2 + $0xb10] sm:$0xff]
    %v286 = vld [vmem:[#allocation2 + $0xb18] sm:$0xff]
    %v287 = vld [vmem:[#allocation2 + $0xb80] sm:$0xff]
    %v288 = vld [vmem:[#allocation2 + $0xb88] sm:$0xff]
    %v289 = vld [vmem:[#allocation2 + $0xbf0] sm:$0xff]
    %v290 = vld [vmem:[#allocation2 + $0xbf8] sm:$0xff]
    %v291 = vld [vmem:[#allocation2 + $0xc60] sm:$0xff]
    %v292 = vld [vmem:[#allocation2 + $0xc68] sm:$0xff]
    %v293 = vld [vmem:[#allocation2 + $0xcd0] sm:$0xff]
    %v294 = vld [vmem:[#allocation2 + $0xcd8] sm:$0xff]
    %v295 = vld [vmem:[#allocation2 + $0xd40] sm:$0xff]
    %v296 = vld [vmem:[#allocation2 + $0xd48] sm:$0xff]
    %v297 = vld [vmem:[#allocation2 + $0xdb0] sm:$0xff]
    %v298 = vld [vmem:[#allocation2 + $0xdb8] sm:$0xff]
    %v299 = vld [vmem:[#allocation2 + $0x30] sm:$0xff]
    %v300 = vld [vmem:[#allocation2 + $0x38] sm:$0xff]
    %v301 = vld [vmem:[#allocation2 + $0xa0] sm:$0xff]
    %v302 = vld [vmem:[#allocation2 + $0xa8] sm:$0xff]
    %v303 = vld [vmem:[#allocation2 + $0x110] sm:$0xff]
    %v304 = vld [vmem:[#allocation2 + $0x118] sm:$0xff]
    %v305 = vld [vmem:[#allocation2 + $0x180] sm:$0xff]
    %v306 = vld [vmem:[#allocation2 + $0x188] sm:$0xff]
    %v307 = vld [vmem:[#allocation2 + $0x1f0] sm:$0xff]
    %v308 = vld [vmem:[#allocation2 + $0x1f8] sm:$0xff]
    %v309 = vld [vmem:[#allocation2 + $0x260] sm:$0xff]
    %v310 = vld [vmem:[#allocation2 + $0x268] sm:$0xff]
    %v311 = vld [vmem:[#allocation2 + $0x2d0] sm:$0xff]
    %v312 = vld [vmem:[#allocation2 + $0x2d8] sm:$0xff]
    %v313 = vld [vmem:[#allocation2 + $0x340] sm:$0xff]
    %v314 = vld [vmem:[#allocation2 + $0x348] sm:$0xff]
    %v315 = vld [vmem:[#allocation2 + $0x3b0] sm:$0xff]
    %v316 = vld [vmem:[#allocation2 + $0x3b8] sm:$0xff]
    %v317 = vld [vmem:[#allocation2 + $0x420] sm:$0xff]
    %v318 = vld [vmem:[#allocation2 + $0x428] sm:$0xff]
    %v319 = vld [vmem:[#allocation2 + $0x490] sm:$0xff]
    %v320 = vld [vmem:[#allocation2 + $0x498] sm:$0xff]
    %v321 = vld [vmem:[#allocation2 + $0x500] sm:$0xff]
    %v322 = vld [vmem:[#allocation2 + $0x508] sm:$0xff]
    %v323 = vld [vmem:[#allocation2 + $0x570] sm:$0xff]
    %v324 = vld [vmem:[#allocation2 + $0x578] sm:$0xff]
    %v325 = vld [vmem:[#allocation2 + $0x5e0] sm:$0xff]
    %v326 = vld [vmem:[#allocation2 + $0x5e8] sm:$0xff]
    %v327 = vld [vmem:[#allocation2 + $0x650] sm:$0xff]
    %v328 = vld [vmem:[#allocation2 + $0x658] sm:$0xff]
    %v329 = vld [vmem:[#allocation2 + $0x6c0] sm:$0xff]
    %v330 = vld [vmem:[#allocation2 + $0x6c8] sm:$0xff]
    %v331 = vld [vmem:[#allocation2 + $0x730] sm:$0xff]
    %v332 = vld [vmem:[#allocation2 + $0x738] sm:$0xff]
    %v333 = vld [vmem:[#allocation2 + $0x7a0] sm:$0xff]
    %v334 = vld [vmem:[#allocation2 + $0x7a8] sm:$0xff]
    %v335 = vld [vmem:[#allocation2 + $0x810] sm:$0xff]
    %v336 = vld [vmem:[#allocation2 + $0x818] sm:$0xff]
    %v337 = vld [vmem:[#allocation2 + $0x880] sm:$0xff]
    %v338 = vld [vmem:[#allocation2 + $0x888] sm:$0xff]
    %v339 = vld [vmem:[#allocation2 + $0x8f0] sm:$0xff]
    %v340 = vld [vmem:[#allocation2 + $0x8f8] sm:$0xff]
    %v341 = vld [vmem:[#allocation2 + $0x960] sm:$0xff]
    %v342 = vld [vmem:[#allocation2 + $0x968] sm:$0xff]
    %v343 = vld [vmem:[#allocation2 + $0x9d0] sm:$0xff]
    %v344 = vld [vmem:[#allocation2 + $0x9d8] sm:$0xff]
    %v345 = vld [vmem:[#allocation2 + $0xa40] sm:$0xff]
    %v346 = vld [vmem:[#allocation2 + $0xa48] sm:$0xff]
    %v347 = vld [vmem:[#allocation2 + $0xab0] sm:$0xff]
    %v348 = vld [vmem:[#allocation2 + $0xab8] sm:$0xff]
    %v349 = vld [vmem:[#allocation2 + $0xb20] sm:$0xff]
    %v350 = vld [vmem:[#allocation2 + $0xb28] sm:$0xff]
    %v351 = vld [vmem:[#allocation2 + $0xb90] sm:$0xff]
    %v352 = vld [vmem:[#allocation2 + $0xb98] sm:$0xff]
    %v353 = vld [vmem:[#allocation2 + $0xc00] sm:$0xff]
    %v354 = vld [vmem:[#allocation2 + $0xc08] sm:$0xff]
    %v355 = vld [vmem:[#allocation2 + $0xc70] sm:$0xff]
    %v356 = vld [vmem:[#allocation2 + $0xc78] sm:$0xff]
    %v357 = vld [vmem:[#allocation2 + $0xce0] sm:$0xff]
    %v358 = vld [vmem:[#allocation2 + $0xce8] sm:$0xff]
    %v359 = vld [vmem:[#allocation2 + $0xd50] sm:$0xff]
    %v360 = vld [vmem:[#allocation2 + $0xd58] sm:$0xff]
    %v361 = vld [vmem:[#allocation2 + $0xdc0] sm:$0xff]
    %v362 = vld [vmem:[#allocation2 + $0xdc8] sm:$0xff]
    %v363 = vld [vmem:[#allocation2 + $0x40] sm:$0xff]
    %v364 = vld [vmem:[#allocation2 + $0x48] sm:$0xff]
    %v365 = vld [vmem:[#allocation2 + $0x50] sm:$0xff]
    %v366 = vld [vmem:[#allocation2 + $0x58] sm:$0xff]
    %v367 = vld [vmem:[#allocation2 + $0xb0] sm:$0xff]
    %v368 = vld [vmem:[#allocation2 + $0xb8] sm:$0xff]
    %v369 = vld [vmem:[#allocation2 + $0xc0] sm:$0xff]
    %v370 = vld [vmem:[#allocation2 + $0xc8] sm:$0xff]
    %v371 = vld [vmem:[#allocation2 + $0x120] sm:$0xff]
    %v372 = vld [vmem:[#allocation2 + $0x128] sm:$0xff]
    %v373 = vld [vmem:[#allocation2 + $0x130] sm:$0xff]
    %v374 = vld [vmem:[#allocation2 + $0x138] sm:$0xff]
    %v375 = vld [vmem:[#allocation2 + $0x190] sm:$0xff]
    %v376 = vld [vmem:[#allocation2 + $0x198] sm:$0xff]
    %v377 = vld [vmem:[#allocation2 + $0x1a0] sm:$0xff]
    %v378 = vld [vmem:[#allocation2 + $0x1a8] sm:$0xff]
    %v379 = vld [vmem:[#allocation2 + $0x200] sm:$0xff]
    %v380 = vld [vmem:[#allocation2 + $0x208] sm:$0xff]
    %v381 = vld [vmem:[#allocation2 + $0x210] sm:$0xff]
    %v382 = vld [vmem:[#allocation2 + $0x218] sm:$0xff]
    %v383 = vld [vmem:[#allocation2 + $0x270] sm:$0xff]
    %v384 = vld [vmem:[#allocation2 + $0x278] sm:$0xff]
    %v385 = vld [vmem:[#allocation2 + $0x280] sm:$0xff]
    %v386 = vld [vmem:[#allocation2 + $0x288] sm:$0xff]
    %v387 = vld [vmem:[#allocation2 + $0x2e0] sm:$0xff]
    %v388 = vld [vmem:[#allocation2 + $0x2e8] sm:$0xff]
    %v389 = vld [vmem:[#allocation2 + $0x2f0] sm:$0xff]
    %v390 = vld [vmem:[#allocation2 + $0x2f8] sm:$0xff]
    %v391 = vld [vmem:[#allocation2 + $0x350] sm:$0xff]
    %v392 = vld [vmem:[#allocation2 + $0x358] sm:$0xff]
    %v393 = vld [vmem:[#allocation2 + $0x360] sm:$0xff]
    %v394 = vld [vmem:[#allocation2 + $0x368] sm:$0xff]
    %v395 = vld [vmem:[#allocation2 + $0x3c0] sm:$0xff]
    %v396 = vld [vmem:[#allocation2 + $0x3c8] sm:$0xff]
    %v397 = vld [vmem:[#allocation2 + $0x3d0] sm:$0xff]
    %v398 = vld [vmem:[#allocation2 + $0x3d8] sm:$0xff]
    %v399 = vld [vmem:[#allocation2 + $0x430] sm:$0xff]
    %v400 = vld [vmem:[#allocation2 + $0x438] sm:$0xff]
    %v401 = vld [vmem:[#allocation2 + $0x440] sm:$0xff]
    %v402 = vld [vmem:[#allocation2 + $0x448] sm:$0xff]
    %v403 = vld [vmem:[#allocation2 + $0x4a0] sm:$0xff]
    %v404 = vld [vmem:[#allocation2 + $0x4a8] sm:$0xff]
    %v405 = vld [vmem:[#allocation2 + $0x4b0] sm:$0xff]
    %v406 = vld [vmem:[#allocation2 + $0x4b8] sm:$0xff]
    %v407 = vld [vmem:[#allocation2 + $0x510] sm:$0xff]
    %v408 = vld [vmem:[#allocation2 + $0x518] sm:$0xff]
    %v409 = vld [vmem:[#allocation2 + $0x520] sm:$0xff]
    %v410 = vld [vmem:[#allocation2 + $0x528] sm:$0xff]
    %v411 = vld [vmem:[#allocation2 + $0x580] sm:$0xff]
    %v412 = vld [vmem:[#allocation2 + $0x588] sm:$0xff]
    %v413 = vld [vmem:[#allocation2 + $0x590] sm:$0xff]
    %v414 = vld [vmem:[#allocation2 + $0x598] sm:$0xff]
    %v415 = vld [vmem:[#allocation2 + $0x5f0] sm:$0xff]
    %v416 = vld [vmem:[#allocation2 + $0x5f8] sm:$0xff]
    %v417 = vld [vmem:[#allocation2 + $0x600] sm:$0xff]
    %v418 = vld [vmem:[#allocation2 + $0x608] sm:$0xff]
    %v419 = vld [vmem:[#allocation2 + $0x660] sm:$0xff]
    %v420 = vld [vmem:[#allocation2 + $0x668] sm:$0xff]
    %v421 = vld [vmem:[#allocation2 + $0x670] sm:$0xff]
    %v422 = vld [vmem:[#allocation2 + $0x678] sm:$0xff]
    %v423 = vld [vmem:[#allocation2 + $0x6d0] sm:$0xff]
    %v424 = vld [vmem:[#allocation2 + $0x6d8] sm:$0xff]
    %v425 = vld [vmem:[#allocation2 + $0x6e0] sm:$0xff]
    %v426 = vld [vmem:[#allocation2 + $0x6e8] sm:$0xff]
    %v427 = vld [vmem:[#allocation2 + $0x740] sm:$0xff]
    %v428 = vld [vmem:[#allocation2 + $0x748] sm:$0xff]
    %v429 = vld [vmem:[#allocation2 + $0x750] sm:$0xff]
    %v430 = vld [vmem:[#allocation2 + $0x758] sm:$0xff]
    %v431 = vld [vmem:[#allocation2 + $0x7b0] sm:$0xff]
    %v432 = vld [vmem:[#allocation2 + $0x7b8] sm:$0xff]
    %v433 = vld [vmem:[#allocation2 + $0x7c0] sm:$0xff]
    %v434 = vld [vmem:[#allocation2 + $0x7c8] sm:$0xff]
    %v435 = vld [vmem:[#allocation2 + $0x820] sm:$0xff]
    %v436 = vld [vmem:[#allocation2 + $0x828] sm:$0xff]
    %v437 = vld [vmem:[#allocation2 + $0x830] sm:$0xff]
    %v438 = vld [vmem:[#allocation2 + $0x838] sm:$0xff]
    %v439 = vld [vmem:[#allocation2 + $0x890] sm:$0xff]
    %v440 = vld [vmem:[#allocation2 + $0x898] sm:$0xff]
    %v441 = vld [vmem:[#allocation2 + $0x8a0] sm:$0xff]
    %v442 = vld [vmem:[#allocation2 + $0x8a8] sm:$0xff]
    %v443 = vld [vmem:[#allocation2 + $0x900] sm:$0xff]
    %v444 = vld [vmem:[#allocation2 + $0x908] sm:$0xff]
    %v445 = vld [vmem:[#allocation2 + $0x910] sm:$0xff]
    %v446 = vld [vmem:[#allocation2 + $0x918] sm:$0xff]
    %v447 = vld [vmem:[#allocation2 + $0x970] sm:$0xff]
    %v448 = vld [vmem:[#allocation2 + $0x978] sm:$0xff]
    %v449 = vld [vmem:[#allocation2 + $0x980] sm:$0xff]
    %v450 = vld [vmem:[#allocation2 + $0x988] sm:$0xff]
    %v451 = vld [vmem:[#allocation2 + $0x9e0] sm:$0xff]
    %v452 = vld [vmem:[#allocation2 + $0x9e8] sm:$0xff]
    %v453 = vld [vmem:[#allocation2 + $0x9f0] sm:$0xff]
    %v454 = vld [vmem:[#allocation2 + $0x9f8] sm:$0xff]
    %v455 = vld [vmem:[#allocation2 + $0xa50] sm:$0xff]
    %v456 = vld [vmem:[#allocation2 + $0xa58] sm:$0xff]
    %v457 = vld [vmem:[#allocation2 + $0xa60] sm:$0xff]
    %v458 = vld [vmem:[#allocation2 + $0xa68] sm:$0xff]
    %v459 = vld [vmem:[#allocation2 + $0xac0] sm:$0xff]
    %v460 = vld [vmem:[#allocation2 + $0xac8] sm:$0xff]
    %v461 = vld [vmem:[#allocation2 + $0xad0] sm:$0xff]
    %v462 = vld [vmem:[#allocation2 + $0xad8] sm:$0xff]
    %v463 = vld [vmem:[#allocation2 + $0xb30] sm:$0xff]
    %v464 = vld [vmem:[#allocation2 + $0xb38] sm:$0xff]
    %v465 = vld [vmem:[#allocation2 + $0xb40] sm:$0xff]
    %v466 = vld [vmem:[#allocation2 + $0xb48] sm:$0xff]
    %v467 = vld [vmem:[#allocation2 + $0xba0] sm:$0xff]
    %v468 = vld [vmem:[#allocation2 + $0xba8] sm:$0xff]
    %v469 = vld [vmem:[#allocation2 + $0xbb0] sm:$0xff]
    %v470 = vld [vmem:[#allocation2 + $0xbb8] sm:$0xff]
    %v471 = vld [vmem:[#allocation2 + $0xc10] sm:$0xff]
    %v472 = vld [vmem:[#allocation2 + $0xc18] sm:$0xff]
    %v473 = vld [vmem:[#allocation2 + $0xc20] sm:$0xff]
    %v474 = vld [vmem:[#allocation2 + $0xc28] sm:$0xff]
    %v475 = vld [vmem:[#allocation2 + $0xc80] sm:$0xff]
    %v476 = vld [vmem:[#allocation2 + $0xc88] sm:$0xff]
    %v477 = vld [vmem:[#allocation2 + $0xc90] sm:$0xff]
    %v478 = vld [vmem:[#allocation2 + $0xc98] sm:$0xff]
    %v479 = vld [vmem:[#allocation2 + $0xcf0] sm:$0xff]
    %v480 = vld [vmem:[#allocation2 + $0xcf8] sm:$0xff]
    %v481 = vld [vmem:[#allocation2 + $0xd00] sm:$0xff]
    %v482 = vld [vmem:[#allocation2 + $0xd08] sm:$0xff]
    %v483 = vld [vmem:[#allocation2 + $0xd60] sm:$0xff]
    %v484 = vld [vmem:[#allocation2 + $0xd68] sm:$0xff]
    %v485 = vld [vmem:[#allocation2 + $0xd70] sm:$0xff]
    %v486 = vld [vmem:[#allocation2 + $0xd78] sm:$0xff]
    %v487 = vld [vmem:[#allocation2 + $0xdd0] sm:$0xff]
    %v488 = vld [vmem:[#allocation2 + $0xdd8] sm:$0xff]
    %v489 = vld [vmem:[#allocation2 + $0xde0] sm:$0xff]
    %v490 = vld [vmem:[#allocation2 + $0xde8] sm:$0xff]
    %v491 = vld [vmem:[#allocation2 + $0x60] sm:$0xff]
    %v492 = vld [vmem:[#allocation2 + $0x68] sm:$0xff]
    %v493 = vld [vmem:[#allocation2 + $0xd0] sm:$0xff]
    %v494 = vld [vmem:[#allocation2 + $0xd8] sm:$0xff]
    %v495 = vld [vmem:[#allocation2 + $0x140] sm:$0xff]
    %v496 = vld [vmem:[#allocation2 + $0x148] sm:$0xff]
    %v497 = vld [vmem:[#allocation2 + $0x1b0] sm:$0xff]
    %v498 = vld [vmem:[#allocation2 + $0x1b8] sm:$0xff]
    %v499 = vld [vmem:[#allocation2 + $0x220] sm:$0xff]
    %v500 = vld [vmem:[#allocation2 + $0x228] sm:$0xff]
    %v501 = vld [vmem:[#allocation2 + $0x290] sm:$0xff]
    %v502 = vld [vmem:[#allocation2 + $0x298] sm:$0xff]
    %v503 = vld [vmem:[#allocation2 + $0x300] sm:$0xff]
    %v504 = vld [vmem:[#allocation2 + $0x308] sm:$0xff]
    %v505 = vld [vmem:[#allocation2 + $0x370] sm:$0xff]
    %v506 = vld [vmem:[#allocation2 + $0x378] sm:$0xff]
    %v507 = vld [vmem:[#allocation2 + $0x3e0] sm:$0xff]
    %v508 = vld [vmem:[#allocation2 + $0x3e8] sm:$0xff]
    %v509 = vld [vmem:[#allocation2 + $0x450] sm:$0xff]
    %v510 = vld [vmem:[#allocation2 + $0x458] sm:$0xff]
    %v511 = vld [vmem:[#allocation2 + $0x4c0] sm:$0xff]
    %v512 = vld [vmem:[#allocation2 + $0x4c8] sm:$0xff]
    %v513 = vld [vmem:[#allocation2 + $0x530] sm:$0xff]
    %v514 = vld [vmem:[#allocation2 + $0x538] sm:$0xff]
    %v515 = vld [vmem:[#allocation2 + $0x5a0] sm:$0xff]
    %v516 = vld [vmem:[#allocation2 + $0x5a8] sm:$0xff]
    %v517 = vld [vmem:[#allocation2 + $0x610] sm:$0xff]
    %v518 = vld [vmem:[#allocation2 + $0x618] sm:$0xff]
    %v519 = vld [vmem:[#allocation2 + $0x680] sm:$0xff]
    %v520 = vld [vmem:[#allocation2 + $0x688] sm:$0xff]
    %v521 = vld [vmem:[#allocation2 + $0x6f0] sm:$0xff]
    %v522 = vld [vmem:[#allocation2 + $0x6f8] sm:$0xff]
    %v523 = vld [vmem:[#allocation2 + $0x760] sm:$0xff]
    %v524 = vld [vmem:[#allocation2 + $0x768] sm:$0xff]
    %v525 = vld [vmem:[#allocation2 + $0x7d0] sm:$0xff]
    %v526 = vld [vmem:[#allocation2 + $0x7d8] sm:$0xff]
    %v527 = vld [vmem:[#allocation2 + $0x840] sm:$0xff]
    %v528 = vld [vmem:[#allocation2 + $0x848] sm:$0xff]
    %v529 = vld [vmem:[#allocation2 + $0x8b0] sm:$0xff]
    %v530 = vld [vmem:[#allocation2 + $0x8b8] sm:$0xff]
    %v531 = vld [vmem:[#allocation2 + $0x920] sm:$0xff]
    %v532 = vld [vmem:[#allocation2 + $0x928] sm:$0xff]
    %v533 = vld [vmem:[#allocation2 + $0x990] sm:$0xff]
    %v534 = vld [vmem:[#allocation2 + $0x998] sm:$0xff]
    %v535 = vld [vmem:[#allocation2 + $0xa00] sm:$0xff]
    %v536 = vld [vmem:[#allocation2 + $0xa08] sm:$0xff]
    %v537 = vld [vmem:[#allocation2 + $0xa70] sm:$0xff]
    %v538 = vld [vmem:[#allocation2 + $0xa78] sm:$0xff]
    %v539 = vld [vmem:[#allocation2 + $0xae0] sm:$0xff]
    %v540 = vld [vmem:[#allocation2 + $0xae8] sm:$0xff]
    %v541 = vld [vmem:[#allocation2 + $0xb50] sm:$0xff]
    %v542 = vld [vmem:[#allocation2 + $0xb58] sm:$0xff]
    %v543 = vld [vmem:[#allocation2 + $0xbc0] sm:$0xff]
    %v544 = vld [vmem:[#allocation2 + $0xbc8] sm:$0xff]
    %v545 = vld [vmem:[#allocation2 + $0xc30] sm:$0xff]
    %v546 = vld [vmem:[#allocation2 + $0xc38] sm:$0xff]
    %v547 = vld [vmem:[#allocation2 + $0xca0] sm:$0xff]
    %v548 = vld [vmem:[#allocation2 + $0xca8] sm:$0xff]
    %v549 = vld [vmem:[#allocation2 + $0xd10] sm:$0xff]
    %v550 = vld [vmem:[#allocation2 + $0xd18] sm:$0xff]
    %v551 = vld [vmem:[#allocation2 + $0xd80] sm:$0xff]
    %v552 = vld [vmem:[#allocation2 + $0xd88] sm:$0xff]
    %v553 = vld [vmem:[#allocation2 + $0xdf0] sm:$0xff]
    %v554 = vld [vmem:[#allocation2 + $0xdf8] sm:$0xff]
    %v555 = vld [vmem:[#allocation4] sm:$0xff]
    %v556 = vld [vmem:[#allocation4 + $0x8] sm:$0xff]
    %v557 = vld [vmem:[#allocation4 + $0x10] sm:$0xff]
    %v558 = vld [vmem:[#allocation4 + $0x18] sm:$0xff]
    %v559 = vld [vmem:[#allocation4 + $0x20] sm:$0xff]
    %v560 = vld [vmem:[#allocation4 + $0x28] sm:$0xff]
    %v561 = vld [vmem:[#allocation4 + $0x30] sm:$0xff]
    %v562 = vld [vmem:[#allocation4 + $0x38] sm:$0xff]
    %v563 = vld [vmem:[#allocation4 + $0x40] sm:$0xff]
    %v564 = vld [vmem:[#allocation4 + $0x48] sm:$0xff]
    %v565 = vld [vmem:[#allocation4 + $0x50] sm:$0xff]
    %v566 = vld [vmem:[#allocation4 + $0x58] sm:$0xff]
    %v567 = vld [vmem:[#allocation4 + $0x60] sm:$0xff]
    %v568 = vld [vmem:[#allocation4 + $0x68] sm:$0xff]
    %v569 = vld [vmem:[#allocation4 + $0x70] sm:$0xff]
    %v570 = vld [vmem:[#allocation4 + $0x78] sm:$0xff]
    %v571 = vld [vmem:[#allocation4 + $0x80] sm:$0xff]
    %v572 = vld [vmem:[#allocation4 + $0x88] sm:$0xff]
    %v573 = vld [vmem:[#allocation4 + $0x90] sm:$0xff]
    %v574 = vld [vmem:[#allocation4 + $0x98] sm:$0xff]
    %v575 = vld [vmem:[#allocation4 + $0xa0] sm:$0xff]
    %v576 = vld [vmem:[#allocation4 + $0xa8] sm:$0xff]
    %v577 = vld [vmem:[#allocation4 + $0xb0] sm:$0xff]
    %v578 = vld [vmem:[#allocation4 + $0xb8] sm:$0xff]
    %v579 = vld [vmem:[#allocation4 + $0xc0] sm:$0xff]
    %v580 = vld [vmem:[#allocation4 + $0xc8] sm:$0xff]
    %v581 = vld [vmem:[#allocation4 + $0xd0] sm:$0xff]
    %v582 = vld [vmem:[#allocation4 + $0xd8] sm:$0xff]
    %v583 = vld [vmem:[#allocation4 + $0xe0] sm:$0xff]
    %v584 = vld [vmem:[#allocation4 + $0xe8] sm:$0xff]
    %v585 = vld [vmem:[#allocation4 + $0xf0] sm:$0xff]
    %v586 = vld [vmem:[#allocation4 + $0xf8] sm:$0xff]
    %v587 = vld [vmem:[#allocation4 + $0x100] sm:$0xff]
    %v588 = vld [vmem:[#allocation4 + $0x108] sm:$0xff]
    %v589 = vld [vmem:[#allocation4 + $0x110] sm:$0xff]
    %v590 = vld [vmem:[#allocation4 + $0x118] sm:$0xff]
    %v591 = vld [vmem:[#allocation4 + $0x120] sm:$0xff]
    %v592 = vld [vmem:[#allocation4 + $0x128] sm:$0xff]
    %v593 = vld [vmem:[#allocation4 + $0x130] sm:$0xff]
    %v594 = vld [vmem:[#allocation4 + $0x138] sm:$0xff]
    %v595 = vld [vmem:[#allocation4 + $0x140] sm:$0xff]
    %v596 = vld [vmem:[#allocation4 + $0x148] sm:$0xff]
    %v597 = vld [vmem:[#allocation4 + $0x150] sm:$0xff]
    %v598 = vld [vmem:[#allocation4 + $0x158] sm:$0xff]
    %v599 = vld [vmem:[#allocation4 + $0x160] sm:$0xff]
    %v600 = vld [vmem:[#allocation4 + $0x168] sm:$0xff]
    %v601 = vld [vmem:[#allocation4 + $0x170] sm:$0xff]
    %v602 = vld [vmem:[#allocation4 + $0x178] sm:$0xff]
    %v603 = vld [vmem:[#allocation4 + $0x180] sm:$0xff]
    %v604 = vld [vmem:[#allocation4 + $0x188] sm:$0xff]
    %v605 = vld [vmem:[#allocation4 + $0x190] sm:$0xff]
    %v606 = vld [vmem:[#allocation4 + $0x198] sm:$0xff]
    %v607 = vld [vmem:[#allocation4 + $0x1a0] sm:$0xff]
    %v608 = vld [vmem:[#allocation4 + $0x1a8] sm:$0xff]
    %v609 = vld [vmem:[#allocation4 + $0x1b0] sm:$0xff]
    %v610 = vld [vmem:[#allocation4 + $0x1b8] sm:$0xff]
    %v611 = vld [vmem:[#allocation4 + $0x1c0] sm:$0xff]
    %v612 = vld [vmem:[#allocation4 + $0x1c8] sm:$0xff]
    %v613 = vld [vmem:[#allocation4 + $0x1d0] sm:$0xff]
    %v614 = vld [vmem:[#allocation4 + $0x1d8] sm:$0xff]
    %v615 = vld [vmem:[#allocation4 + $0x1e0] sm:$0xff]
    %v616 = vld [vmem:[#allocation4 + $0x1e8] sm:$0xff]
    %v617 = vld [vmem:[#allocation4 + $0x1f0] sm:$0xff]
    %v618 = vld [vmem:[#allocation4 + $0x1f8] sm:$0xff]
    %v619 = vld [vmem:[#allocation4 + $0x200] sm:$0xff]
    %v620 = vld [vmem:[#allocation4 + $0x208] sm:$0xff]
    %v621 = vld [vmem:[#allocation4 + $0x210] sm:$0xff]
    %v622 = vld [vmem:[#allocation4 + $0x218] sm:$0xff]
    %v623 = vld [vmem:[#allocation4 + $0x220] sm:$0xff]
    %v624 = vld [vmem:[#allocation4 + $0x228] sm:$0xff]
    %v625 = vld [vmem:[#allocation4 + $0x230] sm:$0xff]
    %v626 = vld [vmem:[#allocation4 + $0x238] sm:$0xff]
    %v627 = vld [vmem:[#allocation4 + $0x240] sm:$0xff]
    %v628 = vld [vmem:[#allocation4 + $0x248] sm:$0xff]
    %v629 = vld [vmem:[#allocation4 + $0x250] sm:$0xff]
    %v630 = vld [vmem:[#allocation4 + $0x258] sm:$0xff]
    %v631 = vld [vmem:[#allocation4 + $0x260] sm:$0xff]
    %v632 = vld [vmem:[#allocation4 + $0x268] sm:$0xff]
    %v633 = vld [vmem:[#allocation4 + $0x270] sm:$0xff]
    %v634 = vld [vmem:[#allocation4 + $0x278] sm:$0xff]
    %v635 = vld [vmem:[#allocation4 + $0x280] sm:$0xff]
    %v636 = vld [vmem:[#allocation4 + $0x288] sm:$0xff]
    %v637 = vld [vmem:[#allocation4 + $0x290] sm:$0xff]
    %v638 = vld [vmem:[#allocation4 + $0x298] sm:$0xff]
    %v639 = vld [vmem:[#allocation4 + $0x2a0] sm:$0xff]
    %v640 = vld [vmem:[#allocation4 + $0x2a8] sm:$0xff]
    %v641 = vld [vmem:[#allocation4 + $0x2b0] sm:$0xff]
    %v642 = vld [vmem:[#allocation4 + $0x2b8] sm:$0xff]
    %v643 = vld [vmem:[#allocation4 + $0x2c0] sm:$0xff]
    %v644 = vld [vmem:[#allocation4 + $0x2c8] sm:$0xff]
    %v645 = vld [vmem:[#allocation4 + $0x2d0] sm:$0xff]
    %v646 = vld [vmem:[#allocation4 + $0x2d8] sm:$0xff]
    %v647 = vld [vmem:[#allocation4 + $0x2e0] sm:$0xff]
    %v648 = vld [vmem:[#allocation4 + $0x2e8] sm:$0xff]
    %v649 = vld [vmem:[#allocation4 + $0x2f0] sm:$0xff]
    %v650 = vld [vmem:[#allocation4 + $0x2f8] sm:$0xff]
    %v651 = vld [vmem:[#allocation4 + $0x300] sm:$0xff]
    %v652 = vld [vmem:[#allocation4 + $0x308] sm:$0xff]
    %v653 = vld [vmem:[#allocation4 + $0x310] sm:$0xff]
    %v654 = vld [vmem:[#allocation4 + $0x318] sm:$0xff]
    %v655 = vld [vmem:[#allocation4 + $0x320] sm:$0xff]
    %v656 = vld [vmem:[#allocation4 + $0x328] sm:$0xff]
    %v657 = vld [vmem:[#allocation4 + $0x330] sm:$0xff]
    %v658 = vld [vmem:[#allocation4 + $0x338] sm:$0xff]
    %v659 = vld [vmem:[#allocation4 + $0x340] sm:$0xff]
    %v660 = vld [vmem:[#allocation4 + $0x348] sm:$0xff]
    %v661 = vld [vmem:[#allocation4 + $0x350] sm:$0xff]
    %v662 = vld [vmem:[#allocation4 + $0x358] sm:$0xff]
    %v663 = vld [vmem:[#allocation4 + $0x360] sm:$0xff]
    %v664 = vld [vmem:[#allocation4 + $0x368] sm:$0xff]
    %v665 = vld [vmem:[#allocation4 + $0x370] sm:$0xff]
    %v666 = vld [vmem:[#allocation4 + $0x378] sm:$0xff]
    %v667 = vld [vmem:[#allocation4 + $0x380] sm:$0xff]
    %v668 = vld [vmem:[#allocation4 + $0x388] sm:$0xff]
    %v669 = vld [vmem:[#allocation4 + $0x390] sm:$0xff]
    %v670 = vld [vmem:[#allocation4 + $0x398] sm:$0xff]
    %v671 = vld [vmem:[#allocation4 + $0x3a0] sm:$0xff]
    %v672 = vld [vmem:[#allocation4 + $0x3a8] sm:$0xff]
    %v673 = vld [vmem:[#allocation4 + $0x3b0] sm:$0xff]
    %v674 = vld [vmem:[#allocation4 + $0x3b8] sm:$0xff]
    %v675 = vld [vmem:[#allocation4 + $0x3c0] sm:$0xff]
    %v676 = vld [vmem:[#allocation4 + $0x3c8] sm:$0xff]
    %v677 = vld [vmem:[#allocation4 + $0x3d0] sm:$0xff]
    %v678 = vld [vmem:[#allocation4 + $0x3d8] sm:$0xff]
    %v679 = vld [vmem:[#allocation4 + $0x3e0] sm:$0xff]
    %v680 = vld [vmem:[#allocation4 + $0x3e8] sm:$0xff]
    %v681 = vld [vmem:[#allocation4 + $0x3f0] sm:$0xff]
    %v682 = vld [vmem:[#allocation4 + $0x3f8] sm:$0xff]
    %v683 = vld [vmem:[#allocation6] sm:$0x3]
    %v684 = vld [vmem:[#allocation6 + $0x2] sm:$0x3]
    %v685 = vld [vmem:[#allocation6 + $0x4] sm:$0x3]
    %v686 = vld [vmem:[#allocation6 + $0x6] sm:$0xf]
    %v687 = vld [vmem:[#allocation6 + $0xa] sm:$0x3]
    %v688 = vld [vmem:[#allocation6 + $0xc] sm:$0x3]
    %v689 = vld [vmem:[#allocation6 + $0xe] sm:$0x3]
    %v690 = vld [vmem:[#allocation6 + $0x10] sm:$0x3]
    %v691 = vld [vmem:[#allocation6 + $0x12] sm:$0x3]
    %v692 = vld [vmem:[#allocation6 + $0x14] sm:$0x3]
    %v694 = vlaneseq
    %v695 = vshrl.u32 %v694, 7
    %v696 = vsub.s32 0, %v695
    %v697 = vrot.slane %v683, %v696
    %v698 = vlaneseq
    %v699 = vshrl.u32 %v698, 7
    %v700 = vsub.s32 1, %v699
    %v701 = vrot.slane %v683, %v700
    %704 = vmatprep.subr.mxu0 %v138
    %705 = vmatpush1.msra.mxu0 %v137
    %706 = vmatprep.subr.mxu0 %v136
    %707 = vmatpush1.msra.mxu0 %v135
    %708 = vmatprep.subr.mxu0 %v134
    %709 = vmatpush1.msra.mxu0 %v133
    %710 = vmatprep.subr.mxu0 %v132
    %711 = vmatpush1.msra.mxu0 %v131
    %712 = vmatprep.subr.mxu0 %v130
    %713 = vmatpush1.msra.mxu0 %v129
    %714 = vmatprep.subr.mxu0 %v128
    %715 = vmatpush1.msra.mxu0 %v127
    %716 = vmatprep.subr.mxu0 %v126
    %717 = vmatpush1.msra.mxu0 %v125
    %718 = vmatprep.subr.mxu0 %v124
    %719 = vmatpush1.msra.mxu0 %v123
    %720 = vmatprep.subr.mxu0 %v122
    %721 = vmatpush1.msra.mxu0 %v121
    %722 = vmatprep.subr.mxu0 %v120
    %723 = vmatpush1.msra.mxu0 %v119
    %724 = vmatprep.subr.mxu0 %v118
    %725 = vmatpush1.msra.mxu0 %v117
    %726 = vmatprep.subr.mxu0 %v116
    %727 = vmatpush1.msra.mxu0 %v115
    %728 = vmatprep.subr.mxu0 %v114
    %729 = vmatpush1.msra.mxu0 %v113
    %730 = vmatprep.subr.mxu0 %v112
    %731 = vmatpush1.msra.mxu0 %v111
    %732 = vmatprep.subr.mxu0 %v110
    %733 = vmatpush1.msra.mxu0 %v109
    %734 = vmatprep.subr.mxu0 %v108
    %735 = vmatpush1.msra.mxu0 %v107
    %736 = vmatprep.subr.mxu0 %v170
    %737 = vmatpush2.msra.mxu0 %v169
    %738 = vmatprep.subr.mxu0 %v168
    %739 = vmatpush2.msra.mxu0 %v167
    %740 = vmatprep.subr.mxu0 %v166
    %741 = vmatpush2.msra.mxu0 %v165
    %742 = vmatprep.subr.mxu0 %v164
    %743 = vmatpush2.msra.mxu0 %v163
    %744 = vmatprep.subr.mxu0 %v162
    %745 = vmatpush2.msra.mxu0 %v161
    %746 = vmatprep.subr.mxu0 %v160
    %747 = vmatpush2.msra.mxu0 %v159
    %748 = vmatprep.subr.mxu0 %v158
    %749 = vmatpush2.msra.mxu0 %v157
    %750 = vmatprep.subr.mxu0 %v156
    %751 = vmatpush2.msra.mxu0 %v155
    %752 = vmatprep.subr.mxu0 %v154
    %753 = vmatpush2.msra.mxu0 %v153
    %754 = vmatprep.subr.mxu0 %v152
    %755 = vmatpush2.msra.mxu0 %v151
    %756 = vmatprep.subr.mxu0 %v150
    %757 = vmatpush2.msra.mxu0 %v149
    %758 = vmatprep.subr.mxu0 %v148
    %759 = vmatpush2.msra.mxu0 %v147
    %760 = vmatprep.subr.mxu0 %v146
    %761 = vmatpush2.msra.mxu0 %v145
    %762 = vmatprep.subr.mxu0 %v144
    %763 = vmatpush2.msra.mxu0 %v143
    %764 = vmatprep.subr.mxu0 %v142
    %765 = vmatpush2.msra.mxu0 %v141
    %766 = vmatprep.subr.mxu0 %v140
    %767 = vmatpush2.msra.mxu0 %v139
    %768 = vmatprep.mubr.f32.mxu0 %v66
    %769 = vmatmul.mubr.f32.gmra.mxu0 %v65
    %v770 = vpop.f32.mrf.mxu0
    %v771 = vadd.f32 %v697, %v770
    %v772 = vpop.f32.mrf.mxu0
    %v773 = vadd.f32 %v701, %v772
    %774 = vdwg.mxu0
    %775 = vmatprep.subr.mxu0 0.0
    %776 = vmatpush1.msra.mxu0 %v90
    %777 = vmatprep.subr.mxu0 0.0
    %778 = vmatpush1.msra.mxu0 %v89
    %779 = vmatprep.subr.mxu0 0.0
    %780 = vmatpush1.msra.mxu0 %v88
    %781 = vmatprep.subr.mxu0 0.0
    %782 = vmatpush1.msra.mxu0 %v87
    %783 = vmatprep.subr.mxu0 0.0
    %784 = vmatpush1.msra.mxu0 %v86
    %785 = vmatprep.subr.mxu0 0.0
    %786 = vmatpush1.msra.mxu0 %v85
    %787 = vmatprep.subr.mxu0 0.0
    %788 = vmatpush1.msra.mxu0 %v84
    %789 = vmatprep.subr.mxu0 0.0
    %790 = vmatpush1.msra.mxu0 %v83
    %791 = vmatprep.subr.mxu0 0.0
    %792 = vmatpush1.msra.mxu0 %v82
    %793 = vmatprep.subr.mxu0 0.0
    %794 = vmatpush1.msra.mxu0 %v81
    %795 = vmatprep.subr.mxu0 0.0
    %796 = vmatpush1.msra.mxu0 %v80
    %797 = vmatprep.subr.mxu0 0.0
    %798 = vmatpush1.msra.mxu0 %v79
    %799 = vmatprep.subr.mxu0 0.0
    %800 = vmatpush1.msra.mxu0 %v78
    %801 = vmatprep.subr.mxu0 0.0
    %802 = vmatpush1.msra.mxu0 %v77
    %803 = vmatprep.subr.mxu0 0.0
    %804 = vmatpush1.msra.mxu0 %v76
    %805 = vmatprep.subr.mxu0 0.0
    %806 = vmatpush1.msra.mxu0 %v75
    %807 = vmatprep.subr.mxu0 0.0
    %808 = vmatpush2.msra.mxu0 %v106
    %809 = vmatprep.subr.mxu0 0.0
    %810 = vmatpush2.msra.mxu0 %v105
    %811 = vmatprep.subr.mxu0 0.0
    %812 = vmatpush2.msra.mxu0 %v104
    %813 = vmatprep.subr.mxu0 0.0
    %814 = vmatpush2.msra.mxu0 %v103
    %815 = vmatprep.subr.mxu0 0.0
    %816 = vmatpush2.msra.mxu0 %v102
    %817 = vmatprep.subr.mxu0 0.0
    %818 = vmatpush2.msra.mxu0 %v101
    %819 = vmatprep.subr.mxu0 0.0
    %820 = vmatpush2.msra.mxu0 %v100
    %821 = vmatprep.subr.mxu0 0.0
    %822 = vmatpush2.msra.mxu0 %v99
    %823 = vmatprep.subr.mxu0 0.0
    %824 = vmatpush2.msra.mxu0 %v98
    %825 = vmatprep.subr.mxu0 0.0
    %826 = vmatpush2.msra.mxu0 %v97
    %827 = vmatprep.subr.mxu0 0.0
    %828 = vmatpush2.msra.mxu0 %v96
    %829 = vmatprep.subr.mxu0 0.0
    %830 = vmatpush2.msra.mxu0 %v95
    %831 = vmatprep.subr.mxu0 0.0
    %832 = vmatpush2.msra.mxu0 %v94
    %833 = vmatprep.subr.mxu0 0.0
    %834 = vmatpush2.msra.mxu0 %v93
    %835 = vmatprep.subr.mxu0 0.0
    %836 = vmatpush2.msra.mxu0 %v92
    %837 = vmatprep.subr.mxu0 0.0
    %838 = vmatpush2.msra.mxu0 %v91
    %839 = vmatprep.mubr.f32.mxu0 %v172
    %840 = vmatmul.mubr.f32.gmra.mxu0 %v171
    %v841 = vpop.f32.mrf.mxu0
    %v842 = vadd.f32 0.0, %v841
    %v843 = vpop.f32.mrf.mxu0
    %844 = vmatprep.mubr.f32.mxu0 %v174
    %845 = vmatmul.mubr.f32.gmra.mxu0 %v173
    %v846 = vpop.f32.mrf.mxu0
    %v847 = vadd.f32 0.0, %v846
    %v848 = vpop.f32.mrf.mxu0
    %849 = vmatprep.mubr.f32.mxu0 %v176
    %850 = vmatmul.mubr.f32.gmra.mxu0 %v175
    %v851 = vpop.f32.mrf.mxu0
    %v852 = vadd.f32 0.0, %v851
    %v853 = vpop.f32.mrf.mxu0
    %854 = vmatprep.mubr.f32.mxu0 %v178
    %855 = vmatmul.mubr.f32.gmra.mxu0 %v177
    %v856 = vpop.f32.mrf.mxu0
    %v857 = vadd.f32 0.0, %v856
    %v858 = vpop.f32.mrf.mxu0
    %859 = vmatprep.mubr.f32.mxu0 %v180
    %860 = vmatmul.mubr.f32.gmra.mxu0 %v179
    %v861 = vpop.f32.mrf.mxu0
    %v862 = vadd.f32 0.0, %v861
    %v863 = vpop.f32.mrf.mxu0
    %864 = vmatprep.mubr.f32.mxu0 %v182
    %865 = vmatmul.mubr.f32.gmra.mxu0 %v181
    %v866 = vpop.f32.mrf.mxu0
    %v867 = vadd.f32 0.0, %v866
    %v868 = vpop.f32.mrf.mxu0
    %869 = vmatprep.mubr.f32.mxu0 %v184
    %870 = vmatmul.mubr.f32.gmra.mxu0 %v183
    %v871 = vpop.f32.mrf.mxu0
    %v872 = vadd.f32 0.0, %v871
    %v873 = vpop.f32.mrf.mxu0
    %874 = vmatprep.mubr.f32.mxu0 %v186
    %875 = vmatmul.mubr.f32.gmra.mxu0 %v185
    %v876 = vpop.f32.mrf.mxu0
    %v877 = vadd.f32 0.0, %v876
    %v878 = vpop.f32.mrf.mxu0
    %879 = vmatprep.mubr.f32.mxu0 %v188
    %880 = vmatmul.mubr.f32.gmra.mxu0 %v187
    %v881 = vpop.f32.mrf.mxu0
    %v882 = vadd.f32 0.0, %v881
    %v883 = vpop.f32.mrf.mxu0
    %884 = vmatprep.mubr.f32.mxu0 %v190
    %885 = vmatmul.mubr.f32.gmra.mxu0 %v189
    %v886 = vpop.f32.mrf.mxu0
    %v887 = vadd.f32 0.0, %v886
    %v888 = vpop.f32.mrf.mxu0
    %889 = vmatprep.mubr.f32.mxu0 %v192
    %890 = vmatmul.mubr.f32.gmra.mxu0 %v191
    %v891 = vpop.f32.mrf.mxu0
    %v892 = vadd.f32 0.0, %v891
    %v893 = vpop.f32.mrf.mxu0
    %894 = vmatprep.mubr.f32.mxu0 %v194
    %895 = vmatmul.mubr.f32.gmra.mxu0 %v193
    %v896 = vpop.f32.mrf.mxu0
    %v897 = vadd.f32 0.0, %v896
    %v898 = vpop.f32.mrf.mxu0
    %899 = vmatprep.mubr.f32.mxu0 %v196
    %900 = vmatmul.mubr.f32.gmra.mxu0 %v195
    %v901 = vpop.f32.mrf.mxu0
    %v902 = vadd.f32 0.0, %v901
    %v903 = vpop.f32.mrf.mxu0
    %904 = vmatprep.mubr.f32.mxu0 %v198
    %905 = vmatmul.mubr.f32.gmra.mxu0 %v197
    %v906 = vpop.f32.mrf.mxu0
    %v907 = vadd.f32 0.0, %v906
    %v908 = vpop.f32.mrf.mxu0
    %909 = vmatprep.mubr.f32.mxu0 %v200
    %910 = vmatmul.mubr.f32.gmra.mxu0 %v199
    %v911 = vpop.f32.mrf.mxu0
    %v912 = vadd.f32 0.0, %v911
    %v913 = vpop.f32.mrf.mxu0
    %914 = vmatprep.mubr.f32.mxu0 %v202
    %915 = vmatmul.mubr.f32.gmra.mxu0 %v201
    %v916 = vpop.f32.mrf.mxu0
    %v917 = vadd.f32 0.0, %v916
    %v918 = vpop.f32.mrf.mxu0
    %919 = vmatprep.mubr.f32.mxu0 %v204
    %920 = vmatmul.mubr.f32.gmra.mxu0 %v203
    %v921 = vpop.f32.mrf.mxu0
    %v922 = vadd.f32 0.0, %v921
    %v923 = vpop.f32.mrf.mxu0
    %924 = vmatprep.mubr.f32.mxu0 %v206
    %925 = vmatmul.mubr.f32.gmra.mxu0 %v205
    %v926 = vpop.f32.mrf.mxu0
    %v927 = vadd.f32 0.0, %v926
    %v928 = vpop.f32.mrf.mxu0
    %929 = vmatprep.mubr.f32.mxu0 %v208
    %930 = vmatmul.mubr.f32.gmra.mxu0 %v207
    %v931 = vpop.f32.mrf.mxu0
    %v932 = vadd.f32 0.0, %v931
    %v933 = vpop.f32.mrf.mxu0
    %934 = vmatprep.mubr.f32.mxu0 %v210
    %935 = vmatmul.mubr.f32.gmra.mxu0 %v209
    %v936 = vpop.f32.mrf.mxu0
    %v937 = vadd.f32 0.0, %v936
    %v938 = vpop.f32.mrf.mxu0
    %939 = vmatprep.mubr.f32.mxu0 %v212
    %940 = vmatmul.mubr.f32.gmra.mxu0 %v211
    %v941 = vpop.f32.mrf.mxu0
    %v942 = vadd.f32 0.0, %v941
    %v943 = vpop.f32.mrf.mxu0
    %944 = vmatprep.mubr.f32.mxu0 %v214
    %945 = vmatmul.mubr.f32.gmra.mxu0 %v213
    %v946 = vpop.f32.mrf.mxu0
    %v947 = vadd.f32 0.0, %v946
    %v948 = vpop.f32.mrf.mxu0
    %949 = vmatprep.mubr.f32.mxu0 %v216
    %950 = vmatmul.mubr.f32.gmra.mxu0 %v215
    %v951 = vpop.f32.mrf.mxu0
    %v952 = vadd.f32 0.0, %v951
    %v953 = vpop.f32.mrf.mxu0
    %954 = vmatprep.mubr.f32.mxu0 %v218
    %955 = vmatmul.mubr.f32.gmra.mxu0 %v217
    %v956 = vpop.f32.mrf.mxu0
    %v957 = vadd.f32 0.0, %v956
    %v958 = vpop.f32.mrf.mxu0
    %959 = vmatprep.mubr.f32.mxu0 %v220
    %960 = vmatmul.mubr.f32.gmra.mxu0 %v219
    %v961 = vpop.f32.mrf.mxu0
    %v962 = vadd.f32 0.0, %v961
    %v963 = vpop.f32.mrf.mxu0
    %964 = vmatprep.mubr.f32.mxu0 %v222
    %965 = vmatmul.mubr.f32.gmra.mxu0 %v221
    %v966 = vpop.f32.mrf.mxu0
    %v967 = vadd.f32 0.0, %v966
    %v968 = vpop.f32.mrf.mxu0
    %969 = vmatprep.mubr.f32.mxu0 %v224
    %970 = vmatmul.mubr.f32.gmra.mxu0 %v223
    %v971 = vpop.f32.mrf.mxu0
    %v972 = vadd.f32 0.0, %v971
    %v973 = vpop.f32.mrf.mxu0
    %974 = vmatprep.mubr.f32.mxu0 %v226
    %975 = vmatmul.mubr.f32.gmra.mxu0 %v225
    %v976 = vpop.f32.mrf.mxu0
    %v977 = vadd.f32 0.0, %v976
    %v978 = vpop.f32.mrf.mxu0
    %979 = vmatprep.mubr.f32.mxu0 %v228
    %980 = vmatmul.mubr.f32.gmra.mxu0 %v227
    %v981 = vpop.f32.mrf.mxu0
    %v982 = vadd.f32 0.0, %v981
    %v983 = vpop.f32.mrf.mxu0
    %984 = vmatprep.mubr.f32.mxu0 %v230
    %985 = vmatmul.mubr.f32.gmra.mxu0 %v229
    %v986 = vpop.f32.mrf.mxu0
    %v987 = vadd.f32 0.0, %v986
    %v988 = vpop.f32.mrf.mxu0
    %989 = vmatprep.mubr.f32.mxu0 %v232
    %990 = vmatmul.mubr.f32.gmra.mxu0 %v231
    %v991 = vpop.f32.mrf.mxu0
    %v992 = vadd.f32 0.0, %v991
    %v993 = vpop.f32.mrf.mxu0
    %994 = vmatprep.mubr.f32.mxu0 %v234
    %995 = vmatmul.mubr.f32.gmra.mxu0 %v233
    %v996 = vpop.f32.mrf.mxu0
    %v997 = vadd.f32 0.0, %v996
    %v998 = vpop.f32.mrf.mxu0
    %999 = vdwg.mxu0
    %v1001 = vlaneseq
    %v1002 = vshrl.u32 %v1001, 7
    %v1003 = vsub.s32 0, %v1002
    %v1004 = vrot.slane %v684, %v1003
    %v1005 = vlaneseq
    %v1006 = vshrl.u32 %v1005, 7
    %v1007 = vsub.s32 1, %v1006
    %v1008 = vrot.slane %v684, %v1007
    %1011 = vmatprep.subr.mxu0 %v266
    %1012 = vmatpush1.msra.mxu0 %v265
    %1013 = vmatprep.subr.mxu0 %v264
    %1014 = vmatpush1.msra.mxu0 %v263
    %1015 = vmatprep.subr.mxu0 %v262
    %1016 = vmatpush1.msra.mxu0 %v261
    %1017 = vmatprep.subr.mxu0 %v260
    %1018 = vmatpush1.msra.mxu0 %v259
    %1019 = vmatprep.subr.mxu0 %v258
    %1020 = vmatpush1.msra.mxu0 %v257
    %1021 = vmatprep.subr.mxu0 %v256
    %1022 = vmatpush1.msra.mxu0 %v255
    %1023 = vmatprep.subr.mxu0 %v254
    %1024 = vmatpush1.msra.mxu0 %v253
    %1025 = vmatprep.subr.mxu0 %v252
    %1026 = vmatpush1.msra.mxu0 %v251
    %1027 = vmatprep.subr.mxu0 %v250
    %1028 = vmatpush1.msra.mxu0 %v249
    %1029 = vmatprep.subr.mxu0 %v248
    %1030 = vmatpush1.msra.mxu0 %v247
    %1031 = vmatprep.subr.mxu0 %v246
    %1032 = vmatpush1.msra.mxu0 %v245
    %1033 = vmatprep.subr.mxu0 %v244
    %1034 = vmatpush1.msra.mxu0 %v243
    %1035 = vmatprep.subr.mxu0 %v242
    %1036 = vmatpush1.msra.mxu0 %v241
    %1037 = vmatprep.subr.mxu0 %v240
    %1038 = vmatpush1.msra.mxu0 %v239
    %1039 = vmatprep.subr.mxu0 %v238
    %1040 = vmatpush1.msra.mxu0 %v237
    %1041 = vmatprep.subr.mxu0 %v236
    %1042 = vmatpush1.msra.mxu0 %v235
    %1043 = vmatprep.subr.mxu0 %v298
    %1044 = vmatpush2.msra.mxu0 %v297
    %1045 = vmatprep.subr.mxu0 %v296
    %1046 = vmatpush2.msra.mxu0 %v295
    %1047 = vmatprep.subr.mxu0 %v294
    %1048 = vmatpush2.msra.mxu0 %v293
    %1049 = vmatprep.subr.mxu0 %v292
    %1050 = vmatpush2.msra.mxu0 %v291
    %1051 = vmatprep.subr.mxu0 %v290
    %1052 = vmatpush2.msra.mxu0 %v289
    %1053 = vmatprep.subr.mxu0 %v288
    %1054 = vmatpush2.msra.mxu0 %v287
    %1055 = vmatprep.subr.mxu0 %v286
    %1056 = vmatpush2.msra.mxu0 %v285
    %1057 = vmatprep.subr.mxu0 %v284
    %1058 = vmatpush2.msra.mxu0 %v283
    %1059 = vmatprep.subr.mxu0 %v282
    %1060 = vmatpush2.msra.mxu0 %v281
    %1061 = vmatprep.subr.mxu0 %v280
    %1062 = vmatpush2.msra.mxu0 %v279
    %1063 = vmatprep.subr.mxu0 %v278
    %1064 = vmatpush2.msra.mxu0 %v277
    %1065 = vmatprep.subr.mxu0 %v276
    %1066 = vmatpush2.msra.mxu0 %v275
    %1067 = vmatprep.subr.mxu0 %v274
    %1068 = vmatpush2.msra.mxu0 %v273
    %1069 = vmatprep.subr.mxu0 %v272
    %1070 = vmatpush2.msra.mxu0 %v271
    %1071 = vmatprep.subr.mxu0 %v270
    %1072 = vmatpush2.msra.mxu0 %v269
    %1073 = vmatprep.subr.mxu0 %v268
    %1074 = vmatpush2.msra.mxu0 %v267
    %1075 = vmatprep.mubr.f32.mxu0 %v68
    %1076 = vmatmul.mubr.f32.gmra.mxu0 %v67
    %v1077 = vpop.f32.mrf.mxu0
    %v1078 = vadd.f32 %v1004, %v1077
    %v1079 = vpop.f32.mrf.mxu0
    %v1080 = vadd.f32 %v1008, %v1079
    %1081 = vmatprep.mubr.f32.mxu0 %v70
    %1082 = vmatmul.mubr.f32.gmra.mxu0 %v69
    %v1083 = vpop.f32.mrf.mxu0
    %v1084 = vadd.f32 %v1004, %v1083
    %v1085 = vpop.f32.mrf.mxu0
    %v1086 = vadd.f32 %v1008, %v1085
    %1087 = vmatprep.mubr.f32.mxu0 %v72
    %1088 = vmatmul.mubr.f32.gmra.mxu0 %v71
    %v1089 = vpop.f32.mrf.mxu0
    %v1090 = vadd.f32 %v1004, %v1089
    %v1091 = vpop.f32.mrf.mxu0
    %v1092 = vadd.f32 %v1008, %v1091
    %1093 = vmatprep.mubr.f32.mxu0 %v74
    %1094 = vmatmul.mubr.f32.gmra.mxu0 %v73
    %v1095 = vpop.f32.mrf.mxu0
    %v1096 = vadd.f32 %v1004, %v1095
    %v1097 = vpop.f32.mrf.mxu0
    %v1098 = vadd.f32 %v1008, %v1097
    %1099 = vdwg.mxu0
    %v1100 = vlaneseq
    %v1101 = vshrl.u32 %v1100, 7
    %v1102 = vlaneseq
    %v1103 = vand.u32 %v1102, 127
    %v1104 = vmul.u32 %v1101, 4
    %v1105 = vsub.s32 %v1103, %v1104
    %vm1106 = vcmp.ge.s32.totalorder %v1105, 0
    %vm1107 = vcmp.lt.s32.totalorder %v1105, 4
    %vm1108 = vmand %vm1106, %vm1107
    %vm1109 = vcmp.ne.s32.totalorder %v1105, 1
    %vm1110 = vmand %vm1108, %vm1109
    %v1111 = vsel %vm1110, 0.0, -1e+30
    %vm1112 = vcmask 261120
    %v1114 = vsel %vm1112, %v771, 0
    %1116 = vmatprep.subr.mxu0 0.0
    %1117 = vmatpush1.msra.mxu0 0.0
    %1118 = vmatprep.subr.mxu0 0.0
    %1119 = vmatpush1.msra.mxu0 0.0
    %1120 = vmatprep.subr.mxu0 0.0
    %1121 = vmatpush1.msra.mxu0 0.0
    %1122 = vmatprep.subr.mxu0 0.0
    %1123 = vmatpush1.msra.mxu0 0.0
    %1124 = vmatprep.subr.mxu0 0.0
    %1125 = vmatpush1.msra.mxu0 0.0
    %1126 = vmatprep.subr.mxu0 0.0
    %1127 = vmatpush1.msra.mxu0 0.0
    %1128 = vmatprep.subr.mxu0 0.0
    %1129 = vmatpush1.msra.mxu0 0.0
    %1130 = vmatprep.subr.mxu0 0.0
    %1131 = vmatpush1.msra.mxu0 0.0
    %1132 = vmatprep.subr.mxu0 0.0
    %1133 = vmatpush1.msra.mxu0 0.0
    %1134 = vmatprep.subr.mxu0 0.0
    %1135 = vmatpush1.msra.mxu0 0.0
    %1136 = vmatprep.subr.mxu0 0.0
    %1137 = vmatpush1.msra.mxu0 0.0
    %1138 = vmatprep.subr.mxu0 0.0
    %1139 = vmatpush1.msra.mxu0 0.0
    %1140 = vmatprep.subr.mxu0 0.0
    %1141 = vmatpush1.msra.mxu0 %v857
    %1142 = vmatprep.subr.mxu0 0.0
    %1143 = vmatpush1.msra.mxu0 %v852
    %1144 = vmatprep.subr.mxu0 0.0
    %1145 = vmatpush1.msra.mxu0 %v847
    %1146 = vmatprep.subr.mxu0 0.0
    %1147 = vmatpush1.msra.mxu0 %v842
    %1148 = vmatprep.subr.mxu0 0.0
    %1149 = vmatpush2.msra.mxu0 0.0
    %1150 = vmatprep.subr.mxu0 0.0
    %1151 = vmatpush2.msra.mxu0 0.0
    %1152 = vmatprep.subr.mxu0 0.0
    %1153 = vmatpush2.msra.mxu0 0.0
    %1154 = vmatprep.subr.mxu0 0.0
    %1155 = vmatpush2.msra.mxu0 0.0
    %1156 = vmatprep.subr.mxu0 0.0
    %1157 = vmatpush2.msra.mxu0 0.0
    %1158 = vmatprep.subr.mxu0 0.0
    %1159 = vmatpush2.msra.mxu0 0.0
    %1160 = vmatprep.subr.mxu0 0.0
    %1161 = vmatpush2.msra.mxu0 0.0
    %1162 = vmatprep.subr.mxu0 0.0
    %1163 = vmatpush2.msra.mxu0 0.0
    %1164 = vmatprep.subr.mxu0 0.0
    %1165 = vmatpush2.msra.mxu0 0.0
    %1166 = vmatprep.subr.mxu0 0.0
    %1167 = vmatpush2.msra.mxu0 0.0
    %1168 = vmatprep.subr.mxu0 0.0
    %1169 = vmatpush2.msra.mxu0 0.0
    %1170 = vmatprep.subr.mxu0 0.0
    %1171 = vmatpush2.msra.mxu0 0.0
    %1172 = vmatprep.subr.mxu0 0.0
    %1173 = vmatpush2.msra.mxu0 0.0
    %1174 = vmatprep.subr.mxu0 0.0
    %1175 = vmatpush2.msra.mxu0 0.0
    %1176 = vmatprep.subr.mxu0 0.0
    %1177 = vmatpush2.msra.mxu0 0.0
    %1178 = vmatprep.subr.mxu0 0.0
    %1179 = vmatpush2.msra.mxu0 0.0
    %1180 = vmatprep.mubr.f32.mxu0 0.0
    %1181 = vmatmul.mubr.f32.gmra.mxu0 %v1114
    %v1182 = vpop.f32.mrf.mxu0
    %v1183 = vadd.f32 0.0, %v1182
    %v1184 = vpop.f32.mrf.mxu0
    %1185 = vdwg.mxu0
    %v1186 = vmul.f32 %v1183, 0.17677669
    %v1187 = vadd.f32 %v1186, %v1111
    %v1188 = vsel %vm1112, %v1187, -inf
    %1189 = vmax.xlane.f32.xlu0 %v1188
    %v1190 = vpop.xlane.xlu0 %1189
    %v1191 = vsub.f32 %v1187, %v1190
    %v1192 = vmul.f32 %v1191, 1.442695
    %v1193 = vpow.pop %v1192
    %v1194 = vsel %vm1112, %v1193, 0.0
    %1195 = vadd.xlane.f32.xlu0 %v1194
    %v1196 = vpop.xlane.xlu0 %1195
    %v1197 = vrcp.pop %v1196
    %v1198 = vmul.f32 1.0, %v1197
    %v1199 = vmul.f32 %v1193, %v1198
    %v1201 = vsel %vm1112, %v1199, 0
    %1203 = vmatprep.subr.mxu0 0.0
    %1204 = vmatpush1.msra.mxu0 0.0
    %1205 = vmatprep.subr.mxu0 0.0
    %1206 = vmatpush1.msra.mxu0 0.0
    %1207 = vmatprep.subr.mxu0 0.0
    %1208 = vmatpush1.msra.mxu0 0.0
    %1209 = vmatprep.subr.mxu0 0.0
    %1210 = vmatpush1.msra.mxu0 0.0
    %1211 = vmatprep.subr.mxu0 0.0
    %1212 = vmatpush1.msra.mxu0 0.0
    %1213 = vmatprep.subr.mxu0 0.0
    %1214 = vmatpush1.msra.mxu0 0.0
    %1215 = vmatprep.subr.mxu0 0.0
    %1216 = vmatpush1.msra.mxu0 0.0
    %1217 = vmatprep.subr.mxu0 0.0
    %1218 = vmatpush1.msra.mxu0 0.0
    %1219 = vmatprep.subr.mxu0 0.0
    %1220 = vmatpush1.msra.mxu0 0.0
    %1221 = vmatprep.subr.mxu0 0.0
    %1222 = vmatpush1.msra.mxu0 0.0
    %1223 = vmatprep.subr.mxu0 0.0
    %1224 = vmatpush1.msra.mxu0 0.0
    %1225 = vmatprep.subr.mxu0 0.0
    %1226 = vmatpush1.msra.mxu0 0.0
    %1227 = vmatprep.subr.mxu0 0.0
    %1228 = vmatpush1.msra.mxu0 %v1096
    %1229 = vmatprep.subr.mxu0 0.0
    %1230 = vmatpush1.msra.mxu0 %v1090
    %1231 = vmatprep.subr.mxu0 0.0
    %1232 = vmatpush1.msra.mxu0 %v1084
    %1233 = vmatprep.subr.mxu0 0.0
    %1234 = vmatpush1.msra.mxu0 %v1078
    %1235 = vmatprep.subr.mxu0 0.0
    %1236 = vmatpush2.msra.mxu0 0.0
    %1237 = vmatprep.subr.mxu0 0.0
    %1238 = vmatpush2.msra.mxu0 0.0
    %1239 = vmatprep.subr.mxu0 0.0
    %1240 = vmatpush2.msra.mxu0 0.0
    %1241 = vmatprep.subr.mxu0 0.0
    %1242 = vmatpush2.msra.mxu0 0.0
    %1243 = vmatprep.subr.mxu0 0.0
    %1244 = vmatpush2.msra.mxu0 0.0
    %1245 = vmatprep.subr.mxu0 0.0
    %1246 = vmatpush2.msra.mxu0 0.0
    %1247 = vmatprep.subr.mxu0 0.0
    %1248 = vmatpush2.msra.mxu0 0.0
    %1249 = vmatprep.subr.mxu0 0.0
    %1250 = vmatpush2.msra.mxu0 0.0
    %1251 = vmatprep.subr.mxu0 0.0
    %1252 = vmatpush2.msra.mxu0 0.0
    %1253 = vmatprep.subr.mxu0 0.0
    %1254 = vmatpush2.msra.mxu0 0.0
    %1255 = vmatprep.subr.mxu0 0.0
    %1256 = vmatpush2.msra.mxu0 0.0
    %1257 = vmatprep.subr.mxu0 0.0
    %1258 = vmatpush2.msra.mxu0 0.0
    %1259 = vmatprep.subr.mxu0 0.0
    %1260 = vmatpush2.msra.mxu0 0.0
    %1261 = vmatprep.subr.mxu0 0.0
    %1262 = vmatpush2.msra.mxu0 0.0
    %1263 = vmatprep.subr.mxu0 0.0
    %1264 = vmatpush2.msra.mxu0 0.0
    %1265 = vmatprep.subr.mxu0 0.0
    %1266 = vmatpush2.msra.mxu0 0.0
    %1267 = vmatprep.mubr.f32.mxu0 0.0
    %1268 = vmatmul.mubr.f32.gmra.mxu0 %v1201
    %v1269 = vpop.f32.mrf.mxu0
    %v1270 = vadd.f32 0.0, %v1269
    %v1271 = vpop.f32.mrf.mxu0
    %1272 = vdwg.mxu0
    %1273 = vrot.lane.b32.xlu0 %v771, 96
    %v1274 = vpop.permute.xlu0 %1273
    %v1275 = vsel %vm1112, %v1274, 0
    %1277 = vmatprep.subr.mxu0 0.0
    %1278 = vmatpush1.msra.mxu0 0.0
    %1279 = vmatprep.subr.mxu0 0.0
    %1280 = vmatpush1.msra.mxu0 0.0
    %1281 = vmatprep.subr.mxu0 0.0
    %1282 = vmatpush1.msra.mxu0 0.0
    %1283 = vmatprep.subr.mxu0 0.0
    %1284 = vmatpush1.msra.mxu0 0.0
    %1285 = vmatprep.subr.mxu0 0.0
    %1286 = vmatpush1.msra.mxu0 0.0
    %1287 = vmatprep.subr.mxu0 0.0
    %1288 = vmatpush1.msra.mxu0 0.0
    %1289 = vmatprep.subr.mxu0 0.0
    %1290 = vmatpush1.msra.mxu0 0.0
    %1291 = vmatprep.subr.mxu0 0.0
    %1292 = vmatpush1.msra.mxu0 0.0
    %1293 = vmatprep.subr.mxu0 0.0
    %1294 = vmatpush1.msra.mxu0 0.0
    %1295 = vmatprep.subr.mxu0 0.0
    %1296 = vmatpush1.msra.mxu0 0.0
    %1297 = vmatprep.subr.mxu0 0.0
    %1298 = vmatpush1.msra.mxu0 0.0
    %1299 = vmatprep.subr.mxu0 0.0
    %1300 = vmatpush1.msra.mxu0 0.0
    %1301 = vmatprep.subr.mxu0 0.0
    %1302 = vmatpush1.msra.mxu0 %v877
    %1303 = vmatprep.subr.mxu0 0.0
    %1304 = vmatpush1.msra.mxu0 %v872
    %1305 = vmatprep.subr.mxu0 0.0
    %1306 = vmatpush1.msra.mxu0 %v867
    %1307 = vmatprep.subr.mxu0 0.0
    %1308 = vmatpush1.msra.mxu0 %v862
    %1309 = vmatprep.subr.mxu0 0.0
    %1310 = vmatpush2.msra.mxu0 0.0
    %1311 = vmatprep.subr.mxu0 0.0
    %1312 = vmatpush2.msra.mxu0 0.0
    %1313 = vmatprep.subr.mxu0 0.0
    %1314 = vmatpush2.msra.mxu0 0.0
    %1315 = vmatprep.subr.mxu0 0.0
    %1316 = vmatpush2.msra.mxu0 0.0
    %1317 = vmatprep.subr.mxu0 0.0
    %1318 = vmatpush2.msra.mxu0 0.0
    %1319 = vmatprep.subr.mxu0 0.0
    %1320 = vmatpush2.msra.mxu0 0.0
    %1321 = vmatprep.subr.mxu0 0.0
    %1322 = vmatpush2.msra.mxu0 0.0
    %1323 = vmatprep.subr.mxu0 0.0
    %1324 = vmatpush2.msra.mxu0 0.0
    %1325 = vmatprep.subr.mxu0 0.0
    %1326 = vmatpush2.msra.mxu0 0.0
    %1327 = vmatprep.subr.mxu0 0.0
    %1328 = vmatpush2.msra.mxu0 0.0
    %1329 = vmatprep.subr.mxu0 0.0
    %1330 = vmatpush2.msra.mxu0 0.0
    %1331 = vmatprep.subr.mxu0 0.0
    %1332 = vmatpush2.msra.mxu0 0.0
    %1333 = vmatprep.subr.mxu0 0.0
    %1334 = vmatpush2.msra.mxu0 0.0
    %1335 = vmatprep.subr.mxu0 0.0
    %1336 = vmatpush2.msra.mxu0 0.0
    %1337 = vmatprep.subr.mxu0 0.0
    %1338 = vmatpush2.msra.mxu0 0.0
    %1339 = vmatprep.subr.mxu0 0.0
    %1340 = vmatpush2.msra.mxu0 0.0
    %1341 = vmatprep.mubr.f32.mxu0 0.0
    %1342 = vmatmul.mubr.f32.gmra.mxu0 %v1275
    %v1343 = vpop.f32.mrf.mxu0
    %v1344 = vadd.f32 0.0, %v1343
    %v1345 = vpop.f32.mrf.mxu0
    %1346 = vdwg.mxu0
    %v1347 = vmul.f32 %v1344, 0.17677669
    %v1348 = vadd.f32 %v1347, %v1111
    %v1349 = vsel %vm1112, %v1348, -inf
    %1350 = vmax.xlane.f32.xlu0 %v1349
    %v1351 = vpop.xlane.xlu0 %1350
    %v1352 = vsub.f32 %v1348, %v1351
    %v1353 = vmul.f32 %v1352, 1.442695
    %v1354 = vpow.pop %v1353
    %v1355 = vsel %vm1112, %v1354, 0.0
    %1356 = vadd.xlane.f32.xlu0 %v1355
    %v1357 = vpop.xlane.xlu0 %1356
    %v1358 = vrcp.pop %v1357
    %v1359 = vmul.f32 1.0, %v1358
    %v1360 = vmul.f32 %v1354, %v1359
    %1365 = vrot.lane.b32.xlu0 %v1078, 96
    %v1366 = vpop.permute.xlu0 %1365
    %1367 = vrot.lane.b32.xlu0 %v1084, 96
    %v1368 = vpop.permute.xlu0 %1367
    %1369 = vrot.lane.b32.xlu0 %v1090, 96
    %v1370 = vpop.permute.xlu0 %1369
    %1371 = vrot.lane.b32.xlu0 %v1096, 96
    %v1372 = vpop.permute.xlu0 %1371
    %v1378 = vsel %vm1112, %v1360, 0
    %1380 = vmatprep.subr.mxu0 0.0
    %1381 = vmatpush1.msra.mxu0 0.0
    %1382 = vmatprep.subr.mxu0 0.0
    %1383 = vmatpush1.msra.mxu0 0.0
    %1384 = vmatprep.subr.mxu0 0.0
    %1385 = vmatpush1.msra.mxu0 0.0
    %1386 = vmatprep.subr.mxu0 0.0
    %1387 = vmatpush1.msra.mxu0 0.0
    %1388 = vmatprep.subr.mxu0 0.0
    %1389 = vmatpush1.msra.mxu0 0.0
    %1390 = vmatprep.subr.mxu0 0.0
    %1391 = vmatpush1.msra.mxu0 0.0
    %1392 = vmatprep.subr.mxu0 0.0
    %1393 = vmatpush1.msra.mxu0 0.0
    %1394 = vmatprep.subr.mxu0 0.0
    %1395 = vmatpush1.msra.mxu0 0.0
    %1396 = vmatprep.subr.mxu0 0.0
    %1397 = vmatpush1.msra.mxu0 0.0
    %1398 = vmatprep.subr.mxu0 0.0
    %1399 = vmatpush1.msra.mxu0 0.0
    %1400 = vmatprep.subr.mxu0 0.0
    %1401 = vmatpush1.msra.mxu0 0.0
    %1402 = vmatprep.subr.mxu0 0.0
    %1403 = vmatpush1.msra.mxu0 0.0
    %1404 = vmatprep.subr.mxu0 0.0
    %1405 = vmatpush1.msra.mxu0 %v1372
    %1406 = vmatprep.subr.mxu0 0.0
    %1407 = vmatpush1.msra.mxu0 %v1370
    %1408 = vmatprep.subr.mxu0 0.0
    %1409 = vmatpush1.msra.mxu0 %v1368
    %1410 = vmatprep.subr.mxu0 0.0
    %1411 = vmatpush1.msra.mxu0 %v1366
    %1412 = vmatprep.subr.mxu0 0.0
    %1413 = vmatpush2.msra.mxu0 0.0
    %1414 = vmatprep.subr.mxu0 0.0
    %1415 = vmatpush2.msra.mxu0 0.0
    %1416 = vmatprep.subr.mxu0 0.0
    %1417 = vmatpush2.msra.mxu0 0.0
    %1418 = vmatprep.subr.mxu0 0.0
    %1419 = vmatpush2.msra.mxu0 0.0
    %1420 = vmatprep.subr.mxu0 0.0
    %1421 = vmatpush2.msra.mxu0 0.0
    %1422 = vmatprep.subr.mxu0 0.0
    %1423 = vmatpush2.msra.mxu0 0.0
    %1424 = vmatprep.subr.mxu0 0.0
    %1425 = vmatpush2.msra.mxu0 0.0
    %1426 = vmatprep.subr.mxu0 0.0
    %1427 = vmatpush2.msra.mxu0 0.0
    %1428 = vmatprep.subr.mxu0 0.0
    %1429 = vmatpush2.msra.mxu0 0.0
    %1430 = vmatprep.subr.mxu0 0.0
    %1431 = vmatpush2.msra.mxu0 0.0
    %1432 = vmatprep.subr.mxu0 0.0
    %1433 = vmatpush2.msra.mxu0 0.0
    %1434 = vmatprep.subr.mxu0 0.0
    %1435 = vmatpush2.msra.mxu0 0.0
    %1436 = vmatprep.subr.mxu0 0.0
    %1437 = vmatpush2.msra.mxu0 0.0
    %1438 = vmatprep.subr.mxu0 0.0
    %1439 = vmatpush2.msra.mxu0 0.0
    %1440 = vmatprep.subr.mxu0 0.0
    %1441 = vmatpush2.msra.mxu0 0.0
    %1442 = vmatprep.subr.mxu0 0.0
    %1443 = vmatpush2.msra.mxu0 0.0
    %1444 = vmatprep.mubr.f32.mxu0 0.0
    %1445 = vmatmul.mubr.f32.gmra.mxu0 %v1378
    %v1446 = vpop.f32.mrf.mxu0
    %v1447 = vadd.f32 0.0, %v1446
    %v1448 = vpop.f32.mrf.mxu0
    %1449 = vdwg.mxu0
    %v1451 = vsel %vm1112, %v1447, 0
    %1453 = vmatprep.subr.mxu0 0.0
    %1454 = vmatpush1.msra.mxu0 0.0
    %1455 = vmatprep.subr.mxu0 0.0
    %1456 = vmatpush1.msra.mxu0 0.0
    %1457 = vmatprep.subr.mxu0 0.0
    %1458 = vmatpush1.msra.mxu0 0.0
    %1459 = vmatprep.subr.mxu0 0.0
    %1460 = vmatpush1.msra.mxu0 0.0
    %1461 = vmatprep.subr.mxu0 0.0
    %1462 = vmatpush1.msra.mxu0 0.0
    %1463 = vmatprep.subr.mxu0 0.0
    %1464 = vmatpush1.msra.mxu0 0.0
    %1465 = vmatprep.subr.mxu0 0.0
    %1466 = vmatpush1.msra.mxu0 0.0
    %1467 = vmatprep.subr.mxu0 0.0
    %1468 = vmatpush1.msra.mxu0 0.0
    %1469 = vmatprep.subr.mxu0 0.0
    %1470 = vmatpush1.msra.mxu0 0.0
    %1471 = vmatprep.subr.mxu0 0.0
    %1472 = vmatpush1.msra.mxu0 0.0
    %1473 = vmatprep.subr.mxu0 0.0
    %1474 = vmatpush1.msra.mxu0 0.0
    %1475 = vmatprep.subr.mxu0 0.0
    %1476 = vmatpush1.msra.mxu0 0.0
    %1477 = vmatprep.subr.mxu0 %v314
    %1478 = vmatpush1.msra.mxu0 %v313
    %1479 = vmatprep.subr.mxu0 %v312
    %1480 = vmatpush1.msra.mxu0 %v311
    %1481 = vmatprep.subr.mxu0 %v310
    %1482 = vmatpush1.msra.mxu0 %v309
    %1483 = vmatprep.subr.mxu0 %v308
    %1484 = vmatpush1.msra.mxu0 %v307
    %1485 = vmatprep.subr.mxu0 0.0
    %1486 = vmatpush2.msra.mxu0 0.0
    %1487 = vmatprep.subr.mxu0 0.0
    %1488 = vmatpush2.msra.mxu0 0.0
    %1489 = vmatprep.subr.mxu0 0.0
    %1490 = vmatpush2.msra.mxu0 0.0
    %1491 = vmatprep.subr.mxu0 0.0
    %1492 = vmatpush2.msra.mxu0 0.0
    %1493 = vmatprep.subr.mxu0 0.0
    %1494 = vmatpush2.msra.mxu0 0.0
    %1495 = vmatprep.subr.mxu0 0.0
    %1496 = vmatpush2.msra.mxu0 0.0
    %1497 = vmatprep.subr.mxu0 0.0
    %1498 = vmatpush2.msra.mxu0 0.0
    %1499 = vmatprep.subr.mxu0 0.0
    %1500 = vmatpush2.msra.mxu0 0.0
    %1501 = vmatprep.subr.mxu0 0.0
    %1502 = vmatpush2.msra.mxu0 0.0
    %1503 = vmatprep.subr.mxu0 0.0
    %1504 = vmatpush2.msra.mxu0 0.0
    %1505 = vmatprep.subr.mxu0 0.0
    %1506 = vmatpush2.msra.mxu0 0.0
    %1507 = vmatprep.subr.mxu0 0.0
    %1508 = vmatpush2.msra.mxu0 0.0
    %1509 = vmatprep.subr.mxu0 0.0
    %1510 = vmatpush2.msra.mxu0 0.0
    %1511 = vmatprep.subr.mxu0 0.0
    %1512 = vmatpush2.msra.mxu0 0.0
    %1513 = vmatprep.subr.mxu0 0.0
    %1514 = vmatpush2.msra.mxu0 0.0
    %1515 = vmatprep.subr.mxu0 0.0
    %1516 = vmatpush2.msra.mxu0 0.0
    %1517 = vmatprep.mubr.f32.mxu0 0.0
    %1518 = vmatmul.mubr.f32.gmra.mxu0 %v1451
    %v1519 = vpop.f32.mrf.mxu0
    %v1520 = vadd.f32 0.0, %v1519
    %v1521 = vpop.f32.mrf.mxu0
    %v1522 = vadd.f32 0.0, %v1521
    %1523 = vdwg.mxu0
    %v1525 = vsel %vm1112, %v1270, 0
    %1527 = vmatprep.subr.mxu0 0.0
    %1528 = vmatpush1.msra.mxu0 0.0
    %1529 = vmatprep.subr.mxu0 0.0
    %1530 = vmatpush1.msra.mxu0 0.0
    %1531 = vmatprep.subr.mxu0 0.0
    %1532 = vmatpush1.msra.mxu0 0.0
    %1533 = vmatprep.subr.mxu0 0.0
    %1534 = vmatpush1.msra.mxu0 0.0
    %1535 = vmatprep.subr.mxu0 0.0
    %1536 = vmatpush1.msra.mxu0 0.0
    %1537 = vmatprep.subr.mxu0 0.0
    %1538 = vmatpush1.msra.mxu0 0.0
    %1539 = vmatprep.subr.mxu0 0.0
    %1540 = vmatpush1.msra.mxu0 0.0
    %1541 = vmatprep.subr.mxu0 0.0
    %1542 = vmatpush1.msra.mxu0 0.0
    %1543 = vmatprep.subr.mxu0 0.0
    %1544 = vmatpush1.msra.mxu0 0.0
    %1545 = vmatprep.subr.mxu0 0.0
    %1546 = vmatpush1.msra.mxu0 0.0
    %1547 = vmatprep.subr.mxu0 0.0
    %1548 = vmatpush1.msra.mxu0 0.0
    %1549 = vmatprep.subr.mxu0 0.0
    %1550 = vmatpush1.msra.mxu0 0.0
    %1551 = vmatprep.subr.mxu0 %v306
    %1552 = vmatpush1.msra.mxu0 %v305
    %1553 = vmatprep.subr.mxu0 %v304
    %1554 = vmatpush1.msra.mxu0 %v303
    %1555 = vmatprep.subr.mxu0 %v302
    %1556 = vmatpush1.msra.mxu0 %v301
    %1557 = vmatprep.subr.mxu0 %v300
    %1558 = vmatpush1.msra.mxu0 %v299
    %1559 = vmatprep.subr.mxu0 0.0
    %1560 = vmatpush2.msra.mxu0 0.0
    %1561 = vmatprep.subr.mxu0 0.0
    %1562 = vmatpush2.msra.mxu0 0.0
    %1563 = vmatprep.subr.mxu0 0.0
    %1564 = vmatpush2.msra.mxu0 0.0
    %1565 = vmatprep.subr.mxu0 0.0
    %1566 = vmatpush2.msra.mxu0 0.0
    %1567 = vmatprep.subr.mxu0 0.0
    %1568 = vmatpush2.msra.mxu0 0.0
    %1569 = vmatprep.subr.mxu0 0.0
    %1570 = vmatpush2.msra.mxu0 0.0
    %1571 = vmatprep.subr.mxu0 0.0
    %1572 = vmatpush2.msra.mxu0 0.0
    %1573 = vmatprep.subr.mxu0 0.0
    %1574 = vmatpush2.msra.mxu0 0.0
    %1575 = vmatprep.subr.mxu0 0.0
    %1576 = vmatpush2.msra.mxu0 0.0
    %1577 = vmatprep.subr.mxu0 0.0
    %1578 = vmatpush2.msra.mxu0 0.0
    %1579 = vmatprep.subr.mxu0 0.0
    %1580 = vmatpush2.msra.mxu0 0.0
    %1581 = vmatprep.subr.mxu0 0.0
    %1582 = vmatpush2.msra.mxu0 0.0
    %1583 = vmatprep.subr.mxu0 0.0
    %1584 = vmatpush2.msra.mxu0 0.0
    %1585 = vmatprep.subr.mxu0 0.0
    %1586 = vmatpush2.msra.mxu0 0.0
    %1587 = vmatprep.subr.mxu0 0.0
    %1588 = vmatpush2.msra.mxu0 0.0
    %1589 = vmatprep.subr.mxu0 0.0
    %1590 = vmatpush2.msra.mxu0 0.0
    %1591 = vmatprep.mubr.f32.mxu0 0.0
    %1592 = vmatmul.mubr.f32.gmra.mxu0 %v1525
    %v1593 = vpop.f32.mrf.mxu0
    %v1594 = vadd.f32 %v1520, %v1593
    %v1595 = vpop.f32.mrf.mxu0
    %v1596 = vadd.f32 %v1522, %v1595
    %1597 = vdwg.mxu0
    %1598 = vrot.lane.b32.xlu0 %v771, 64
    %v1599 = vpop.permute.xlu0 %1598
    %v1600 = vsel %vm1112, %v1599, 0
    %1602 = vmatprep.subr.mxu0 0.0
    %1603 = vmatpush1.msra.mxu0 0.0
    %1604 = vmatprep.subr.mxu0 0.0
    %1605 = vmatpush1.msra.mxu0 0.0
    %1606 = vmatprep.subr.mxu0 0.0
    %1607 = vmatpush1.msra.mxu0 0.0
    %1608 = vmatprep.subr.mxu0 0.0
    %1609 = vmatpush1.msra.mxu0 0.0
    %1610 = vmatprep.subr.mxu0 0.0
    %1611 = vmatpush1.msra.mxu0 0.0
    %1612 = vmatprep.subr.mxu0 0.0
    %1613 = vmatpush1.msra.mxu0 0.0
    %1614 = vmatprep.subr.mxu0 0.0
    %1615 = vmatpush1.msra.mxu0 0.0
    %1616 = vmatprep.subr.mxu0 0.0
    %1617 = vmatpush1.msra.mxu0 0.0
    %1618 = vmatprep.subr.mxu0 0.0
    %1619 = vmatpush1.msra.mxu0 0.0
    %1620 = vmatprep.subr.mxu0 0.0
    %1621 = vmatpush1.msra.mxu0 0.0
    %1622 = vmatprep.subr.mxu0 0.0
    %1623 = vmatpush1.msra.mxu0 0.0
    %1624 = vmatprep.subr.mxu0 0.0
    %1625 = vmatpush1.msra.mxu0 0.0
    %1626 = vmatprep.subr.mxu0 0.0
    %1627 = vmatpush1.msra.mxu0 %v897
    %1628 = vmatprep.subr.mxu0 0.0
    %1629 = vmatpush1.msra.mxu0 %v892
    %1630 = vmatprep.subr.mxu0 0.0
    %1631 = vmatpush1.msra.mxu0 %v887
    %1632 = vmatprep.subr.mxu0 0.0
    %1633 = vmatpush1.msra.mxu0 %v882
    %1634 = vmatprep.subr.mxu0 0.0
    %1635 = vmatpush2.msra.mxu0 0.0
    %1636 = vmatprep.subr.mxu0 0.0
    %1637 = vmatpush2.msra.mxu0 0.0
    %1638 = vmatprep.subr.mxu0 0.0
    %1639 = vmatpush2.msra.mxu0 0.0
    %1640 = vmatprep.subr.mxu0 0.0
    %1641 = vmatpush2.msra.mxu0 0.0
    %1642 = vmatprep.subr.mxu0 0.0
    %1643 = vmatpush2.msra.mxu0 0.0
    %1644 = vmatprep.subr.mxu0 0.0
    %1645 = vmatpush2.msra.mxu0 0.0
    %1646 = vmatprep.subr.mxu0 0.0
    %1647 = vmatpush2.msra.mxu0 0.0
    %1648 = vmatprep.subr.mxu0 0.0
    %1649 = vmatpush2.msra.mxu0 0.0
    %1650 = vmatprep.subr.mxu0 0.0
    %1651 = vmatpush2.msra.mxu0 0.0
    %1652 = vmatprep.subr.mxu0 0.0
    %1653 = vmatpush2.msra.mxu0 0.0
    %1654 = vmatprep.subr.mxu0 0.0
    %1655 = vmatpush2.msra.mxu0 0.0
    %1656 = vmatprep.subr.mxu0 0.0
    %1657 = vmatpush2.msra.mxu0 0.0
    %1658 = vmatprep.subr.mxu0 0.0
    %1659 = vmatpush2.msra.mxu0 0.0
    %1660 = vmatprep.subr.mxu0 0.0
    %1661 = vmatpush2.msra.mxu0 0.0
    %1662 = vmatprep.subr.mxu0 0.0
    %1663 = vmatpush2.msra.mxu0 0.0
    %1664 = vmatprep.subr.mxu0 0.0
    %1665 = vmatpush2.msra.mxu0 0.0
    %1666 = vmatprep.mubr.f32.mxu0 0.0
    %1667 = vmatmul.mubr.f32.gmra.mxu0 %v1600
    %v1668 = vpop.f32.mrf.mxu0
    %v1669 = vadd.f32 0.0, %v1668
    %v1670 = vpop.f32.mrf.mxu0
    %1671 = vdwg.mxu0
    %v1672 = vmul.f32 %v1669, 0.17677669
    %v1673 = vadd.f32 %v1672, %v1111
    %v1674 = vsel %vm1112, %v1673, -inf
    %1675 = vmax.xlane.f32.xlu0 %v1674
    %v1676 = vpop.xlane.xlu0 %1675
    %v1677 = vsub.f32 %v1673, %v1676
    %v1678 = vmul.f32 %v1677, 1.442695
    %v1679 = vpow.pop %v1678
    %v1680 = vsel %vm1112, %v1679, 0.0
    %1681 = vadd.xlane.f32.xlu0 %v1680
    %v1682 = vpop.xlane.xlu0 %1681
    %v1683 = vrcp.pop %v1682
    %v1684 = vmul.f32 1.0, %v1683
    %v1685 = vmul.f32 %v1679, %v1684
    %1686 = vrot.lane.b32.xlu0 %v1078, 64
    %v1687 = vpop.permute.xlu0 %1686
    %1688 = vrot.lane.b32.xlu0 %v1084, 64
    %v1689 = vpop.permute.xlu0 %1688
    %1690 = vrot.lane.b32.xlu0 %v1090, 64
    %v1691 = vpop.permute.xlu0 %1690
    %1692 = vrot.lane.b32.xlu0 %v1096, 64
    %v1693 = vpop.permute.xlu0 %1692
    %v1699 = vsel %vm1112, %v1685, 0
    %1701 = vmatprep.subr.mxu0 0.0
    %1702 = vmatpush1.msra.mxu0 0.0
    %1703 = vmatprep.subr.mxu0 0.0
    %1704 = vmatpush1.msra.mxu0 0.0
    %1705 = vmatprep.subr.mxu0 0.0
    %1706 = vmatpush1.msra.mxu0 0.0
    %1707 = vmatprep.subr.mxu0 0.0
    %1708 = vmatpush1.msra.mxu0 0.0
    %1709 = vmatprep.subr.mxu0 0.0
    %1710 = vmatpush1.msra.mxu0 0.0
    %1711 = vmatprep.subr.mxu0 0.0
    %1712 = vmatpush1.msra.mxu0 0.0
    %1713 = vmatprep.subr.mxu0 0.0
    %1714 = vmatpush1.msra.mxu0 0.0
    %1715 = vmatprep.subr.mxu0 0.0
    %1716 = vmatpush1.msra.mxu0 0.0
    %1717 = vmatprep.subr.mxu0 0.0
    %1718 = vmatpush1.msra.mxu0 0.0
    %1719 = vmatprep.subr.mxu0 0.0
    %1720 = vmatpush1.msra.mxu0 0.0
    %1721 = vmatprep.subr.mxu0 0.0
    %1722 = vmatpush1.msra.mxu0 0.0
    %1723 = vmatprep.subr.mxu0 0.0
    %1724 = vmatpush1.msra.mxu0 0.0
    %1725 = vmatprep.subr.mxu0 0.0
    %1726 = vmatpush1.msra.mxu0 %v1693
    %1727 = vmatprep.subr.mxu0 0.0
    %1728 = vmatpush1.msra.mxu0 %v1691
    %1729 = vmatprep.subr.mxu0 0.0
    %1730 = vmatpush1.msra.mxu0 %v1689
    %1731 = vmatprep.subr.mxu0 0.0
    %1732 = vmatpush1.msra.mxu0 %v1687
    %1733 = vmatprep.subr.mxu0 0.0
    %1734 = vmatpush2.msra.mxu0 0.0
    %1735 = vmatprep.subr.mxu0 0.0
    %1736 = vmatpush2.msra.mxu0 0.0
    %1737 = vmatprep.subr.mxu0 0.0
    %1738 = vmatpush2.msra.mxu0 0.0
    %1739 = vmatprep.subr.mxu0 0.0
    %1740 = vmatpush2.msra.mxu0 0.0
    %1741 = vmatprep.subr.mxu0 0.0
    %1742 = vmatpush2.msra.mxu0 0.0
    %1743 = vmatprep.subr.mxu0 0.0
    %1744 = vmatpush2.msra.mxu0 0.0
    %1745 = vmatprep.subr.mxu0 0.0
    %1746 = vmatpush2.msra.mxu0 0.0
    %1747 = vmatprep.subr.mxu0 0.0
    %1748 = vmatpush2.msra.mxu0 0.0
    %1749 = vmatprep.subr.mxu0 0.0
    %1750 = vmatpush2.msra.mxu0 0.0
    %1751 = vmatprep.subr.mxu0 0.0
    %1752 = vmatpush2.msra.mxu0 0.0
    %1753 = vmatprep.subr.mxu0 0.0
    %1754 = vmatpush2.msra.mxu0 0.0
    %1755 = vmatprep.subr.mxu0 0.0
    %1756 = vmatpush2.msra.mxu0 0.0
    %1757 = vmatprep.subr.mxu0 0.0
    %1758 = vmatpush2.msra.mxu0 0.0
    %1759 = vmatprep.subr.mxu0 0.0
    %1760 = vmatpush2.msra.mxu0 0.0
    %1761 = vmatprep.subr.mxu0 0.0
    %1762 = vmatpush2.msra.mxu0 0.0
    %1763 = vmatprep.subr.mxu0 0.0
    %1764 = vmatpush2.msra.mxu0 0.0
    %1765 = vmatprep.mubr.f32.mxu0 0.0
    %1766 = vmatmul.mubr.f32.gmra.mxu0 %v1699
    %v1767 = vpop.f32.mrf.mxu0
    %v1768 = vadd.f32 0.0, %v1767
    %v1769 = vpop.f32.mrf.mxu0
    %1770 = vdwg.mxu0
    %v1772 = vsel %vm1112, %v1768, 0
    %1774 = vmatprep.subr.mxu0 0.0
    %1775 = vmatpush1.msra.mxu0 0.0
    %1776 = vmatprep.subr.mxu0 0.0
    %1777 = vmatpush1.msra.mxu0 0.0
    %1778 = vmatprep.subr.mxu0 0.0
    %1779 = vmatpush1.msra.mxu0 0.0
    %1780 = vmatprep.subr.mxu0 0.0
    %1781 = vmatpush1.msra.mxu0 0.0
    %1782 = vmatprep.subr.mxu0 0.0
    %1783 = vmatpush1.msra.mxu0 0.0
    %1784 = vmatprep.subr.mxu0 0.0
    %1785 = vmatpush1.msra.mxu0 0.0
    %1786 = vmatprep.subr.mxu0 0.0
    %1787 = vmatpush1.msra.mxu0 0.0
    %1788 = vmatprep.subr.mxu0 0.0
    %1789 = vmatpush1.msra.mxu0 0.0
    %1790 = vmatprep.subr.mxu0 0.0
    %1791 = vmatpush1.msra.mxu0 0.0
    %1792 = vmatprep.subr.mxu0 0.0
    %1793 = vmatpush1.msra.mxu0 0.0
    %1794 = vmatprep.subr.mxu0 0.0
    %1795 = vmatpush1.msra.mxu0 0.0
    %1796 = vmatprep.subr.mxu0 0.0
    %1797 = vmatpush1.msra.mxu0 0.0
    %1798 = vmatprep.subr.mxu0 %v322
    %1799 = vmatpush1.msra.mxu0 %v321
    %1800 = vmatprep.subr.mxu0 %v320
    %1801 = vmatpush1.msra.mxu0 %v319
    %1802 = vmatprep.subr.mxu0 %v318
    %1803 = vmatpush1.msra.mxu0 %v317
    %1804 = vmatprep.subr.mxu0 %v316
    %1805 = vmatpush1.msra.mxu0 %v315
    %1806 = vmatprep.subr.mxu0 0.0
    %1807 = vmatpush2.msra.mxu0 0.0
    %1808 = vmatprep.subr.mxu0 0.0
    %1809 = vmatpush2.msra.mxu0 0.0
    %1810 = vmatprep.subr.mxu0 0.0
    %1811 = vmatpush2.msra.mxu0 0.0
    %1812 = vmatprep.subr.mxu0 0.0
    %1813 = vmatpush2.msra.mxu0 0.0
    %1814 = vmatprep.subr.mxu0 0.0
    %1815 = vmatpush2.msra.mxu0 0.0
    %1816 = vmatprep.subr.mxu0 0.0
    %1817 = vmatpush2.msra.mxu0 0.0
    %1818 = vmatprep.subr.mxu0 0.0
    %1819 = vmatpush2.msra.mxu0 0.0
    %1820 = vmatprep.subr.mxu0 0.0
    %1821 = vmatpush2.msra.mxu0 0.0
    %1822 = vmatprep.subr.mxu0 0.0
    %1823 = vmatpush2.msra.mxu0 0.0
    %1824 = vmatprep.subr.mxu0 0.0
    %1825 = vmatpush2.msra.mxu0 0.0
    %1826 = vmatprep.subr.mxu0 0.0
    %1827 = vmatpush2.msra.mxu0 0.0
    %1828 = vmatprep.subr.mxu0 0.0
    %1829 = vmatpush2.msra.mxu0 0.0
    %1830 = vmatprep.subr.mxu0 0.0
    %1831 = vmatpush2.msra.mxu0 0.0
    %1832 = vmatprep.subr.mxu0 0.0
    %1833 = vmatpush2.msra.mxu0 0.0
    %1834 = vmatprep.subr.mxu0 0.0
    %1835 = vmatpush2.msra.mxu0 0.0
    %1836 = vmatprep.subr.mxu0 0.0
    %1837 = vmatpush2.msra.mxu0 0.0
    %1838 = vmatprep.mubr.f32.mxu0 0.0
    %1839 = vmatmul.mubr.f32.gmra.mxu0 %v1772
    %v1840 = vpop.f32.mrf.mxu0
    %v1841 = vadd.f32 0.0, %v1840
    %v1842 = vpop.f32.mrf.mxu0
    %v1843 = vadd.f32 0.0, %v1842
    %1844 = vdwg.mxu0
    %v1845 = vadd.f32 %v1594, %v1841
    %v1846 = vadd.f32 %v1596, %v1843
    %1847 = vrot.lane.b32.xlu0 %v771, 32
    %v1848 = vpop.permute.xlu0 %1847
    %v1849 = vsel %vm1112, %v1848, 0
    %1851 = vmatprep.subr.mxu0 0.0
    %1852 = vmatpush1.msra.mxu0 0.0
    %1853 = vmatprep.subr.mxu0 0.0
    %1854 = vmatpush1.msra.mxu0 0.0
    %1855 = vmatprep.subr.mxu0 0.0
    %1856 = vmatpush1.msra.mxu0 0.0
    %1857 = vmatprep.subr.mxu0 0.0
    %1858 = vmatpush1.msra.mxu0 0.0
    %1859 = vmatprep.subr.mxu0 0.0
    %1860 = vmatpush1.msra.mxu0 0.0
    %1861 = vmatprep.subr.mxu0 0.0
    %1862 = vmatpush1.msra.mxu0 0.0
    %1863 = vmatprep.subr.mxu0 0.0
    %1864 = vmatpush1.msra.mxu0 0.0
    %1865 = vmatprep.subr.mxu0 0.0
    %1866 = vmatpush1.msra.mxu0 0.0
    %1867 = vmatprep.subr.mxu0 0.0
    %1868 = vmatpush1.msra.mxu0 0.0
    %1869 = vmatprep.subr.mxu0 0.0
    %1870 = vmatpush1.msra.mxu0 0.0
    %1871 = vmatprep.subr.mxu0 0.0
    %1872 = vmatpush1.msra.mxu0 0.0
    %1873 = vmatprep.subr.mxu0 0.0
    %1874 = vmatpush1.msra.mxu0 0.0
    %1875 = vmatprep.subr.mxu0 0.0
    %1876 = vmatpush1.msra.mxu0 %v917
    %1877 = vmatprep.subr.mxu0 0.0
    %1878 = vmatpush1.msra.mxu0 %v912
    %1879 = vmatprep.subr.mxu0 0.0
    %1880 = vmatpush1.msra.mxu0 %v907
    %1881 = vmatprep.subr.mxu0 0.0
    %1882 = vmatpush1.msra.mxu0 %v902
    %1883 = vmatprep.subr.mxu0 0.0
    %1884 = vmatpush2.msra.mxu0 0.0
    %1885 = vmatprep.subr.mxu0 0.0
    %1886 = vmatpush2.msra.mxu0 0.0
    %1887 = vmatprep.subr.mxu0 0.0
    %1888 = vmatpush2.msra.mxu0 0.0
    %1889 = vmatprep.subr.mxu0 0.0
    %1890 = vmatpush2.msra.mxu0 0.0
    %1891 = vmatprep.subr.mxu0 0.0
    %1892 = vmatpush2.msra.mxu0 0.0
    %1893 = vmatprep.subr.mxu0 0.0
    %1894 = vmatpush2.msra.mxu0 0.0
    %1895 = vmatprep.subr.mxu0 0.0
    %1896 = vmatpush2.msra.mxu0 0.0
    %1897 = vmatprep.subr.mxu0 0.0
    %1898 = vmatpush2.msra.mxu0 0.0
    %1899 = vmatprep.subr.mxu0 0.0
    %1900 = vmatpush2.msra.mxu0 0.0
    %1901 = vmatprep.subr.mxu0 0.0
    %1902 = vmatpush2.msra.mxu0 0.0
    %1903 = vmatprep.subr.mxu0 0.0
    %1904 = vmatpush2.msra.mxu0 0.0
    %1905 = vmatprep.subr.mxu0 0.0
    %1906 = vmatpush2.msra.mxu0 0.0
    %1907 = vmatprep.subr.mxu0 0.0
    %1908 = vmatpush2.msra.mxu0 0.0
    %1909 = vmatprep.subr.mxu0 0.0
    %1910 = vmatpush2.msra.mxu0 0.0
    %1911 = vmatprep.subr.mxu0 0.0
    %1912 = vmatpush2.msra.mxu0 0.0
    %1913 = vmatprep.subr.mxu0 0.0
    %1914 = vmatpush2.msra.mxu0 0.0
    %1915 = vmatprep.mubr.f32.mxu0 0.0
    %1916 = vmatmul.mubr.f32.gmra.mxu0 %v1849
    %v1917 = vpop.f32.mrf.mxu0
    %v1918 = vadd.f32 0.0, %v1917
    %v1919 = vpop.f32.mrf.mxu0
    %1920 = vdwg.mxu0
    %v1921 = vmul.f32 %v1918, 0.17677669
    %v1922 = vadd.f32 %v1921, %v1111
    %v1923 = vsel %vm1112, %v1922, -inf
    %1924 = vmax.xlane.f32.xlu0 %v1923
    %v1925 = vpop.xlane.xlu0 %1924
    %v1926 = vsub.f32 %v1922, %v1925
    %v1927 = vmul.f32 %v1926, 1.442695
    %v1928 = vpow.pop %v1927
    %v1929 = vsel %vm1112, %v1928, 0.0
    %1930 = vadd.xlane.f32.xlu0 %v1929
    %v1931 = vpop.xlane.xlu0 %1930
    %v1932 = vrcp.pop %v1931
    %v1933 = vmul.f32 1.0, %v1932
    %v1934 = vmul.f32 %v1928, %v1933
    %1935 = vrot.lane.b32.xlu0 %v1078, 32
    %v1936 = vpop.permute.xlu0 %1935
    %1937 = vrot.lane.b32.xlu0 %v1084, 32
    %v1938 = vpop.permute.xlu0 %1937
    %1939 = vrot.lane.b32.xlu0 %v1090, 32
    %v1940 = vpop.permute.xlu0 %1939
    %1941 = vrot.lane.b32.xlu0 %v1096, 32
    %v1942 = vpop.permute.xlu0 %1941
    %v1948 = vsel %vm1112, %v1934, 0
    %1950 = vmatprep.subr.mxu0 0.0
    %1951 = vmatpush1.msra.mxu0 0.0
    %1952 = vmatprep.subr.mxu0 0.0
    %1953 = vmatpush1.msra.mxu0 0.0
    %1954 = vmatprep.subr.mxu0 0.0
    %1955 = vmatpush1.msra.mxu0 0.0
    %1956 = vmatprep.subr.mxu0 0.0
    %1957 = vmatpush1.msra.mxu0 0.0
    %1958 = vmatprep.subr.mxu0 0.0
    %1959 = vmatpush1.msra.mxu0 0.0
    %1960 = vmatprep.subr.mxu0 0.0
    %1961 = vmatpush1.msra.mxu0 0.0
    %1962 = vmatprep.subr.mxu0 0.0
    %1963 = vmatpush1.msra.mxu0 0.0
    %1964 = vmatprep.subr.mxu0 0.0
    %1965 = vmatpush1.msra.mxu0 0.0
    %1966 = vmatprep.subr.mxu0 0.0
    %1967 = vmatpush1.msra.mxu0 0.0
    %1968 = vmatprep.subr.mxu0 0.0
    %1969 = vmatpush1.msra.mxu0 0.0
    %1970 = vmatprep.subr.mxu0 0.0
    %1971 = vmatpush1.msra.mxu0 0.0
    %1972 = vmatprep.subr.mxu0 0.0
    %1973 = vmatpush1.msra.mxu0 0.0
    %1974 = vmatprep.subr.mxu0 0.0
    %1975 = vmatpush1.msra.mxu0 %v1942
    %1976 = vmatprep.subr.mxu0 0.0
    %1977 = vmatpush1.msra.mxu0 %v1940
    %1978 = vmatprep.subr.mxu0 0.0
    %1979 = vmatpush1.msra.mxu0 %v1938
    %1980 = vmatprep.subr.mxu0 0.0
    %1981 = vmatpush1.msra.mxu0 %v1936
    %1982 = vmatprep.subr.mxu0 0.0
    %1983 = vmatpush2.msra.mxu0 0.0
    %1984 = vmatprep.subr.mxu0 0.0
    %1985 = vmatpush2.msra.mxu0 0.0
    %1986 = vmatprep.subr.mxu0 0.0
    %1987 = vmatpush2.msra.mxu0 0.0
    %1988 = vmatprep.subr.mxu0 0.0
    %1989 = vmatpush2.msra.mxu0 0.0
    %1990 = vmatprep.subr.mxu0 0.0
    %1991 = vmatpush2.msra.mxu0 0.0
    %1992 = vmatprep.subr.mxu0 0.0
    %1993 = vmatpush2.msra.mxu0 0.0
    %1994 = vmatprep.subr.mxu0 0.0
    %1995 = vmatpush2.msra.mxu0 0.0
    %1996 = vmatprep.subr.mxu0 0.0
    %1997 = vmatpush2.msra.mxu0 0.0
    %1998 = vmatprep.subr.mxu0 0.0
    %1999 = vmatpush2.msra.mxu0 0.0
    %2000 = vmatprep.subr.mxu0 0.0
    %2001 = vmatpush2.msra.mxu0 0.0
    %2002 = vmatprep.subr.mxu0 0.0
    %2003 = vmatpush2.msra.mxu0 0.0
    %2004 = vmatprep.subr.mxu0 0.0
    %2005 = vmatpush2.msra.mxu0 0.0
    %2006 = vmatprep.subr.mxu0 0.0
    %2007 = vmatpush2.msra.mxu0 0.0
    %2008 = vmatprep.subr.mxu0 0.0
    %2009 = vmatpush2.msra.mxu0 0.0
    %2010 = vmatprep.subr.mxu0 0.0
    %2011 = vmatpush2.msra.mxu0 0.0
    %2012 = vmatprep.subr.mxu0 0.0
    %2013 = vmatpush2.msra.mxu0 0.0
    %2014 = vmatprep.mubr.f32.mxu0 0.0
    %2015 = vmatmul.mubr.f32.gmra.mxu0 %v1948
    %v2016 = vpop.f32.mrf.mxu0
    %v2017 = vadd.f32 0.0, %v2016
    %v2018 = vpop.f32.mrf.mxu0
    %2019 = vdwg.mxu0
    %v2021 = vsel %vm1112, %v2017, 0
    %2023 = vmatprep.subr.mxu0 0.0
    %2024 = vmatpush1.msra.mxu0 0.0
    %2025 = vmatprep.subr.mxu0 0.0
    %2026 = vmatpush1.msra.mxu0 0.0
    %2027 = vmatprep.subr.mxu0 0.0
    %2028 = vmatpush1.msra.mxu0 0.0
    %2029 = vmatprep.subr.mxu0 0.0
    %2030 = vmatpush1.msra.mxu0 0.0
    %2031 = vmatprep.subr.mxu0 0.0
    %2032 = vmatpush1.msra.mxu0 0.0
    %2033 = vmatprep.subr.mxu0 0.0
    %2034 = vmatpush1.msra.mxu0 0.0
    %2035 = vmatprep.subr.mxu0 0.0
    %2036 = vmatpush1.msra.mxu0 0.0
    %2037 = vmatprep.subr.mxu0 0.0
    %2038 = vmatpush1.msra.mxu0 0.0
    %2039 = vmatprep.subr.mxu0 0.0
    %2040 = vmatpush1.msra.mxu0 0.0
    %2041 = vmatprep.subr.mxu0 0.0
    %2042 = vmatpush1.msra.mxu0 0.0
    %2043 = vmatprep.subr.mxu0 0.0
    %2044 = vmatpush1.msra.mxu0 0.0
    %2045 = vmatprep.subr.mxu0 0.0
    %2046 = vmatpush1.msra.mxu0 0.0
    %2047 = vmatprep.subr.mxu0 %v330
    %2048 = vmatpush1.msra.mxu0 %v329
    %2049 = vmatprep.subr.mxu0 %v328
    %2050 = vmatpush1.msra.mxu0 %v327
    %2051 = vmatprep.subr.mxu0 %v326
    %2052 = vmatpush1.msra.mxu0 %v325
    %2053 = vmatprep.subr.mxu0 %v324
    %2054 = vmatpush1.msra.mxu0 %v323
    %2055 = vmatprep.subr.mxu0 0.0
    %2056 = vmatpush2.msra.mxu0 0.0
    %2057 = vmatprep.subr.mxu0 0.0
    %2058 = vmatpush2.msra.mxu0 0.0
    %2059 = vmatprep.subr.mxu0 0.0
    %2060 = vmatpush2.msra.mxu0 0.0
    %2061 = vmatprep.subr.mxu0 0.0
    %2062 = vmatpush2.msra.mxu0 0.0
    %2063 = vmatprep.subr.mxu0 0.0
    %2064 = vmatpush2.msra.mxu0 0.0
    %2065 = vmatprep.subr.mxu0 0.0
    %2066 = vmatpush2.msra.mxu0 0.0
    %2067 = vmatprep.subr.mxu0 0.0
    %2068 = vmatpush2.msra.mxu0 0.0
    %2069 = vmatprep.subr.mxu0 0.0
    %2070 = vmatpush2.msra.mxu0 0.0
    %2071 = vmatprep.subr.mxu0 0.0
    %2072 = vmatpush2.msra.mxu0 0.0
    %2073 = vmatprep.subr.mxu0 0.0
    %2074 = vmatpush2.msra.mxu0 0.0
    %2075 = vmatprep.subr.mxu0 0.0
    %2076 = vmatpush2.msra.mxu0 0.0
    %2077 = vmatprep.subr.mxu0 0.0
    %2078 = vmatpush2.msra.mxu0 0.0
    %2079 = vmatprep.subr.mxu0 0.0
    %2080 = vmatpush2.msra.mxu0 0.0
    %2081 = vmatprep.subr.mxu0 0.0
    %2082 = vmatpush2.msra.mxu0 0.0
    %2083 = vmatprep.subr.mxu0 0.0
    %2084 = vmatpush2.msra.mxu0 0.0
    %2085 = vmatprep.subr.mxu0 0.0
    %2086 = vmatpush2.msra.mxu0 0.0
    %2087 = vmatprep.mubr.f32.mxu0 0.0
    %2088 = vmatmul.mubr.f32.gmra.mxu0 %v2021
    %v2089 = vpop.f32.mrf.mxu0
    %v2090 = vadd.f32 0.0, %v2089
    %v2091 = vpop.f32.mrf.mxu0
    %v2092 = vadd.f32 0.0, %v2091
    %2093 = vdwg.mxu0
    %v2094 = vadd.f32 %v1845, %v2090
    %v2095 = vadd.f32 %v1846, %v2092
    %v2097 = vsel %vm1112, %v773, 0
    %2099 = vmatprep.subr.mxu0 0.0
    %2100 = vmatpush1.msra.mxu0 0.0
    %2101 = vmatprep.subr.mxu0 0.0
    %2102 = vmatpush1.msra.mxu0 0.0
    %2103 = vmatprep.subr.mxu0 0.0
    %2104 = vmatpush1.msra.mxu0 0.0
    %2105 = vmatprep.subr.mxu0 0.0
    %2106 = vmatpush1.msra.mxu0 0.0
    %2107 = vmatprep.subr.mxu0 0.0
    %2108 = vmatpush1.msra.mxu0 0.0
    %2109 = vmatprep.subr.mxu0 0.0
    %2110 = vmatpush1.msra.mxu0 0.0
    %2111 = vmatprep.subr.mxu0 0.0
    %2112 = vmatpush1.msra.mxu0 0.0
    %2113 = vmatprep.subr.mxu0 0.0
    %2114 = vmatpush1.msra.mxu0 0.0
    %2115 = vmatprep.subr.mxu0 0.0
    %2116 = vmatpush1.msra.mxu0 0.0
    %2117 = vmatprep.subr.mxu0 0.0
    %2118 = vmatpush1.msra.mxu0 0.0
    %2119 = vmatprep.subr.mxu0 0.0
    %2120 = vmatpush1.msra.mxu0 0.0
    %2121 = vmatprep.subr.mxu0 0.0
    %2122 = vmatpush1.msra.mxu0 0.0
    %2123 = vmatprep.subr.mxu0 0.0
    %2124 = vmatpush1.msra.mxu0 %v937
    %2125 = vmatprep.subr.mxu0 0.0
    %2126 = vmatpush1.msra.mxu0 %v932
    %2127 = vmatprep.subr.mxu0 0.0
    %2128 = vmatpush1.msra.mxu0 %v927
    %2129 = vmatprep.subr.mxu0 0.0
    %2130 = vmatpush1.msra.mxu0 %v922
    %2131 = vmatprep.subr.mxu0 0.0
    %2132 = vmatpush2.msra.mxu0 0.0
    %2133 = vmatprep.subr.mxu0 0.0
    %2134 = vmatpush2.msra.mxu0 0.0
    %2135 = vmatprep.subr.mxu0 0.0
    %2136 = vmatpush2.msra.mxu0 0.0
    %2137 = vmatprep.subr.mxu0 0.0
    %2138 = vmatpush2.msra.mxu0 0.0
    %2139 = vmatprep.subr.mxu0 0.0
    %2140 = vmatpush2.msra.mxu0 0.0
    %2141 = vmatprep.subr.mxu0 0.0
    %2142 = vmatpush2.msra.mxu0 0.0
    %2143 = vmatprep.subr.mxu0 0.0
    %2144 = vmatpush2.msra.mxu0 0.0
    %2145 = vmatprep.subr.mxu0 0.0
    %2146 = vmatpush2.msra.mxu0 0.0
    %2147 = vmatprep.subr.mxu0 0.0
    %2148 = vmatpush2.msra.mxu0 0.0
    %2149 = vmatprep.subr.mxu0 0.0
    %2150 = vmatpush2.msra.mxu0 0.0
    %2151 = vmatprep.subr.mxu0 0.0
    %2152 = vmatpush2.msra.mxu0 0.0
    %2153 = vmatprep.subr.mxu0 0.0
    %2154 = vmatpush2.msra.mxu0 0.0
    %2155 = vmatprep.subr.mxu0 0.0
    %2156 = vmatpush2.msra.mxu0 0.0
    %2157 = vmatprep.subr.mxu0 0.0
    %2158 = vmatpush2.msra.mxu0 0.0
    %2159 = vmatprep.subr.mxu0 0.0
    %2160 = vmatpush2.msra.mxu0 0.0
    %2161 = vmatprep.subr.mxu0 0.0
    %2162 = vmatpush2.msra.mxu0 0.0
    %2163 = vmatprep.mubr.f32.mxu0 0.0
    %2164 = vmatmul.mubr.f32.gmra.mxu0 %v2097
    %v2165 = vpop.f32.mrf.mxu0
    %v2166 = vadd.f32 0.0, %v2165
    %v2167 = vpop.f32.mrf.mxu0
    %2168 = vdwg.mxu0
    %v2169 = vmul.f32 %v2166, 0.17677669
    %v2170 = vadd.f32 %v2169, %v1111
    %v2171 = vsel %vm1112, %v2170, -inf
    %2172 = vmax.xlane.f32.xlu0 %v2171
    %v2173 = vpop.xlane.xlu0 %2172
    %v2174 = vsub.f32 %v2170, %v2173
    %v2175 = vmul.f32 %v2174, 1.442695
    %v2176 = vpow.pop %v2175
    %v2177 = vsel %vm1112, %v2176, 0.0
    %2178 = vadd.xlane.f32.xlu0 %v2177
    %v2179 = vpop.xlane.xlu0 %2178
    %v2180 = vrcp.pop %v2179
    %v2181 = vmul.f32 1.0, %v2180
    %v2182 = vmul.f32 %v2176, %v2181
    %v2184 = vsel %vm1112, %v2182, 0
    %2186 = vmatprep.subr.mxu0 0.0
    %2187 = vmatpush1.msra.mxu0 0.0
    %2188 = vmatprep.subr.mxu0 0.0
    %2189 = vmatpush1.msra.mxu0 0.0
    %2190 = vmatprep.subr.mxu0 0.0
    %2191 = vmatpush1.msra.mxu0 0.0
    %2192 = vmatprep.subr.mxu0 0.0
    %2193 = vmatpush1.msra.mxu0 0.0
    %2194 = vmatprep.subr.mxu0 0.0
    %2195 = vmatpush1.msra.mxu0 0.0
    %2196 = vmatprep.subr.mxu0 0.0
    %2197 = vmatpush1.msra.mxu0 0.0
    %2198 = vmatprep.subr.mxu0 0.0
    %2199 = vmatpush1.msra.mxu0 0.0
    %2200 = vmatprep.subr.mxu0 0.0
    %2201 = vmatpush1.msra.mxu0 0.0
    %2202 = vmatprep.subr.mxu0 0.0
    %2203 = vmatpush1.msra.mxu0 0.0
    %2204 = vmatprep.subr.mxu0 0.0
    %2205 = vmatpush1.msra.mxu0 0.0
    %2206 = vmatprep.subr.mxu0 0.0
    %2207 = vmatpush1.msra.mxu0 0.0
    %2208 = vmatprep.subr.mxu0 0.0
    %2209 = vmatpush1.msra.mxu0 0.0
    %2210 = vmatprep.subr.mxu0 0.0
    %2211 = vmatpush1.msra.mxu0 %v1098
    %2212 = vmatprep.subr.mxu0 0.0
    %2213 = vmatpush1.msra.mxu0 %v1092
    %2214 = vmatprep.subr.mxu0 0.0
    %2215 = vmatpush1.msra.mxu0 %v1086
    %2216 = vmatprep.subr.mxu0 0.0
    %2217 = vmatpush1.msra.mxu0 %v1080
    %2218 = vmatprep.subr.mxu0 0.0
    %2219 = vmatpush2.msra.mxu0 0.0
    %2220 = vmatprep.subr.mxu0 0.0
    %2221 = vmatpush2.msra.mxu0 0.0
    %2222 = vmatprep.subr.mxu0 0.0
    %2223 = vmatpush2.msra.mxu0 0.0
    %2224 = vmatprep.subr.mxu0 0.0
    %2225 = vmatpush2.msra.mxu0 0.0
    %2226 = vmatprep.subr.mxu0 0.0
    %2227 = vmatpush2.msra.mxu0 0.0
    %2228 = vmatprep.subr.mxu0 0.0
    %2229 = vmatpush2.msra.mxu0 0.0
    %2230 = vmatprep.subr.mxu0 0.0
    %2231 = vmatpush2.msra.mxu0 0.0
    %2232 = vmatprep.subr.mxu0 0.0
    %2233 = vmatpush2.msra.mxu0 0.0
    %2234 = vmatprep.subr.mxu0 0.0
    %2235 = vmatpush2.msra.mxu0 0.0
    %2236 = vmatprep.subr.mxu0 0.0
    %2237 = vmatpush2.msra.mxu0 0.0
    %2238 = vmatprep.subr.mxu0 0.0
    %2239 = vmatpush2.msra.mxu0 0.0
    %2240 = vmatprep.subr.mxu0 0.0
    %2241 = vmatpush2.msra.mxu0 0.0
    %2242 = vmatprep.subr.mxu0 0.0
    %2243 = vmatpush2.msra.mxu0 0.0
    %2244 = vmatprep.subr.mxu0 0.0
    %2245 = vmatpush2.msra.mxu0 0.0
    %2246 = vmatprep.subr.mxu0 0.0
    %2247 = vmatpush2.msra.mxu0 0.0
    %2248 = vmatprep.subr.mxu0 0.0
    %2249 = vmatpush2.msra.mxu0 0.0
    %2250 = vmatprep.mubr.f32.mxu0 0.0
    %2251 = vmatmul.mubr.f32.gmra.mxu0 %v2184
    %v2252 = vpop.f32.mrf.mxu0
    %v2253 = vadd.f32 0.0, %v2252
    %v2254 = vpop.f32.mrf.mxu0
    %2255 = vdwg.mxu0
    %v2257 = vsel %vm1112, %v2253, 0
    %2259 = vmatprep.subr.mxu0 0.0
    %2260 = vmatpush1.msra.mxu0 0.0
    %2261 = vmatprep.subr.mxu0 0.0
    %2262 = vmatpush1.msra.mxu0 0.0
    %2263 = vmatprep.subr.mxu0 0.0
    %2264 = vmatpush1.msra.mxu0 0.0
    %2265 = vmatprep.subr.mxu0 0.0
    %2266 = vmatpush1.msra.mxu0 0.0
    %2267 = vmatprep.subr.mxu0 0.0
    %2268 = vmatpush1.msra.mxu0 0.0
    %2269 = vmatprep.subr.mxu0 0.0
    %2270 = vmatpush1.msra.mxu0 0.0
    %2271 = vmatprep.subr.mxu0 0.0
    %2272 = vmatpush1.msra.mxu0 0.0
    %2273 = vmatprep.subr.mxu0 0.0
    %2274 = vmatpush1.msra.mxu0 0.0
    %2275 = vmatprep.subr.mxu0 0.0
    %2276 = vmatpush1.msra.mxu0 0.0
    %2277 = vmatprep.subr.mxu0 0.0
    %2278 = vmatpush1.msra.mxu0 0.0
    %2279 = vmatprep.subr.mxu0 0.0
    %2280 = vmatpush1.msra.mxu0 0.0
    %2281 = vmatprep.subr.mxu0 0.0
    %2282 = vmatpush1.msra.mxu0 0.0
    %2283 = vmatprep.subr.mxu0 %v338
    %2284 = vmatpush1.msra.mxu0 %v337
    %2285 = vmatprep.subr.mxu0 %v336
    %2286 = vmatpush1.msra.mxu0 %v335
    %2287 = vmatprep.subr.mxu0 %v334
    %2288 = vmatpush1.msra.mxu0 %v333
    %2289 = vmatprep.subr.mxu0 %v332
    %2290 = vmatpush1.msra.mxu0 %v331
    %2291 = vmatprep.subr.mxu0 0.0
    %2292 = vmatpush2.msra.mxu0 0.0
    %2293 = vmatprep.subr.mxu0 0.0
    %2294 = vmatpush2.msra.mxu0 0.0
    %2295 = vmatprep.subr.mxu0 0.0
    %2296 = vmatpush2.msra.mxu0 0.0
    %2297 = vmatprep.subr.mxu0 0.0
    %2298 = vmatpush2.msra.mxu0 0.0
    %2299 = vmatprep.subr.mxu0 0.0
    %2300 = vmatpush2.msra.mxu0 0.0
    %2301 = vmatprep.subr.mxu0 0.0
    %2302 = vmatpush2.msra.mxu0 0.0
    %2303 = vmatprep.subr.mxu0 0.0
    %2304 = vmatpush2.msra.mxu0 0.0
    %2305 = vmatprep.subr.mxu0 0.0
    %2306 = vmatpush2.msra.mxu0 0.0
    %2307 = vmatprep.subr.mxu0 0.0
    %2308 = vmatpush2.msra.mxu0 0.0
    %2309 = vmatprep.subr.mxu0 0.0
    %2310 = vmatpush2.msra.mxu0 0.0
    %2311 = vmatprep.subr.mxu0 0.0
    %2312 = vmatpush2.msra.mxu0 0.0
    %2313 = vmatprep.subr.mxu0 0.0
    %2314 = vmatpush2.msra.mxu0 0.0
    %2315 = vmatprep.subr.mxu0 0.0
    %2316 = vmatpush2.msra.mxu0 0.0
    %2317 = vmatprep.subr.mxu0 0.0
    %2318 = vmatpush2.msra.mxu0 0.0
    %2319 = vmatprep.subr.mxu0 0.0
    %2320 = vmatpush2.msra.mxu0 0.0
    %2321 = vmatprep.subr.mxu0 0.0
    %2322 = vmatpush2.msra.mxu0 0.0
    %2323 = vmatprep.mubr.f32.mxu0 0.0
    %2324 = vmatmul.mubr.f32.gmra.mxu0 %v2257
    %v2325 = vpop.f32.mrf.mxu0
    %v2326 = vadd.f32 0.0, %v2325
    %v2327 = vpop.f32.mrf.mxu0
    %v2328 = vadd.f32 0.0, %v2327
    %2329 = vdwg.mxu0
    %v2330 = vadd.f32 %v2094, %v2326
    %v2331 = vadd.f32 %v2095, %v2328
    %2332 = vrot.lane.b32.xlu0 %v773, 96
    %v2333 = vpop.permute.xlu0 %2332
    %v2334 = vsel %vm1112, %v2333, 0
    %2336 = vmatprep.subr.mxu0 0.0
    %2337 = vmatpush1.msra.mxu0 0.0
    %2338 = vmatprep.subr.mxu0 0.0
    %2339 = vmatpush1.msra.mxu0 0.0
    %2340 = vmatprep.subr.mxu0 0.0
    %2341 = vmatpush1.msra.mxu0 0.0
    %2342 = vmatprep.subr.mxu0 0.0
    %2343 = vmatpush1.msra.mxu0 0.0
    %2344 = vmatprep.subr.mxu0 0.0
    %2345 = vmatpush1.msra.mxu0 0.0
    %2346 = vmatprep.subr.mxu0 0.0
    %2347 = vmatpush1.msra.mxu0 0.0
    %2348 = vmatprep.subr.mxu0 0.0
    %2349 = vmatpush1.msra.mxu0 0.0
    %2350 = vmatprep.subr.mxu0 0.0
    %2351 = vmatpush1.msra.mxu0 0.0
    %2352 = vmatprep.subr.mxu0 0.0
    %2353 = vmatpush1.msra.mxu0 0.0
    %2354 = vmatprep.subr.mxu0 0.0
    %2355 = vmatpush1.msra.mxu0 0.0
    %2356 = vmatprep.subr.mxu0 0.0
    %2357 = vmatpush1.msra.mxu0 0.0
    %2358 = vmatprep.subr.mxu0 0.0
    %2359 = vmatpush1.msra.mxu0 0.0
    %2360 = vmatprep.subr.mxu0 0.0
    %2361 = vmatpush1.msra.mxu0 %v957
    %2362 = vmatprep.subr.mxu0 0.0
    %2363 = vmatpush1.msra.mxu0 %v952
    %2364 = vmatprep.subr.mxu0 0.0
    %2365 = vmatpush1.msra.mxu0 %v947
    %2366 = vmatprep.subr.mxu0 0.0
    %2367 = vmatpush1.msra.mxu0 %v942
    %2368 = vmatprep.subr.mxu0 0.0
    %2369 = vmatpush2.msra.mxu0 0.0
    %2370 = vmatprep.subr.mxu0 0.0
    %2371 = vmatpush2.msra.mxu0 0.0
    %2372 = vmatprep.subr.mxu0 0.0
    %2373 = vmatpush2.msra.mxu0 0.0
    %2374 = vmatprep.subr.mxu0 0.0
    %2375 = vmatpush2.msra.mxu0 0.0
    %2376 = vmatprep.subr.mxu0 0.0
    %2377 = vmatpush2.msra.mxu0 0.0
    %2378 = vmatprep.subr.mxu0 0.0
    %2379 = vmatpush2.msra.mxu0 0.0
    %2380 = vmatprep.subr.mxu0 0.0
    %2381 = vmatpush2.msra.mxu0 0.0
    %2382 = vmatprep.subr.mxu0 0.0
    %2383 = vmatpush2.msra.mxu0 0.0
    %2384 = vmatprep.subr.mxu0 0.0
    %2385 = vmatpush2.msra.mxu0 0.0
    %2386 = vmatprep.subr.mxu0 0.0
    %2387 = vmatpush2.msra.mxu0 0.0
    %2388 = vmatprep.subr.mxu0 0.0
    %2389 = vmatpush2.msra.mxu0 0.0
    %2390 = vmatprep.subr.mxu0 0.0
    %2391 = vmatpush2.msra.mxu0 0.0
    %2392 = vmatprep.subr.mxu0 0.0
    %2393 = vmatpush2.msra.mxu0 0.0
    %2394 = vmatprep.subr.mxu0 0.0
    %2395 = vmatpush2.msra.mxu0 0.0
    %2396 = vmatprep.subr.mxu0 0.0
    %2397 = vmatpush2.msra.mxu0 0.0
    %2398 = vmatprep.subr.mxu0 0.0
    %2399 = vmatpush2.msra.mxu0 0.0
    %2400 = vmatprep.mubr.f32.mxu0 0.0
    %2401 = vmatmul.mubr.f32.gmra.mxu0 %v2334
    %v2402 = vpop.f32.mrf.mxu0
    %v2403 = vadd.f32 0.0, %v2402
    %v2404 = vpop.f32.mrf.mxu0
    %2405 = vdwg.mxu0
    %v2406 = vmul.f32 %v2403, 0.17677669
    %v2407 = vadd.f32 %v2406, %v1111
    %v2408 = vsel %vm1112, %v2407, -inf
    %2409 = vmax.xlane.f32.xlu0 %v2408
    %v2410 = vpop.xlane.xlu0 %2409
    %v2411 = vsub.f32 %v2407, %v2410
    %v2412 = vmul.f32 %v2411, 1.442695
    %v2413 = vpow.pop %v2412
    %v2414 = vsel %vm1112, %v2413, 0.0
    %2415 = vadd.xlane.f32.xlu0 %v2414
    %v2416 = vpop.xlane.xlu0 %2415
    %v2417 = vrcp.pop %v2416
    %v2418 = vmul.f32 1.0, %v2417
    %v2419 = vmul.f32 %v2413, %v2418
    %2424 = vrot.lane.b32.xlu0 %v1080, 96
    %v2425 = vpop.permute.xlu0 %2424
    %2426 = vrot.lane.b32.xlu0 %v1086, 96
    %v2427 = vpop.permute.xlu0 %2426
    %2428 = vrot.lane.b32.xlu0 %v1092, 96
    %v2429 = vpop.permute.xlu0 %2428
    %2430 = vrot.lane.b32.xlu0 %v1098, 96
    %v2431 = vpop.permute.xlu0 %2430
    %v2437 = vsel %vm1112, %v2419, 0
    %2439 = vmatprep.subr.mxu0 0.0
    %2440 = vmatpush1.msra.mxu0 0.0
    %2441 = vmatprep.subr.mxu0 0.0
    %2442 = vmatpush1.msra.mxu0 0.0
    %2443 = vmatprep.subr.mxu0 0.0
    %2444 = vmatpush1.msra.mxu0 0.0
    %2445 = vmatprep.subr.mxu0 0.0
    %2446 = vmatpush1.msra.mxu0 0.0
    %2447 = vmatprep.subr.mxu0 0.0
    %2448 = vmatpush1.msra.mxu0 0.0
    %2449 = vmatprep.subr.mxu0 0.0
    %2450 = vmatpush1.msra.mxu0 0.0
    %2451 = vmatprep.subr.mxu0 0.0
    %2452 = vmatpush1.msra.mxu0 0.0
    %2453 = vmatprep.subr.mxu0 0.0
    %2454 = vmatpush1.msra.mxu0 0.0
    %2455 = vmatprep.subr.mxu0 0.0
    %2456 = vmatpush1.msra.mxu0 0.0
    %2457 = vmatprep.subr.mxu0 0.0
    %2458 = vmatpush1.msra.mxu0 0.0
    %2459 = vmatprep.subr.mxu0 0.0
    %2460 = vmatpush1.msra.mxu0 0.0
    %2461 = vmatprep.subr.mxu0 0.0
    %2462 = vmatpush1.msra.mxu0 0.0
    %2463 = vmatprep.subr.mxu0 0.0
    %2464 = vmatpush1.msra.mxu0 %v2431
    %2465 = vmatprep.subr.mxu0 0.0
    %2466 = vmatpush1.msra.mxu0 %v2429
    %2467 = vmatprep.subr.mxu0 0.0
    %2468 = vmatpush1.msra.mxu0 %v2427
    %2469 = vmatprep.subr.mxu0 0.0
    %2470 = vmatpush1.msra.mxu0 %v2425
    %2471 = vmatprep.subr.mxu0 0.0
    %2472 = vmatpush2.msra.mxu0 0.0
    %2473 = vmatprep.subr.mxu0 0.0
    %2474 = vmatpush2.msra.mxu0 0.0
    %2475 = vmatprep.subr.mxu0 0.0
    %2476 = vmatpush2.msra.mxu0 0.0
    %2477 = vmatprep.subr.mxu0 0.0
    %2478 = vmatpush2.msra.mxu0 0.0
    %2479 = vmatprep.subr.mxu0 0.0
    %2480 = vmatpush2.msra.mxu0 0.0
    %2481 = vmatprep.subr.mxu0 0.0
    %2482 = vmatpush2.msra.mxu0 0.0
    %2483 = vmatprep.subr.mxu0 0.0
    %2484 = vmatpush2.msra.mxu0 0.0
    %2485 = vmatprep.subr.mxu0 0.0
    %2486 = vmatpush2.msra.mxu0 0.0
    %2487 = vmatprep.subr.mxu0 0.0
    %2488 = vmatpush2.msra.mxu0 0.0
    %2489 = vmatprep.subr.mxu0 0.0
    %2490 = vmatpush2.msra.mxu0 0.0
    %2491 = vmatprep.subr.mxu0 0.0
    %2492 = vmatpush2.msra.mxu0 0.0
    %2493 = vmatprep.subr.mxu0 0.0
    %2494 = vmatpush2.msra.mxu0 0.0
    %2495 = vmatprep.subr.mxu0 0.0
    %2496 = vmatpush2.msra.mxu0 0.0
    %2497 = vmatprep.subr.mxu0 0.0
    %2498 = vmatpush2.msra.mxu0 0.0
    %2499 = vmatprep.subr.mxu0 0.0
    %2500 = vmatpush2.msra.mxu0 0.0
    %2501 = vmatprep.subr.mxu0 0.0
    %2502 = vmatpush2.msra.mxu0 0.0
    %2503 = vmatprep.mubr.f32.mxu0 0.0
    %2504 = vmatmul.mubr.f32.gmra.mxu0 %v2437
    %v2505 = vpop.f32.mrf.mxu0
    %v2506 = vadd.f32 0.0, %v2505
    %v2507 = vpop.f32.mrf.mxu0
    %2508 = vdwg.mxu0
    %v2510 = vsel %vm1112, %v2506, 0
    %2512 = vmatprep.subr.mxu0 0.0
    %2513 = vmatpush1.msra.mxu0 0.0
    %2514 = vmatprep.subr.mxu0 0.0
    %2515 = vmatpush1.msra.mxu0 0.0
    %2516 = vmatprep.subr.mxu0 0.0
    %2517 = vmatpush1.msra.mxu0 0.0
    %2518 = vmatprep.subr.mxu0 0.0
    %2519 = vmatpush1.msra.mxu0 0.0
    %2520 = vmatprep.subr.mxu0 0.0
    %2521 = vmatpush1.msra.mxu0 0.0
    %2522 = vmatprep.subr.mxu0 0.0
    %2523 = vmatpush1.msra.mxu0 0.0
    %2524 = vmatprep.subr.mxu0 0.0
    %2525 = vmatpush1.msra.mxu0 0.0
    %2526 = vmatprep.subr.mxu0 0.0
    %2527 = vmatpush1.msra.mxu0 0.0
    %2528 = vmatprep.subr.mxu0 0.0
    %2529 = vmatpush1.msra.mxu0 0.0
    %2530 = vmatprep.subr.mxu0 0.0
    %2531 = vmatpush1.msra.mxu0 0.0
    %2532 = vmatprep.subr.mxu0 0.0
    %2533 = vmatpush1.msra.mxu0 0.0
    %2534 = vmatprep.subr.mxu0 0.0
    %2535 = vmatpush1.msra.mxu0 0.0
    %2536 = vmatprep.subr.mxu0 %v346
    %2537 = vmatpush1.msra.mxu0 %v345
    %2538 = vmatprep.subr.mxu0 %v344
    %2539 = vmatpush1.msra.mxu0 %v343
    %2540 = vmatprep.subr.mxu0 %v342
    %2541 = vmatpush1.msra.mxu0 %v341
    %2542 = vmatprep.subr.mxu0 %v340
    %2543 = vmatpush1.msra.mxu0 %v339
    %2544 = vmatprep.subr.mxu0 0.0
    %2545 = vmatpush2.msra.mxu0 0.0
    %2546 = vmatprep.subr.mxu0 0.0
    %2547 = vmatpush2.msra.mxu0 0.0
    %2548 = vmatprep.subr.mxu0 0.0
    %2549 = vmatpush2.msra.mxu0 0.0
    %2550 = vmatprep.subr.mxu0 0.0
    %2551 = vmatpush2.msra.mxu0 0.0
    %2552 = vmatprep.subr.mxu0 0.0
    %2553 = vmatpush2.msra.mxu0 0.0
    %2554 = vmatprep.subr.mxu0 0.0
    %2555 = vmatpush2.msra.mxu0 0.0
    %2556 = vmatprep.subr.mxu0 0.0
    %2557 = vmatpush2.msra.mxu0 0.0
    %2558 = vmatprep.subr.mxu0 0.0
    %2559 = vmatpush2.msra.mxu0 0.0
    %2560 = vmatprep.subr.mxu0 0.0
    %2561 = vmatpush2.msra.mxu0 0.0
    %2562 = vmatprep.subr.mxu0 0.0
    %2563 = vmatpush2.msra.mxu0 0.0
    %2564 = vmatprep.subr.mxu0 0.0
    %2565 = vmatpush2.msra.mxu0 0.0
    %2566 = vmatprep.subr.mxu0 0.0
    %2567 = vmatpush2.msra.mxu0 0.0
    %2568 = vmatprep.subr.mxu0 0.0
    %2569 = vmatpush2.msra.mxu0 0.0
    %2570 = vmatprep.subr.mxu0 0.0
    %2571 = vmatpush2.msra.mxu0 0.0
    %2572 = vmatprep.subr.mxu0 0.0
    %2573 = vmatpush2.msra.mxu0 0.0
    %2574 = vmatprep.subr.mxu0 0.0
    %2575 = vmatpush2.msra.mxu0 0.0
    %2576 = vmatprep.mubr.f32.mxu0 0.0
    %2577 = vmatmul.mubr.f32.gmra.mxu0 %v2510
    %v2578 = vpop.f32.mrf.mxu0
    %v2579 = vadd.f32 0.0, %v2578
    %v2580 = vpop.f32.mrf.mxu0
    %v2581 = vadd.f32 0.0, %v2580
    %2582 = vdwg.mxu0
    %v2583 = vadd.f32 %v2330, %v2579
    %v2584 = vadd.f32 %v2331, %v2581
    %2585 = vrot.lane.b32.xlu0 %v773, 64
    %v2586 = vpop.permute.xlu0 %2585
    %v2587 = vsel %vm1112, %v2586, 0
    %2589 = vmatprep.subr.mxu0 0.0
    %2590 = vmatpush1.msra.mxu0 0.0
    %2591 = vmatprep.subr.mxu0 0.0
    %2592 = vmatpush1.msra.mxu0 0.0
    %2593 = vmatprep.subr.mxu0 0.0
    %2594 = vmatpush1.msra.mxu0 0.0
    %2595 = vmatprep.subr.mxu0 0.0
    %2596 = vmatpush1.msra.mxu0 0.0
    %2597 = vmatprep.subr.mxu0 0.0
    %2598 = vmatpush1.msra.mxu0 0.0
    %2599 = vmatprep.subr.mxu0 0.0
    %2600 = vmatpush1.msra.mxu0 0.0
    %2601 = vmatprep.subr.mxu0 0.0
    %2602 = vmatpush1.msra.mxu0 0.0
    %2603 = vmatprep.subr.mxu0 0.0
    %2604 = vmatpush1.msra.mxu0 0.0
    %2605 = vmatprep.subr.mxu0 0.0
    %2606 = vmatpush1.msra.mxu0 0.0
    %2607 = vmatprep.subr.mxu0 0.0
    %2608 = vmatpush1.msra.mxu0 0.0
    %2609 = vmatprep.subr.mxu0 0.0
    %2610 = vmatpush1.msra.mxu0 0.0
    %2611 = vmatprep.subr.mxu0 0.0
    %2612 = vmatpush1.msra.mxu0 0.0
    %2613 = vmatprep.subr.mxu0 0.0
    %2614 = vmatpush1.msra.mxu0 %v977
    %2615 = vmatprep.subr.mxu0 0.0
    %2616 = vmatpush1.msra.mxu0 %v972
    %2617 = vmatprep.subr.mxu0 0.0
    %2618 = vmatpush1.msra.mxu0 %v967
    %2619 = vmatprep.subr.mxu0 0.0
    %2620 = vmatpush1.msra.mxu0 %v962
    %2621 = vmatprep.subr.mxu0 0.0
    %2622 = vmatpush2.msra.mxu0 0.0
    %2623 = vmatprep.subr.mxu0 0.0
    %2624 = vmatpush2.msra.mxu0 0.0
    %2625 = vmatprep.subr.mxu0 0.0
    %2626 = vmatpush2.msra.mxu0 0.0
    %2627 = vmatprep.subr.mxu0 0.0
    %2628 = vmatpush2.msra.mxu0 0.0
    %2629 = vmatprep.subr.mxu0 0.0
    %2630 = vmatpush2.msra.mxu0 0.0
    %2631 = vmatprep.subr.mxu0 0.0
    %2632 = vmatpush2.msra.mxu0 0.0
    %2633 = vmatprep.subr.mxu0 0.0
    %2634 = vmatpush2.msra.mxu0 0.0
    %2635 = vmatprep.subr.mxu0 0.0
    %2636 = vmatpush2.msra.mxu0 0.0
    %2637 = vmatprep.subr.mxu0 0.0
    %2638 = vmatpush2.msra.mxu0 0.0
    %2639 = vmatprep.subr.mxu0 0.0
    %2640 = vmatpush2.msra.mxu0 0.0
    %2641 = vmatprep.subr.mxu0 0.0
    %2642 = vmatpush2.msra.mxu0 0.0
    %2643 = vmatprep.subr.mxu0 0.0
    %2644 = vmatpush2.msra.mxu0 0.0
    %2645 = vmatprep.subr.mxu0 0.0
    %2646 = vmatpush2.msra.mxu0 0.0
    %2647 = vmatprep.subr.mxu0 0.0
    %2648 = vmatpush2.msra.mxu0 0.0
    %2649 = vmatprep.subr.mxu0 0.0
    %2650 = vmatpush2.msra.mxu0 0.0
    %2651 = vmatprep.subr.mxu0 0.0
    %2652 = vmatpush2.msra.mxu0 0.0
    %2653 = vmatprep.mubr.f32.mxu0 0.0
    %2654 = vmatmul.mubr.f32.gmra.mxu0 %v2587
    %v2655 = vpop.f32.mrf.mxu0
    %v2656 = vadd.f32 0.0, %v2655
    %v2657 = vpop.f32.mrf.mxu0
    %2658 = vdwg.mxu0
    %v2659 = vmul.f32 %v2656, 0.17677669
    %v2660 = vadd.f32 %v2659, %v1111
    %v2661 = vsel %vm1112, %v2660, -inf
    %2662 = vmax.xlane.f32.xlu0 %v2661
    %v2663 = vpop.xlane.xlu0 %2662
    %v2664 = vsub.f32 %v2660, %v2663
    %v2665 = vmul.f32 %v2664, 1.442695
    %v2666 = vpow.pop %v2665
    %v2667 = vsel %vm1112, %v2666, 0.0
    %2668 = vadd.xlane.f32.xlu0 %v2667
    %v2669 = vpop.xlane.xlu0 %2668
    %v2670 = vrcp.pop %v2669
    %v2671 = vmul.f32 1.0, %v2670
    %v2672 = vmul.f32 %v2666, %v2671
    %2673 = vrot.lane.b32.xlu0 %v1080, 64
    %v2674 = vpop.permute.xlu0 %2673
    %2675 = vrot.lane.b32.xlu0 %v1086, 64
    %v2676 = vpop.permute.xlu0 %2675
    %2677 = vrot.lane.b32.xlu0 %v1092, 64
    %v2678 = vpop.permute.xlu0 %2677
    %2679 = vrot.lane.b32.xlu0 %v1098, 64
    %v2680 = vpop.permute.xlu0 %2679
    %v2686 = vsel %vm1112, %v2672, 0
    %2688 = vmatprep.subr.mxu0 0.0
    %2689 = vmatpush1.msra.mxu0 0.0
    %2690 = vmatprep.subr.mxu0 0.0
    %2691 = vmatpush1.msra.mxu0 0.0
    %2692 = vmatprep.subr.mxu0 0.0
    %2693 = vmatpush1.msra.mxu0 0.0
    %2694 = vmatprep.subr.mxu0 0.0
    %2695 = vmatpush1.msra.mxu0 0.0
    %2696 = vmatprep.subr.mxu0 0.0
    %2697 = vmatpush1.msra.mxu0 0.0
    %2698 = vmatprep.subr.mxu0 0.0
    %2699 = vmatpush1.msra.mxu0 0.0
    %2700 = vmatprep.subr.mxu0 0.0
    %2701 = vmatpush1.msra.mxu0 0.0
    %2702 = vmatprep.subr.mxu0 0.0
    %2703 = vmatpush1.msra.mxu0 0.0
    %2704 = vmatprep.subr.mxu0 0.0
    %2705 = vmatpush1.msra.mxu0 0.0
    %2706 = vmatprep.subr.mxu0 0.0
    %2707 = vmatpush1.msra.mxu0 0.0
    %2708 = vmatprep.subr.mxu0 0.0
    %2709 = vmatpush1.msra.mxu0 0.0
    %2710 = vmatprep.subr.mxu0 0.0
    %2711 = vmatpush1.msra.mxu0 0.0
    %2712 = vmatprep.subr.mxu0 0.0
    %2713 = vmatpush1.msra.mxu0 %v2680
    %2714 = vmatprep.subr.mxu0 0.0
    %2715 = vmatpush1.msra.mxu0 %v2678
    %2716 = vmatprep.subr.mxu0 0.0
    %2717 = vmatpush1.msra.mxu0 %v2676
    %2718 = vmatprep.subr.mxu0 0.0
    %2719 = vmatpush1.msra.mxu0 %v2674
    %2720 = vmatprep.subr.mxu0 0.0
    %2721 = vmatpush2.msra.mxu0 0.0
    %2722 = vmatprep.subr.mxu0 0.0
    %2723 = vmatpush2.msra.mxu0 0.0
    %2724 = vmatprep.subr.mxu0 0.0
    %2725 = vmatpush2.msra.mxu0 0.0
    %2726 = vmatprep.subr.mxu0 0.0
    %2727 = vmatpush2.msra.mxu0 0.0
    %2728 = vmatprep.subr.mxu0 0.0
    %2729 = vmatpush2.msra.mxu0 0.0
    %2730 = vmatprep.subr.mxu0 0.0
    %2731 = vmatpush2.msra.mxu0 0.0
    %2732 = vmatprep.subr.mxu0 0.0
    %2733 = vmatpush2.msra.mxu0 0.0
    %2734 = vmatprep.subr.mxu0 0.0
    %2735 = vmatpush2.msra.mxu0 0.0
    %2736 = vmatprep.subr.mxu0 0.0
    %2737 = vmatpush2.msra.mxu0 0.0
    %2738 = vmatprep.subr.mxu0 0.0
    %2739 = vmatpush2.msra.mxu0 0.0
    %2740 = vmatprep.subr.mxu0 0.0
    %2741 = vmatpush2.msra.mxu0 0.0
    %2742 = vmatprep.subr.mxu0 0.0
    %2743 = vmatpush2.msra.mxu0 0.0
    %2744 = vmatprep.subr.mxu0 0.0
    %2745 = vmatpush2.msra.mxu0 0.0
    %2746 = vmatprep.subr.mxu0 0.0
    %2747 = vmatpush2.msra.mxu0 0.0
    %2748 = vmatprep.subr.mxu0 0.0
    %2749 = vmatpush2.msra.mxu0 0.0
    %2750 = vmatprep.subr.mxu0 0.0
    %2751 = vmatpush2.msra.mxu0 0.0
    %2752 = vmatprep.mubr.f32.mxu0 0.0
    %2753 = vmatmul.mubr.f32.gmra.mxu0 %v2686
    %v2754 = vpop.f32.mrf.mxu0
    %v2755 = vadd.f32 0.0, %v2754
    %v2756 = vpop.f32.mrf.mxu0
    %2757 = vdwg.mxu0
    %v2759 = vsel %vm1112, %v2755, 0
    %2761 = vmatprep.subr.mxu0 0.0
    %2762 = vmatpush1.msra.mxu0 0.0
    %2763 = vmatprep.subr.mxu0 0.0
    %2764 = vmatpush1.msra.mxu0 0.0
    %2765 = vmatprep.subr.mxu0 0.0
    %2766 = vmatpush1.msra.mxu0 0.0
    %2767 = vmatprep.subr.mxu0 0.0
    %2768 = vmatpush1.msra.mxu0 0.0
    %2769 = vmatprep.subr.mxu0 0.0
    %2770 = vmatpush1.msra.mxu0 0.0
    %2771 = vmatprep.subr.mxu0 0.0
    %2772 = vmatpush1.msra.mxu0 0.0
    %2773 = vmatprep.subr.mxu0 0.0
    %2774 = vmatpush1.msra.mxu0 0.0
    %2775 = vmatprep.subr.mxu0 0.0
    %2776 = vmatpush1.msra.mxu0 0.0
    %2777 = vmatprep.subr.mxu0 0.0
    %2778 = vmatpush1.msra.mxu0 0.0
    %2779 = vmatprep.subr.mxu0 0.0
    %2780 = vmatpush1.msra.mxu0 0.0
    %2781 = vmatprep.subr.mxu0 0.0
    %2782 = vmatpush1.msra.mxu0 0.0
    %2783 = vmatprep.subr.mxu0 0.0
    %2784 = vmatpush1.msra.mxu0 0.0
    %2785 = vmatprep.subr.mxu0 %v354
    %2786 = vmatpush1.msra.mxu0 %v353
    %2787 = vmatprep.subr.mxu0 %v352
    %2788 = vmatpush1.msra.mxu0 %v351
    %2789 = vmatprep.subr.mxu0 %v350
    %2790 = vmatpush1.msra.mxu0 %v349
    %2791 = vmatprep.subr.mxu0 %v348
    %2792 = vmatpush1.msra.mxu0 %v347
    %2793 = vmatprep.subr.mxu0 0.0
    %2794 = vmatpush2.msra.mxu0 0.0
    %2795 = vmatprep.subr.mxu0 0.0
    %2796 = vmatpush2.msra.mxu0 0.0
    %2797 = vmatprep.subr.mxu0 0.0
    %2798 = vmatpush2.msra.mxu0 0.0
    %2799 = vmatprep.subr.mxu0 0.0
    %2800 = vmatpush2.msra.mxu0 0.0
    %2801 = vmatprep.subr.mxu0 0.0
    %2802 = vmatpush2.msra.mxu0 0.0
    %2803 = vmatprep.subr.mxu0 0.0
    %2804 = vmatpush2.msra.mxu0 0.0
    %2805 = vmatprep.subr.mxu0 0.0
    %2806 = vmatpush2.msra.mxu0 0.0
    %2807 = vmatprep.subr.mxu0 0.0
    %2808 = vmatpush2.msra.mxu0 0.0
    %2809 = vmatprep.subr.mxu0 0.0
    %2810 = vmatpush2.msra.mxu0 0.0
    %2811 = vmatprep.subr.mxu0 0.0
    %2812 = vmatpush2.msra.mxu0 0.0
    %2813 = vmatprep.subr.mxu0 0.0
    %2814 = vmatpush2.msra.mxu0 0.0
    %2815 = vmatprep.subr.mxu0 0.0
    %2816 = vmatpush2.msra.mxu0 0.0
    %2817 = vmatprep.subr.mxu0 0.0
    %2818 = vmatpush2.msra.mxu0 0.0
    %2819 = vmatprep.subr.mxu0 0.0
    %2820 = vmatpush2.msra.mxu0 0.0
    %2821 = vmatprep.subr.mxu0 0.0
    %2822 = vmatpush2.msra.mxu0 0.0
    %2823 = vmatprep.subr.mxu0 0.0
    %2824 = vmatpush2.msra.mxu0 0.0
    %2825 = vmatprep.mubr.f32.mxu0 0.0
    %2826 = vmatmul.mubr.f32.gmra.mxu0 %v2759
    %v2827 = vpop.f32.mrf.mxu0
    %v2828 = vadd.f32 0.0, %v2827
    %v2829 = vpop.f32.mrf.mxu0
    %v2830 = vadd.f32 0.0, %v2829
    %2831 = vdwg.mxu0
    %v2832 = vadd.f32 %v2583, %v2828
    %v2833 = vadd.f32 %v2584, %v2830
    %2834 = vrot.lane.b32.xlu0 %v773, 32
    %v2835 = vpop.permute.xlu0 %2834
    %v2836 = vsel %vm1112, %v2835, 0
    %2838 = vmatprep.subr.mxu0 0.0
    %2839 = vmatpush1.msra.mxu0 0.0
    %2840 = vmatprep.subr.mxu0 0.0
    %2841 = vmatpush1.msra.mxu0 0.0
    %2842 = vmatprep.subr.mxu0 0.0
    %2843 = vmatpush1.msra.mxu0 0.0
    %2844 = vmatprep.subr.mxu0 0.0
    %2845 = vmatpush1.msra.mxu0 0.0
    %2846 = vmatprep.subr.mxu0 0.0
    %2847 = vmatpush1.msra.mxu0 0.0
    %2848 = vmatprep.subr.mxu0 0.0
    %2849 = vmatpush1.msra.mxu0 0.0
    %2850 = vmatprep.subr.mxu0 0.0
    %2851 = vmatpush1.msra.mxu0 0.0
    %2852 = vmatprep.subr.mxu0 0.0
    %2853 = vmatpush1.msra.mxu0 0.0
    %2854 = vmatprep.subr.mxu0 0.0
    %2855 = vmatpush1.msra.mxu0 0.0
    %2856 = vmatprep.subr.mxu0 0.0
    %2857 = vmatpush1.msra.mxu0 0.0
    %2858 = vmatprep.subr.mxu0 0.0
    %2859 = vmatpush1.msra.mxu0 0.0
    %2860 = vmatprep.subr.mxu0 0.0
    %2861 = vmatpush1.msra.mxu0 0.0
    %2862 = vmatprep.subr.mxu0 0.0
    %2863 = vmatpush1.msra.mxu0 %v997
    %2864 = vmatprep.subr.mxu0 0.0
    %2865 = vmatpush1.msra.mxu0 %v992
    %2866 = vmatprep.subr.mxu0 0.0
    %2867 = vmatpush1.msra.mxu0 %v987
    %2868 = vmatprep.subr.mxu0 0.0
    %2869 = vmatpush1.msra.mxu0 %v982
    %2870 = vmatprep.subr.mxu0 0.0
    %2871 = vmatpush2.msra.mxu0 0.0
    %2872 = vmatprep.subr.mxu0 0.0
    %2873 = vmatpush2.msra.mxu0 0.0
    %2874 = vmatprep.subr.mxu0 0.0
    %2875 = vmatpush2.msra.mxu0 0.0
    %2876 = vmatprep.subr.mxu0 0.0
    %2877 = vmatpush2.msra.mxu0 0.0
    %2878 = vmatprep.subr.mxu0 0.0
    %2879 = vmatpush2.msra.mxu0 0.0
    %2880 = vmatprep.subr.mxu0 0.0
    %2881 = vmatpush2.msra.mxu0 0.0
    %2882 = vmatprep.subr.mxu0 0.0
    %2883 = vmatpush2.msra.mxu0 0.0
    %2884 = vmatprep.subr.mxu0 0.0
    %2885 = vmatpush2.msra.mxu0 0.0
    %2886 = vmatprep.subr.mxu0 0.0
    %2887 = vmatpush2.msra.mxu0 0.0
    %2888 = vmatprep.subr.mxu0 0.0
    %2889 = vmatpush2.msra.mxu0 0.0
    %2890 = vmatprep.subr.mxu0 0.0
    %2891 = vmatpush2.msra.mxu0 0.0
    %2892 = vmatprep.subr.mxu0 0.0
    %2893 = vmatpush2.msra.mxu0 0.0
    %2894 = vmatprep.subr.mxu0 0.0
    %2895 = vmatpush2.msra.mxu0 0.0
    %2896 = vmatprep.subr.mxu0 0.0
    %2897 = vmatpush2.msra.mxu0 0.0
    %2898 = vmatprep.subr.mxu0 0.0
    %2899 = vmatpush2.msra.mxu0 0.0
    %2900 = vmatprep.subr.mxu0 0.0
    %2901 = vmatpush2.msra.mxu0 0.0
    %2902 = vmatprep.mubr.f32.mxu0 0.0
    %2903 = vmatmul.mubr.f32.gmra.mxu0 %v2836
    %v2904 = vpop.f32.mrf.mxu0
    %v2905 = vadd.f32 0.0, %v2904
    %v2906 = vpop.f32.mrf.mxu0
    %2907 = vdwg.mxu0
    %v2908 = vmul.f32 %v2905, 0.17677669
    %v2909 = vadd.f32 %v2908, %v1111
    %v2910 = vsel %vm1112, %v2909, -inf
    %2911 = vmax.xlane.f32.xlu0 %v2910
    %v2912 = vpop.xlane.xlu0 %2911
    %v2913 = vsub.f32 %v2909, %v2912
    %v2914 = vmul.f32 %v2913, 1.442695
    %v2915 = vpow.pop %v2914
    %v2916 = vsel %vm1112, %v2915, 0.0
    %2917 = vadd.xlane.f32.xlu0 %v2916
    %v2918 = vpop.xlane.xlu0 %2917
    %v2919 = vrcp.pop %v2918
    %v2920 = vmul.f32 1.0, %v2919
    %v2921 = vmul.f32 %v2915, %v2920
    %2922 = vrot.lane.b32.xlu0 %v1080, 32
    %v2923 = vpop.permute.xlu0 %2922
    %2924 = vrot.lane.b32.xlu0 %v1086, 32
    %v2925 = vpop.permute.xlu0 %2924
    %2926 = vrot.lane.b32.xlu0 %v1092, 32
    %v2927 = vpop.permute.xlu0 %2926
    %2928 = vrot.lane.b32.xlu0 %v1098, 32
    %v2929 = vpop.permute.xlu0 %2928
    %v2935 = vsel %vm1112, %v2921, 0
    %2937 = vmatprep.subr.mxu0 0.0
    %2938 = vmatpush1.msra.mxu0 0.0
    %2939 = vmatprep.subr.mxu0 0.0
    %2940 = vmatpush1.msra.mxu0 0.0
    %2941 = vmatprep.subr.mxu0 0.0
    %2942 = vmatpush1.msra.mxu0 0.0
    %2943 = vmatprep.subr.mxu0 0.0
    %2944 = vmatpush1.msra.mxu0 0.0
    %2945 = vmatprep.subr.mxu0 0.0
    %2946 = vmatpush1.msra.mxu0 0.0
    %2947 = vmatprep.subr.mxu0 0.0
    %2948 = vmatpush1.msra.mxu0 0.0
    %2949 = vmatprep.subr.mxu0 0.0
    %2950 = vmatpush1.msra.mxu0 0.0
    %2951 = vmatprep.subr.mxu0 0.0
    %2952 = vmatpush1.msra.mxu0 0.0
    %2953 = vmatprep.subr.mxu0 0.0
    %2954 = vmatpush1.msra.mxu0 0.0
    %2955 = vmatprep.subr.mxu0 0.0
    %2956 = vmatpush1.msra.mxu0 0.0
    %2957 = vmatprep.subr.mxu0 0.0
    %2958 = vmatpush1.msra.mxu0 0.0
    %2959 = vmatprep.subr.mxu0 0.0
    %2960 = vmatpush1.msra.mxu0 0.0
    %2961 = vmatprep.subr.mxu0 0.0
    %2962 = vmatpush1.msra.mxu0 %v2929
    %2963 = vmatprep.subr.mxu0 0.0
    %2964 = vmatpush1.msra.mxu0 %v2927
    %2965 = vmatprep.subr.mxu0 0.0
    %2966 = vmatpush1.msra.mxu0 %v2925
    %2967 = vmatprep.subr.mxu0 0.0
    %2968 = vmatpush1.msra.mxu0 %v2923
    %2969 = vmatprep.subr.mxu0 0.0
    %2970 = vmatpush2.msra.mxu0 0.0
    %2971 = vmatprep.subr.mxu0 0.0
    %2972 = vmatpush2.msra.mxu0 0.0
    %2973 = vmatprep.subr.mxu0 0.0
    %2974 = vmatpush2.msra.mxu0 0.0
    %2975 = vmatprep.subr.mxu0 0.0
    %2976 = vmatpush2.msra.mxu0 0.0
    %2977 = vmatprep.subr.mxu0 0.0
    %2978 = vmatpush2.msra.mxu0 0.0
    %2979 = vmatprep.subr.mxu0 0.0
    %2980 = vmatpush2.msra.mxu0 0.0
    %2981 = vmatprep.subr.mxu0 0.0
    %2982 = vmatpush2.msra.mxu0 0.0
    %2983 = vmatprep.subr.mxu0 0.0
    %2984 = vmatpush2.msra.mxu0 0.0
    %2985 = vmatprep.subr.mxu0 0.0
    %2986 = vmatpush2.msra.mxu0 0.0
    %2987 = vmatprep.subr.mxu0 0.0
    %2988 = vmatpush2.msra.mxu0 0.0
    %2989 = vmatprep.subr.mxu0 0.0
    %2990 = vmatpush2.msra.mxu0 0.0
    %2991 = vmatprep.subr.mxu0 0.0
    %2992 = vmatpush2.msra.mxu0 0.0
    %2993 = vmatprep.subr.mxu0 0.0
    %2994 = vmatpush2.msra.mxu0 0.0
    %2995 = vmatprep.subr.mxu0 0.0
    %2996 = vmatpush2.msra.mxu0 0.0
    %2997 = vmatprep.subr.mxu0 0.0
    %2998 = vmatpush2.msra.mxu0 0.0
    %2999 = vmatprep.subr.mxu0 0.0
    %3000 = vmatpush2.msra.mxu0 0.0
    %3001 = vmatprep.mubr.f32.mxu0 0.0
    %3002 = vmatmul.mubr.f32.gmra.mxu0 %v2935
    %v3003 = vpop.f32.mrf.mxu0
    %v3004 = vadd.f32 0.0, %v3003
    %v3005 = vpop.f32.mrf.mxu0
    %3006 = vdwg.mxu0
    %v3008 = vsel %vm1112, %v3004, 0
    %3010 = vmatprep.subr.mxu0 0.0
    %3011 = vmatpush1.msra.mxu0 0.0
    %3012 = vmatprep.subr.mxu0 0.0
    %3013 = vmatpush1.msra.mxu0 0.0
    %3014 = vmatprep.subr.mxu0 0.0
    %3015 = vmatpush1.msra.mxu0 0.0
    %3016 = vmatprep.subr.mxu0 0.0
    %3017 = vmatpush1.msra.mxu0 0.0
    %3018 = vmatprep.subr.mxu0 0.0
    %3019 = vmatpush1.msra.mxu0 0.0
    %3020 = vmatprep.subr.mxu0 0.0
    %3021 = vmatpush1.msra.mxu0 0.0
    %3022 = vmatprep.subr.mxu0 0.0
    %3023 = vmatpush1.msra.mxu0 0.0
    %3024 = vmatprep.subr.mxu0 0.0
    %3025 = vmatpush1.msra.mxu0 0.0
    %3026 = vmatprep.subr.mxu0 0.0
    %3027 = vmatpush1.msra.mxu0 0.0
    %3028 = vmatprep.subr.mxu0 0.0
    %3029 = vmatpush1.msra.mxu0 0.0
    %3030 = vmatprep.subr.mxu0 0.0
    %3031 = vmatpush1.msra.mxu0 0.0
    %3032 = vmatprep.subr.mxu0 0.0
    %3033 = vmatpush1.msra.mxu0 0.0
    %3034 = vmatprep.subr.mxu0 %v362
    %3035 = vmatpush1.msra.mxu0 %v361
    %3036 = vmatprep.subr.mxu0 %v360
    %3037 = vmatpush1.msra.mxu0 %v359
    %3038 = vmatprep.subr.mxu0 %v358
    %3039 = vmatpush1.msra.mxu0 %v357
    %3040 = vmatprep.subr.mxu0 %v356
    %3041 = vmatpush1.msra.mxu0 %v355
    %3042 = vmatprep.subr.mxu0 0.0
    %3043 = vmatpush2.msra.mxu0 0.0
    %3044 = vmatprep.subr.mxu0 0.0
    %3045 = vmatpush2.msra.mxu0 0.0
    %3046 = vmatprep.subr.mxu0 0.0
    %3047 = vmatpush2.msra.mxu0 0.0
    %3048 = vmatprep.subr.mxu0 0.0
    %3049 = vmatpush2.msra.mxu0 0.0
    %3050 = vmatprep.subr.mxu0 0.0
    %3051 = vmatpush2.msra.mxu0 0.0
    %3052 = vmatprep.subr.mxu0 0.0
    %3053 = vmatpush2.msra.mxu0 0.0
    %3054 = vmatprep.subr.mxu0 0.0
    %3055 = vmatpush2.msra.mxu0 0.0
    %3056 = vmatprep.subr.mxu0 0.0
    %3057 = vmatpush2.msra.mxu0 0.0
    %3058 = vmatprep.subr.mxu0 0.0
    %3059 = vmatpush2.msra.mxu0 0.0
    %3060 = vmatprep.subr.mxu0 0.0
    %3061 = vmatpush2.msra.mxu0 0.0
    %3062 = vmatprep.subr.mxu0 0.0
    %3063 = vmatpush2.msra.mxu0 0.0
    %3064 = vmatprep.subr.mxu0 0.0
    %3065 = vmatpush2.msra.mxu0 0.0
    %3066 = vmatprep.subr.mxu0 0.0
    %3067 = vmatpush2.msra.mxu0 0.0
    %3068 = vmatprep.subr.mxu0 0.0
    %3069 = vmatpush2.msra.mxu0 0.0
    %3070 = vmatprep.subr.mxu0 0.0
    %3071 = vmatpush2.msra.mxu0 0.0
    %3072 = vmatprep.subr.mxu0 0.0
    %3073 = vmatpush2.msra.mxu0 0.0
    %3074 = vmatprep.mubr.f32.mxu0 0.0
    %3075 = vmatmul.mubr.f32.gmra.mxu0 %v3008
    %v3076 = vpop.f32.mrf.mxu0
    %v3077 = vadd.f32 0.0, %v3076
    %v3078 = vpop.f32.mrf.mxu0
    %v3079 = vadd.f32 0.0, %v3078
    %3080 = vdwg.mxu0
    %v3081 = vadd.f32 %v2832, %v3077
    %v3082 = vadd.f32 %v2833, %v3079
    %v3084 = vlaneseq
    %v3085 = vshrl.u32 %v3084, 7
    %v3086 = vsub.s32 0, %v3085
    %v3087 = vrot.slane %v685, %v3086
    %v3088 = vlaneseq
    %v3089 = vshrl.u32 %v3088, 7
    %v3090 = vsub.s32 1, %v3089
    %v3091 = vrot.slane %v685, %v3090
    %v3094 = vadd.f32 %v3081, %v3087
    %v3095 = vadd.f32 %v3082, %v3091
    %v3097 = vlaneseq
    %v3098 = vshrl.u32 %v3097, 7
    %v3099 = vsub.s32 0, %v3098
    %v3100 = vrot.slane %v686, %v3099
    %v3101 = vlaneseq
    %v3102 = vshrl.u32 %v3101, 7
    %v3103 = vsub.s32 1, %v3102
    %v3104 = vrot.slane %v686, %v3103
    %v3105 = vlaneseq
    %v3106 = vshrl.u32 %v3105, 7
    %v3107 = vsub.s32 2, %v3106
    %v3108 = vrot.slane %v686, %v3107
    %v3109 = vlaneseq
    %v3110 = vshrl.u32 %v3109, 7
    %v3111 = vsub.s32 3, %v3110
    %v3112 = vrot.slane %v686, %v3111
    %3117 = vmatprep.subr.mxu0 %v424
    %3118 = vmatpush1.msra.mxu0 %v423
    %3119 = vmatprep.subr.mxu0 %v420
    %3120 = vmatpush1.msra.mxu0 %v419
    %3121 = vmatprep.subr.mxu0 %v416
    %3122 = vmatpush1.msra.mxu0 %v415
    %3123 = vmatprep.subr.mxu0 %v412
    %3124 = vmatpush1.msra.mxu0 %v411
    %3125 = vmatprep.subr.mxu0 %v408
    %3126 = vmatpush1.msra.mxu0 %v407
    %3127 = vmatprep.subr.mxu0 %v404
    %3128 = vmatpush1.msra.mxu0 %v403
    %3129 = vmatprep.subr.mxu0 %v400
    %3130 = vmatpush1.msra.mxu0 %v399
    %3131 = vmatprep.subr.mxu0 %v396
    %3132 = vmatpush1.msra.mxu0 %v395
    %3133 = vmatprep.subr.mxu0 %v392
    %3134 = vmatpush1.msra.mxu0 %v391
    %3135 = vmatprep.subr.mxu0 %v388
    %3136 = vmatpush1.msra.mxu0 %v387
    %3137 = vmatprep.subr.mxu0 %v384
    %3138 = vmatpush1.msra.mxu0 %v383
    %3139 = vmatprep.subr.mxu0 %v380
    %3140 = vmatpush1.msra.mxu0 %v379
    %3141 = vmatprep.subr.mxu0 %v376
    %3142 = vmatpush1.msra.mxu0 %v375
    %3143 = vmatprep.subr.mxu0 %v372
    %3144 = vmatpush1.msra.mxu0 %v371
    %3145 = vmatprep.subr.mxu0 %v368
    %3146 = vmatpush1.msra.mxu0 %v367
    %3147 = vmatprep.subr.mxu0 %v364
    %3148 = vmatpush1.msra.mxu0 %v363
    %3149 = vmatprep.subr.mxu0 %v488
    %3150 = vmatpush2.msra.mxu0 %v487
    %3151 = vmatprep.subr.mxu0 %v484
    %3152 = vmatpush2.msra.mxu0 %v483
    %3153 = vmatprep.subr.mxu0 %v480
    %3154 = vmatpush2.msra.mxu0 %v479
    %3155 = vmatprep.subr.mxu0 %v476
    %3156 = vmatpush2.msra.mxu0 %v475
    %3157 = vmatprep.subr.mxu0 %v472
    %3158 = vmatpush2.msra.mxu0 %v471
    %3159 = vmatprep.subr.mxu0 %v468
    %3160 = vmatpush2.msra.mxu0 %v467
    %3161 = vmatprep.subr.mxu0 %v464
    %3162 = vmatpush2.msra.mxu0 %v463
    %3163 = vmatprep.subr.mxu0 %v460
    %3164 = vmatpush2.msra.mxu0 %v459
    %3165 = vmatprep.subr.mxu0 %v456
    %3166 = vmatpush2.msra.mxu0 %v455
    %3167 = vmatprep.subr.mxu0 %v452
    %3168 = vmatpush2.msra.mxu0 %v451
    %3169 = vmatprep.subr.mxu0 %v448
    %3170 = vmatpush2.msra.mxu0 %v447
    %3171 = vmatprep.subr.mxu0 %v444
    %3172 = vmatpush2.msra.mxu0 %v443
    %3173 = vmatprep.subr.mxu0 %v440
    %3174 = vmatpush2.msra.mxu0 %v439
    %3175 = vmatprep.subr.mxu0 %v436
    %3176 = vmatpush2.msra.mxu0 %v435
    %3177 = vmatprep.subr.mxu0 %v432
    %3178 = vmatpush2.msra.mxu0 %v431
    %3179 = vmatprep.subr.mxu0 %v428
    %3180 = vmatpush2.msra.mxu0 %v427
    %3181 = vmatprep.mubr.f32.mxu0 %v3095
    %3182 = vmatmul.mubr.f32.gmra.mxu0 %v3094
    %v3183 = vpop.f32.mrf.mxu0
    %v3184 = vadd.f32 %v3100, %v3183
    %v3185 = vpop.f32.mrf.mxu0
    %v3186 = vadd.f32 %v3104, %v3185
    %3187 = vdwg.mxu0
    %3188 = vmatprep.subr.mxu0 %v426
    %3189 = vmatpush1.msra.mxu0 %v425
    %3190 = vmatprep.subr.mxu0 %v422
    %3191 = vmatpush1.msra.mxu0 %v421
    %3192 = vmatprep.subr.mxu0 %v418
    %3193 = vmatpush1.msra.mxu0 %v417
    %3194 = vmatprep.subr.mxu0 %v414
    %3195 = vmatpush1.msra.mxu0 %v413
    %3196 = vmatprep.subr.mxu0 %v410
    %3197 = vmatpush1.msra.mxu0 %v409
    %3198 = vmatprep.subr.mxu0 %v406
    %3199 = vmatpush1.msra.mxu0 %v405
    %3200 = vmatprep.subr.mxu0 %v402
    %3201 = vmatpush1.msra.mxu0 %v401
    %3202 = vmatprep.subr.mxu0 %v398
    %3203 = vmatpush1.msra.mxu0 %v397
    %3204 = vmatprep.subr.mxu0 %v394
    %3205 = vmatpush1.msra.mxu0 %v393
    %3206 = vmatprep.subr.mxu0 %v390
    %3207 = vmatpush1.msra.mxu0 %v389
    %3208 = vmatprep.subr.mxu0 %v386
    %3209 = vmatpush1.msra.mxu0 %v385
    %3210 = vmatprep.subr.mxu0 %v382
    %3211 = vmatpush1.msra.mxu0 %v381
    %3212 = vmatprep.subr.mxu0 %v378
    %3213 = vmatpush1.msra.mxu0 %v377
    %3214 = vmatprep.subr.mxu0 %v374
    %3215 = vmatpush1.msra.mxu0 %v373
    %3216 = vmatprep.subr.mxu0 %v370
    %3217 = vmatpush1.msra.mxu0 %v369
    %3218 = vmatprep.subr.mxu0 %v366
    %3219 = vmatpush1.msra.mxu0 %v365
    %3220 = vmatprep.subr.mxu0 %v490
    %3221 = vmatpush2.msra.mxu0 %v489
    %3222 = vmatprep.subr.mxu0 %v486
    %3223 = vmatpush2.msra.mxu0 %v485
    %3224 = vmatprep.subr.mxu0 %v482
    %3225 = vmatpush2.msra.mxu0 %v481
    %3226 = vmatprep.subr.mxu0 %v478
    %3227 = vmatpush2.msra.mxu0 %v477
    %3228 = vmatprep.subr.mxu0 %v474
    %3229 = vmatpush2.msra.mxu0 %v473
    %3230 = vmatprep.subr.mxu0 %v470
    %3231 = vmatpush2.msra.mxu0 %v469
    %3232 = vmatprep.subr.mxu0 %v466
    %3233 = vmatpush2.msra.mxu0 %v465
    %3234 = vmatprep.subr.mxu0 %v462
    %3235 = vmatpush2.msra.mxu0 %v461
    %3236 = vmatprep.subr.mxu0 %v458
    %3237 = vmatpush2.msra.mxu0 %v457
    %3238 = vmatprep.subr.mxu0 %v454
    %3239 = vmatpush2.msra.mxu0 %v453
    %3240 = vmatprep.subr.mxu0 %v450
    %3241 = vmatpush2.msra.mxu0 %v449
    %3242 = vmatprep.subr.mxu0 %v446
    %3243 = vmatpush2.msra.mxu0 %v445
    %3244 = vmatprep.subr.mxu0 %v442
    %3245 = vmatpush2.msra.mxu0 %v441
    %3246 = vmatprep.subr.mxu0 %v438
    %3247 = vmatpush2.msra.mxu0 %v437
    %3248 = vmatprep.subr.mxu0 %v434
    %3249 = vmatpush2.msra.mxu0 %v433
    %3250 = vmatprep.subr.mxu0 %v430
    %3251 = vmatpush2.msra.mxu0 %v429
    %3252 = vmatprep.mubr.f32.mxu0 %v3095
    %3253 = vmatmul.mubr.f32.gmra.mxu0 %v3094
    %v3254 = vpop.f32.mrf.mxu0
    %v3255 = vadd.f32 %v3108, %v3254
    %v3256 = vpop.f32.mrf.mxu0
    %v3257 = vadd.f32 %v3112, %v3256
    %3258 = vdwg.mxu0
    %v3259 = vmax.f32 %v3184, 0.0
    %v3260 = vmax.f32 %v3186, 0.0
    %v3261 = vmax.f32 %v3255, 0.0
    %v3262 = vmax.f32 %v3257, 0.0
    %v3264 = vlaneseq
    %v3265 = vshrl.u32 %v3264, 7
    %v3266 = vsub.s32 0, %v3265
    %v3267 = vrot.slane %v687, %v3266
    %v3268 = vlaneseq
    %v3269 = vshrl.u32 %v3268, 7
    %v3270 = vsub.s32 1, %v3269
    %v3271 = vrot.slane %v687, %v3270
    %3274 = vmatprep.subr.mxu0 %v586
    %3275 = vmatpush1.msra.mxu0 %v585
    %3276 = vmatprep.subr.mxu0 %v584
    %3277 = vmatpush1.msra.mxu0 %v583
    %3278 = vmatprep.subr.mxu0 %v582
    %3279 = vmatpush1.msra.mxu0 %v581
    %3280 = vmatprep.subr.mxu0 %v580
    %3281 = vmatpush1.msra.mxu0 %v579
    %3282 = vmatprep.subr.mxu0 %v578
    %3283 = vmatpush1.msra.mxu0 %v577
    %3284 = vmatprep.subr.mxu0 %v576
    %3285 = vmatpush1.msra.mxu0 %v575
    %3286 = vmatprep.subr.mxu0 %v574
    %3287 = vmatpush1.msra.mxu0 %v573
    %3288 = vmatprep.subr.mxu0 %v572
    %3289 = vmatpush1.msra.mxu0 %v571
    %3290 = vmatprep.subr.mxu0 %v570
    %3291 = vmatpush1.msra.mxu0 %v569
    %3292 = vmatprep.subr.mxu0 %v568
    %3293 = vmatpush1.msra.mxu0 %v567
    %3294 = vmatprep.subr.mxu0 %v566
    %3295 = vmatpush1.msra.mxu0 %v565
    %3296 = vmatprep.subr.mxu0 %v564
    %3297 = vmatpush1.msra.mxu0 %v563
    %3298 = vmatprep.subr.mxu0 %v562
    %3299 = vmatpush1.msra.mxu0 %v561
    %3300 = vmatprep.subr.mxu0 %v560
    %3301 = vmatpush1.msra.mxu0 %v559
    %3302 = vmatprep.subr.mxu0 %v558
    %3303 = vmatpush1.msra.mxu0 %v557
    %3304 = vmatprep.subr.mxu0 %v556
    %3305 = vmatpush1.msra.mxu0 %v555
    %3306 = vmatprep.subr.mxu0 %v618
    %3307 = vmatpush2.msra.mxu0 %v617
    %3308 = vmatprep.subr.mxu0 %v616
    %3309 = vmatpush2.msra.mxu0 %v615
    %3310 = vmatprep.subr.mxu0 %v614
    %3311 = vmatpush2.msra.mxu0 %v613
    %3312 = vmatprep.subr.mxu0 %v612
    %3313 = vmatpush2.msra.mxu0 %v611
    %3314 = vmatprep.subr.mxu0 %v610
    %3315 = vmatpush2.msra.mxu0 %v609
    %3316 = vmatprep.subr.mxu0 %v608
    %3317 = vmatpush2.msra.mxu0 %v607
    %3318 = vmatprep.subr.mxu0 %v606
    %3319 = vmatpush2.msra.mxu0 %v605
    %3320 = vmatprep.subr.mxu0 %v604
    %3321 = vmatpush2.msra.mxu0 %v603
    %3322 = vmatprep.subr.mxu0 %v602
    %3323 = vmatpush2.msra.mxu0 %v601
    %3324 = vmatprep.subr.mxu0 %v600
    %3325 = vmatpush2.msra.mxu0 %v599
    %3326 = vmatprep.subr.mxu0 %v598
    %3327 = vmatpush2.msra.mxu0 %v597
    %3328 = vmatprep.subr.mxu0 %v596
    %3329 = vmatpush2.msra.mxu0 %v595
    %3330 = vmatprep.subr.mxu0 %v594
    %3331 = vmatpush2.msra.mxu0 %v593
    %3332 = vmatprep.subr.mxu0 %v592
    %3333 = vmatpush2.msra.mxu0 %v591
    %3334 = vmatprep.subr.mxu0 %v590
    %3335 = vmatpush2.msra.mxu0 %v589
    %3336 = vmatprep.subr.mxu0 %v588
    %3337 = vmatpush2.msra.mxu0 %v587
    %3338 = vmatprep.mubr.f32.mxu0 %v3260
    %3339 = vmatmul.mubr.f32.gmra.mxu0 %v3259
    %v3340 = vpop.f32.mrf.mxu0
    %v3341 = vadd.f32 %v3267, %v3340
    %v3342 = vpop.f32.mrf.mxu0
    %v3343 = vadd.f32 %v3271, %v3342
    %3344 = vdwg.mxu0
    %3345 = vmatprep.subr.mxu0 %v650
    %3346 = vmatpush1.msra.mxu0 %v649
    %3347 = vmatprep.subr.mxu0 %v648
    %3348 = vmatpush1.msra.mxu0 %v647
    %3349 = vmatprep.subr.mxu0 %v646
    %3350 = vmatpush1.msra.mxu0 %v645
    %3351 = vmatprep.subr.mxu0 %v644
    %3352 = vmatpush1.msra.mxu0 %v643
    %3353 = vmatprep.subr.mxu0 %v642
    %3354 = vmatpush1.msra.mxu0 %v641
    %3355 = vmatprep.subr.mxu0 %v640
    %3356 = vmatpush1.msra.mxu0 %v639
    %3357 = vmatprep.subr.mxu0 %v638
    %3358 = vmatpush1.msra.mxu0 %v637
    %3359 = vmatprep.subr.mxu0 %v636
    %3360 = vmatpush1.msra.mxu0 %v635
    %3361 = vmatprep.subr.mxu0 %v634
    %3362 = vmatpush1.msra.mxu0 %v633
    %3363 = vmatprep.subr.mxu0 %v632
    %3364 = vmatpush1.msra.mxu0 %v631
    %3365 = vmatprep.subr.mxu0 %v630
    %3366 = vmatpush1.msra.mxu0 %v629
    %3367 = vmatprep.subr.mxu0 %v628
    %3368 = vmatpush1.msra.mxu0 %v627
    %3369 = vmatprep.subr.mxu0 %v626
    %3370 = vmatpush1.msra.mxu0 %v625
    %3371 = vmatprep.subr.mxu0 %v624
    %3372 = vmatpush1.msra.mxu0 %v623
    %3373 = vmatprep.subr.mxu0 %v622
    %3374 = vmatpush1.msra.mxu0 %v621
    %3375 = vmatprep.subr.mxu0 %v620
    %3376 = vmatpush1.msra.mxu0 %v619
    %3377 = vmatprep.subr.mxu0 %v682
    %3378 = vmatpush2.msra.mxu0 %v681
    %3379 = vmatprep.subr.mxu0 %v680
    %3380 = vmatpush2.msra.mxu0 %v679
    %3381 = vmatprep.subr.mxu0 %v678
    %3382 = vmatpush2.msra.mxu0 %v677
    %3383 = vmatprep.subr.mxu0 %v676
    %3384 = vmatpush2.msra.mxu0 %v675
    %3385 = vmatprep.subr.mxu0 %v674
    %3386 = vmatpush2.msra.mxu0 %v673
    %3387 = vmatprep.subr.mxu0 %v672
    %3388 = vmatpush2.msra.mxu0 %v671
    %3389 = vmatprep.subr.mxu0 %v670
    %3390 = vmatpush2.msra.mxu0 %v669
    %3391 = vmatprep.subr.mxu0 %v668
    %3392 = vmatpush2.msra.mxu0 %v667
    %3393 = vmatprep.subr.mxu0 %v666
    %3394 = vmatpush2.msra.mxu0 %v665
    %3395 = vmatprep.subr.mxu0 %v664
    %3396 = vmatpush2.msra.mxu0 %v663
    %3397 = vmatprep.subr.mxu0 %v662
    %3398 = vmatpush2.msra.mxu0 %v661
    %3399 = vmatprep.subr.mxu0 %v660
    %3400 = vmatpush2.msra.mxu0 %v659
    %3401 = vmatprep.subr.mxu0 %v658
    %3402 = vmatpush2.msra.mxu0 %v657
    %3403 = vmatprep.subr.mxu0 %v656
    %3404 = vmatpush2.msra.mxu0 %v655
    %3405 = vmatprep.subr.mxu0 %v654
    %3406 = vmatpush2.msra.mxu0 %v653
    %3407 = vmatprep.subr.mxu0 %v652
    %3408 = vmatpush2.msra.mxu0 %v651
    %3409 = vmatprep.mubr.f32.mxu0 %v3262
    %3410 = vmatmul.mubr.f32.gmra.mxu0 %v3261
    %v3411 = vpop.f32.mrf.mxu0
    %v3412 = vadd.f32 %v3341, %v3411
    %v3413 = vpop.f32.mrf.mxu0
    %v3414 = vadd.f32 %v3343, %v3413
    %3415 = vdwg.mxu0
    %v3416 = vadd.f32 %v3412, %v65
    %v3417 = vadd.f32 %v3414, %v66
    %v3418 = vadd.f32 %v3416, %v3417
    %3419 = vadd.xlane.f32.xlu0 %v3418
    %v3420 = vpop.xlane.xlu0 %3419
    %v3421 = vrcp.pop 256.0
    %v3422 = vmul.f32 %v3420, %v3421
    %v3423 = vsub.f32 %v3416, %v3422
    %v3424 = vsub.f32 %v3417, %v3422
    %v3425 = vmul.f32 %v3423, %v3423
    %v3426 = vmul.f32 %v3424, %v3424
    %v3427 = vadd.f32 %v3425, %v3426
    %3428 = vadd.xlane.f32.xlu0 %v3427
    %v3429 = vpop.xlane.xlu0 %3428
    %v3430 = vmul.f32 %v3429, %v3421
    %v3431 = vadd.f32 %v3430, 1e-05
    %v3432 = vrsqrt.pop %v3431
    %v3433 = vmul.f32 %v3423, %v3432
    %v3434 = vmul.f32 %v3424, %v3432
    %v3436 = vlaneseq
    %v3437 = vshrl.u32 %v3436, 7
    %v3438 = vsub.s32 0, %v3437
    %v3439 = vrot.slane %v688, %v3438
    %v3440 = vlaneseq
    %v3441 = vshrl.u32 %v3440, 7
    %v3442 = vsub.s32 1, %v3441
    %v3443 = vrot.slane %v688, %v3442
    %v3446 = vmul.f32 %v3433, %v3439
    %v3447 = vmul.f32 %v3434, %v3443
    %v3449 = vlaneseq
    %v3450 = vshrl.u32 %v3449, 7
    %v3451 = vsub.s32 0, %v3450
    %v3452 = vrot.slane %v689, %v3451
    %v3453 = vlaneseq
    %v3454 = vshrl.u32 %v3453, 7
    %v3455 = vsub.s32 1, %v3454
    %v3456 = vrot.slane %v689, %v3455
    %v3459 = vadd.f32 %v3446, %v3452
    %v3460 = vadd.f32 %v3447, %v3456
    %v3462 = vlaneseq
    %v3463 = vshrl.u32 %v3462, 7
    %v3464 = vsub.s32 0, %v3463
    %v3465 = vrot.slane %v690, %v3464
    %v3466 = vlaneseq
    %v3467 = vshrl.u32 %v3466, 7
    %v3468 = vsub.s32 1, %v3467
    %v3469 = vrot.slane %v690, %v3468
    %3472 = vmatprep.subr.mxu0 %v522
    %3473 = vmatpush1.msra.mxu0 %v521
    %3474 = vmatprep.subr.mxu0 %v520
    %3475 = vmatpush1.msra.mxu0 %v519
    %3476 = vmatprep.subr.mxu0 %v518
    %3477 = vmatpush1.msra.mxu0 %v517
    %3478 = vmatprep.subr.mxu0 %v516
    %3479 = vmatpush1.msra.mxu0 %v515
    %3480 = vmatprep.subr.mxu0 %v514
    %3481 = vmatpush1.msra.mxu0 %v513
    %3482 = vmatprep.subr.mxu0 %v512
    %3483 = vmatpush1.msra.mxu0 %v511
    %3484 = vmatprep.subr.mxu0 %v510
    %3485 = vmatpush1.msra.mxu0 %v509
    %3486 = vmatprep.subr.mxu0 %v508
    %3487 = vmatpush1.msra.mxu0 %v507
    %3488 = vmatprep.subr.mxu0 %v506
    %3489 = vmatpush1.msra.mxu0 %v505
    %3490 = vmatprep.subr.mxu0 %v504
    %3491 = vmatpush1.msra.mxu0 %v503
    %3492 = vmatprep.subr.mxu0 %v502
    %3493 = vmatpush1.msra.mxu0 %v501
    %3494 = vmatprep.subr.mxu0 %v500
    %3495 = vmatpush1.msra.mxu0 %v499
    %3496 = vmatprep.subr.mxu0 %v498
    %3497 = vmatpush1.msra.mxu0 %v497
    %3498 = vmatprep.subr.mxu0 %v496
    %3499 = vmatpush1.msra.mxu0 %v495
    %3500 = vmatprep.subr.mxu0 %v494
    %3501 = vmatpush1.msra.mxu0 %v493
    %3502 = vmatprep.subr.mxu0 %v492
    %3503 = vmatpush1.msra.mxu0 %v491
    %3504 = vmatprep.subr.mxu0 %v554
    %3505 = vmatpush2.msra.mxu0 %v553
    %3506 = vmatprep.subr.mxu0 %v552
    %3507 = vmatpush2.msra.mxu0 %v551
    %3508 = vmatprep.subr.mxu0 %v550
    %3509 = vmatpush2.msra.mxu0 %v549
    %3510 = vmatprep.subr.mxu0 %v548
    %3511 = vmatpush2.msra.mxu0 %v547
    %3512 = vmatprep.subr.mxu0 %v546
    %3513 = vmatpush2.msra.mxu0 %v545
    %3514 = vmatprep.subr.mxu0 %v544
    %3515 = vmatpush2.msra.mxu0 %v543
    %3516 = vmatprep.subr.mxu0 %v542
    %3517 = vmatpush2.msra.mxu0 %v541
    %3518 = vmatprep.subr.mxu0 %v540
    %3519 = vmatpush2.msra.mxu0 %v539
    %3520 = vmatprep.subr.mxu0 %v538
    %3521 = vmatpush2.msra.mxu0 %v537
    %3522 = vmatprep.subr.mxu0 %v536
    %3523 = vmatpush2.msra.mxu0 %v535
    %3524 = vmatprep.subr.mxu0 %v534
    %3525 = vmatpush2.msra.mxu0 %v533
    %3526 = vmatprep.subr.mxu0 %v532
    %3527 = vmatpush2.msra.mxu0 %v531
    %3528 = vmatprep.subr.mxu0 %v530
    %3529 = vmatpush2.msra.mxu0 %v529
    %3530 = vmatprep.subr.mxu0 %v528
    %3531 = vmatpush2.msra.mxu0 %v527
    %3532 = vmatprep.subr.mxu0 %v526
    %3533 = vmatpush2.msra.mxu0 %v525
    %3534 = vmatprep.subr.mxu0 %v524
    %3535 = vmatpush2.msra.mxu0 %v523
    %3536 = vmatprep.mubr.f32.mxu0 %v3460
    %3537 = vmatmul.mubr.f32.gmra.mxu0 %v3459
    %v3538 = vpop.f32.mrf.mxu0
    %v3539 = vadd.f32 %v3465, %v3538
    %v3540 = vpop.f32.mrf.mxu0
    %v3541 = vadd.f32 %v3469, %v3540
    %3542 = vdwg.mxu0
    %v3543 = vld [vmem:[%s3] sm:$0xff]
    %v3544 = vld [vmem:[%s3 + $0x8] sm:$0xff]
    %v3545 = vld [vmem:[%s3 + $0x10] sm:$0xff]
    %v3546 = vld [vmem:[%s3 + $0x18] sm:$0xff]
    %v3547 = vld [vmem:[%s3 + $0x20] sm:$0xff]
    %v3548 = vld [vmem:[%s3 + $0x28] sm:$0xff]
    %v3549 = vld [vmem:[%s3 + $0x30] sm:$0xff]
    %v3550 = vld [vmem:[%s3 + $0x38] sm:$0xff]
    %v3551 = vld [vmem:[%s3 + $0x40] sm:$0xff]
    %v3552 = vld [vmem:[%s3 + $0x48] sm:$0xff]
    %v3553 = vld [vmem:[%s3 + $0x50] sm:$0xff]
    %v3554 = vld [vmem:[%s3 + $0x58] sm:$0xff]
    %v3555 = vld [vmem:[%s3 + $0x60] sm:$0xff]
    %v3556 = vld [vmem:[%s3 + $0x68] sm:$0xff]
    %v3557 = vld [vmem:[%s3 + $0x70] sm:$0xff]
    %v3558 = vld [vmem:[%s3 + $0x78] sm:$0xff]
    %v3559 = vld [vmem:[%s3 + $0x80] sm:$0xff]
    %v3560 = vld [vmem:[%s3 + $0x88] sm:$0xff]
    %v3561 = vld [vmem:[%s3 + $0x90] sm:$0xff]
    %v3562 = vld [vmem:[%s3 + $0x98] sm:$0xff]
    %v3563 = vld [vmem:[%s3 + $0xa0] sm:$0xff]
    %v3564 = vld [vmem:[%s3 + $0xa8] sm:$0xff]
    %v3565 = vld [vmem:[%s3 + $0xb0] sm:$0xff]
    %v3566 = vld [vmem:[%s3 + $0xb8] sm:$0xff]
    %v3567 = vld [vmem:[%s3 + $0xc0] sm:$0xff]
    %v3568 = vld [vmem:[%s3 + $0xc8] sm:$0xff]
    %v3569 = vld [vmem:[%s3 + $0xd0] sm:$0xff]
    %v3570 = vld [vmem:[%s3 + $0xd8] sm:$0xff]
    %v3571 = vld [vmem:[%s3 + $0xe0] sm:$0xff]
    %v3572 = vld [vmem:[%s3 + $0xe8] sm:$0xff]
    %v3573 = vld [vmem:[%s3 + $0xf0] sm:$0xff]
    %v3574 = vld [vmem:[%s3 + $0xf8] sm:$0xff]
    %v3575 = vld [vmem:[%s3 + $0x100] sm:$0xff]
    %v3576 = vld [vmem:[%s3 + $0x108] sm:$0xff]
    %v3577 = vld [vmem:[%s3 + $0x110] sm:$0xff]
    %v3578 = vld [vmem:[%s3 + $0x118] sm:$0xff]
    %v3579 = vld [vmem:[%s3 + $0x120] sm:$0xff]
    %v3580 = vld [vmem:[%s3 + $0x128] sm:$0xff]
    %v3581 = vld [vmem:[%s3 + $0x130] sm:$0xff]
    %v3582 = vld [vmem:[%s3 + $0x138] sm:$0xff]
    %v3583 = vld [vmem:[%s3 + $0x140] sm:$0xff]
    %v3584 = vld [vmem:[%s3 + $0x148] sm:$0xff]
    %v3585 = vld [vmem:[%s3 + $0x150] sm:$0xff]
    %v3586 = vld [vmem:[%s3 + $0x158] sm:$0xff]
    %v3587 = vld [vmem:[%s3 + $0x160] sm:$0xff]
    %v3588 = vld [vmem:[%s3 + $0x168] sm:$0xff]
    %v3589 = vld [vmem:[%s3 + $0x170] sm:$0xff]
    %v3590 = vld [vmem:[%s3 + $0x178] sm:$0xff]
    %v3591 = vld [vmem:[%s3 + $0x180] sm:$0xff]
    %v3592 = vld [vmem:[%s3 + $0x188] sm:$0xff]
    %v3593 = vld [vmem:[%s3 + $0x190] sm:$0xff]
    %v3594 = vld [vmem:[%s3 + $0x198] sm:$0xff]
    %v3595 = vld [vmem:[%s3 + $0x1a0] sm:$0xff]
    %v3596 = vld [vmem:[%s3 + $0x1a8] sm:$0xff]
    %v3597 = vld [vmem:[%s3 + $0x1b0] sm:$0xff]
    %v3598 = vld [vmem:[%s3 + $0x1b8] sm:$0xff]
    %v3599 = vld [vmem:[%s3 + $0x1c0] sm:$0xff]
    %v3600 = vld [vmem:[%s3 + $0x1c8] sm:$0xff]
    %v3601 = vld [vmem:[%s3 + $0x1d0] sm:$0xff]
    %v3602 = vld [vmem:[%s3 + $0x1d8] sm:$0xff]
    %v3603 = vld [vmem:[%s3 + $0x1e0] sm:$0xff]
    %v3604 = vld [vmem:[%s3 + $0x1e8] sm:$0xff]
    %v3605 = vld [vmem:[%s3 + $0x1f0] sm:$0xff]
    %v3606 = vld [vmem:[%s3 + $0x1f8] sm:$0xff]
    %3607 = vmatprep.subr.mxu0 %v3574
    %3608 = vmatpush1.msra.mxu0 %v3573
    %3609 = vmatprep.subr.mxu0 %v3572
    %3610 = vmatpush1.msra.mxu0 %v3571
    %3611 = vmatprep.subr.mxu0 %v3570
    %3612 = vmatpush1.msra.mxu0 %v3569
    %3613 = vmatprep.subr.mxu0 %v3568
    %3614 = vmatpush1.msra.mxu0 %v3567
    %3615 = vmatprep.subr.mxu0 %v3566
    %3616 = vmatpush1.msra.mxu0 %v3565
    %3617 = vmatprep.subr.mxu0 %v3564
    %3618 = vmatpush1.msra.mxu0 %v3563
    %3619 = vmatprep.subr.mxu0 %v3562
    %3620 = vmatpush1.msra.mxu0 %v3561
    %3621 = vmatprep.subr.mxu0 %v3560
    %3622 = vmatpush1.msra.mxu0 %v3559
    %3623 = vmatprep.subr.mxu0 %v3558
    %3624 = vmatpush1.msra.mxu0 %v3557
    %3625 = vmatprep.subr.mxu0 %v3556
    %3626 = vmatpush1.msra.mxu0 %v3555
    %3627 = vmatprep.subr.mxu0 %v3554
    %3628 = vmatpush1.msra.mxu0 %v3553
    %3629 = vmatprep.subr.mxu0 %v3552
    %3630 = vmatpush1.msra.mxu0 %v3551
    %3631 = vmatprep.subr.mxu0 %v3550
    %3632 = vmatpush1.msra.mxu0 %v3549
    %3633 = vmatprep.subr.mxu0 %v3548
    %3634 = vmatpush1.msra.mxu0 %v3547
    %3635 = vmatprep.subr.mxu0 %v3546
    %3636 = vmatpush1.msra.mxu0 %v3545
    %3637 = vmatprep.subr.mxu0 %v3544
    %3638 = vmatpush1.msra.mxu0 %v3543
    %3639 = vmatprep.subr.mxu0 %v3606
    %3640 = vmatpush2.msra.mxu0 %v3605
    %3641 = vmatprep.subr.mxu0 %v3604
    %3642 = vmatpush2.msra.mxu0 %v3603
    %3643 = vmatprep.subr.mxu0 %v3602
    %3644 = vmatpush2.msra.mxu0 %v3601
    %3645 = vmatprep.subr.mxu0 %v3600
    %3646 = vmatpush2.msra.mxu0 %v3599
    %3647 = vmatprep.subr.mxu0 %v3598
    %3648 = vmatpush2.msra.mxu0 %v3597
    %3649 = vmatprep.subr.mxu0 %v3596
    %3650 = vmatpush2.msra.mxu0 %v3595
    %3651 = vmatprep.subr.mxu0 %v3594
    %3652 = vmatpush2.msra.mxu0 %v3593
    %3653 = vmatprep.subr.mxu0 %v3592
    %3654 = vmatpush2.msra.mxu0 %v3591
    %3655 = vmatprep.subr.mxu0 %v3590
    %3656 = vmatpush2.msra.mxu0 %v3589
    %3657 = vmatprep.subr.mxu0 %v3588
    %3658 = vmatpush2.msra.mxu0 %v3587
    %3659 = vmatprep.subr.mxu0 %v3586
    %3660 = vmatpush2.msra.mxu0 %v3585
    %3661 = vmatprep.subr.mxu0 %v3584
    %3662 = vmatpush2.msra.mxu0 %v3583
    %3663 = vmatprep.subr.mxu0 %v3582
    %3664 = vmatpush2.msra.mxu0 %v3581
    %3665 = vmatprep.subr.mxu0 %v3580
    %3666 = vmatpush2.msra.mxu0 %v3579
    %3667 = vmatprep.subr.mxu0 %v3578
    %3668 = vmatpush2.msra.mxu0 %v3577
    %3669 = vmatprep.subr.mxu0 %v3576
    %3670 = vmatpush2.msra.mxu0 %v3575
    %3671 = vmatprep.mubr.f32.mxu0 %v3541
    %3672 = vmatmul.mubr.f32.gmra.mxu0 %v3539
    %v3673 = vpop.f32.mrf.mxu0
    %v3674 = vadd.f32 0.0, %v3673
    %v3675 = vpop.f32.mrf.mxu0
    %v3676 = vadd.f32 0.0, %v3675
    %3677 = vdwg.mxu0
    %v3678 = vsub.f32 %v3539, %v3674
    %v3679 = vsub.f32 %v3541, %v3676
    %v3680 = vmul.f32 %v3678, %v3678
    %v3681 = vmul.f32 %v3679, %v3679
    %3682 = vmatprep.subr.mxu0 %v3574
    %3683 = vmatpush1.msra.mxu0 %v3573
    %3684 = vmatprep.subr.mxu0 %v3572
    %3685 = vmatpush1.msra.mxu0 %v3571
    %3686 = vmatprep.subr.mxu0 %v3570
    %3687 = vmatpush1.msra.mxu0 %v3569
    %3688 = vmatprep.subr.mxu0 %v3568
    %3689 = vmatpush1.msra.mxu0 %v3567
    %3690 = vmatprep.subr.mxu0 %v3566
    %3691 = vmatpush1.msra.mxu0 %v3565
    %3692 = vmatprep.subr.mxu0 %v3564
    %3693 = vmatpush1.msra.mxu0 %v3563
    %3694 = vmatprep.subr.mxu0 %v3562
    %3695 = vmatpush1.msra.mxu0 %v3561
    %3696 = vmatprep.subr.mxu0 %v3560
    %3697 = vmatpush1.msra.mxu0 %v3559
    %3698 = vmatprep.subr.mxu0 %v3558
    %3699 = vmatpush1.msra.mxu0 %v3557
    %3700 = vmatprep.subr.mxu0 %v3556
    %3701 = vmatpush1.msra.mxu0 %v3555
    %3702 = vmatprep.subr.mxu0 %v3554
    %3703 = vmatpush1.msra.mxu0 %v3553
    %3704 = vmatprep.subr.mxu0 %v3552
    %3705 = vmatpush1.msra.mxu0 %v3551
    %3706 = vmatprep.subr.mxu0 %v3550
    %3707 = vmatpush1.msra.mxu0 %v3549
    %3708 = vmatprep.subr.mxu0 %v3548
    %3709 = vmatpush1.msra.mxu0 %v3547
    %3710 = vmatprep.subr.mxu0 %v3546
    %3711 = vmatpush1.msra.mxu0 %v3545
    %3712 = vmatprep.subr.mxu0 %v3544
    %3713 = vmatpush1.msra.mxu0 %v3543
    %3714 = vmatprep.subr.mxu0 %v3606
    %3715 = vmatpush2.msra.mxu0 %v3605
    %3716 = vmatprep.subr.mxu0 %v3604
    %3717 = vmatpush2.msra.mxu0 %v3603
    %3718 = vmatprep.subr.mxu0 %v3602
    %3719 = vmatpush2.msra.mxu0 %v3601
    %3720 = vmatprep.subr.mxu0 %v3600
    %3721 = vmatpush2.msra.mxu0 %v3599
    %3722 = vmatprep.subr.mxu0 %v3598
    %3723 = vmatpush2.msra.mxu0 %v3597
    %3724 = vmatprep.subr.mxu0 %v3596
    %3725 = vmatpush2.msra.mxu0 %v3595
    %3726 = vmatprep.subr.mxu0 %v3594
    %3727 = vmatpush2.msra.mxu0 %v3593
    %3728 = vmatprep.subr.mxu0 %v3592
    %3729 = vmatpush2.msra.mxu0 %v3591
    %3730 = vmatprep.subr.mxu0 %v3590
    %3731 = vmatpush2.msra.mxu0 %v3589
    %3732 = vmatprep.subr.mxu0 %v3588
    %3733 = vmatpush2.msra.mxu0 %v3587
    %3734 = vmatprep.subr.mxu0 %v3586
    %3735 = vmatpush2.msra.mxu0 %v3585
    %3736 = vmatprep.subr.mxu0 %v3584
    %3737 = vmatpush2.msra.mxu0 %v3583
    %3738 = vmatprep.subr.mxu0 %v3582
    %3739 = vmatpush2.msra.mxu0 %v3581
    %3740 = vmatprep.subr.mxu0 %v3580
    %3741 = vmatpush2.msra.mxu0 %v3579
    %3742 = vmatprep.subr.mxu0 %v3578
    %3743 = vmatpush2.msra.mxu0 %v3577
    %3744 = vmatprep.subr.mxu0 %v3576
    %3745 = vmatpush2.msra.mxu0 %v3575
    %3746 = vmatprep.mubr.f32.mxu0 %v3681
    %3747 = vmatmul.mubr.f32.gmra.mxu0 %v3680
    %v3748 = vpop.f32.mrf.mxu0
    %v3749 = vadd.f32 1e-05, %v3748
    %v3750 = vpop.f32.mrf.mxu0
    %v3751 = vadd.f32 1e-05, %v3750
    %3752 = vdwg.mxu0
    %v3753 = vrsqrt.pop %v3749
    %v3754 = vrsqrt.pop %v3751
    %v3755 = vmul.f32 %v3678, %v3753
    %v3756 = vmul.f32 %v3679, %v3754
    %v3758 = vlaneseq
    %v3759 = vshrl.u32 %v3758, 7
    %v3760 = vsub.s32 0, %v3759
    %v3761 = vrot.slane %v691, %v3760
    %v3762 = vlaneseq
    %v3763 = vshrl.u32 %v3762, 7
    %v3764 = vsub.s32 1, %v3763
    %v3765 = vrot.slane %v691, %v3764
    %v3768 = vmul.f32 %v3755, %v3761
    %v3769 = vmul.f32 %v3756, %v3765
    %v3771 = vlaneseq
    %v3772 = vshrl.u32 %v3771, 7
    %v3773 = vsub.s32 0, %v3772
    %v3774 = vrot.slane %v692, %v3773
    %v3775 = vlaneseq
    %v3776 = vshrl.u32 %v3775, 7
    %v3777 = vsub.s32 1, %v3776
    %v3778 = vrot.slane %v692, %v3777
    %v3781 = vadd.f32 %v3768, %v3774
    %v3782 = vadd.f32 %v3769, %v3778
    %3783 = vst [vmem:[%s7] sm:$0xff] %v3781
    %3784 = vst [vmem:[%s7 + $0x8] sm:$0xff] %v3782
    // Predicated region
    $region42: #{bmatrix_decoder_forward.1} parent=1 // pred_check
      _
    $region43: #{bmatrix_decoder_forward.1} parent=1 // pred_check_branch
      %3786 = sbr.rel (0) target = $region45
    $region44: #{bmatrix_decoder_forward.1} parent=1 // pred_region
      _
    $region45: #{bmatrix_decoder_forward.1} parent=1 // pred_fallthru
      _
    // Predicated region
    $region46: #{bmatrix_decoder_forward.1} parent=1 // pred_check
      _
    $region47: #{bmatrix_decoder_forward.1} parent=1 // pred_check_branch
      %3788 = sbr.rel (0) target = $region49
    $region48: #{bmatrix_decoder_forward.1} parent=1 // pred_region
      _
    $region49: #{bmatrix_decoder_forward.1} parent=1 // pred_fallthru
      _
    %3789 = vsyncpa [#allocation3], 1
    %3790 = vsyncpa [#allocation5], 1

</llo_original>
